<compile_context>
chip_gen: v7x
topology: tpu7x:2x2x1
jax: 0.10.0
libtpu: 0.0.40
codegen_flags: <defaults>
</compile_context>

<pallas_src>
import functools

import numpy as np

import jax
import jax.numpy as jnp
from jax.experimental import pallas as pl
from jax.experimental.pallas import tpu as pltpu


# -----------------------------------------------------------------------------
# Fused kernel: conv3d(==3x3 conv2d over 6 ch) + BatchNorm2d(batch stats) + ReLU
#               + 1x1 head over [conv features ++ flow] + sigmoid.
# Everything lane-dense: spatial H*W on the lane axis; channels / batch are major dims.
# -----------------------------------------------------------------------------
def fused_flowvm_kernel(x_ref, mask_ref, w_ref, cb_ref, g_ref, bt_ref,
                        hw_ref, hb_ref, o_ref, *, W):
    # x_ref:    (B, 9, H*W) f32 VMEM   channels 0..5 = two RGB frames, 6..8 = flow
    # mask_ref: (9, H*W)    f32 VMEM   per-tap validity mask (precomputed, 1.0/0.0)
    # w_ref:    (162,) f32 SMEM        flat conv weight, idx = ((co*6+ci)*3+kh)*3+kw
    # cb_ref:   (3,)  f32 SMEM         conv bias
    # g_ref:    (3,)  f32 SMEM         BN gamma        bt_ref: (3,) BN beta
    # hw_ref:   (6,)  f32 SMEM         head weight     hb_ref: (1,) head bias
    # o_ref:    (B, H*W) f32 VMEM
    B, _, HW = x_ref.shape
    n_img_ch = 6
    eps = 1e-5
    inv_n = 1.0 / float(B * HW)

    xall = x_ref[...]                      # (B, 9, HW)
    img = xall[:, 0:n_img_ch, :]           # (B, 6, HW)

    # ---- 9 shifted + zero-masked views of the 6 image channels (hoisted out of the
    #      (co, ci) loops: 9 lane shifts total instead of 162 unaligned slices). ----
    ch_views = []  # ch_views[k][ci] : (B, HW), tap k = kh*3 + kw
    for kh in range(3):
        for kw in range(3):
            d = (kh - 1) * W + (kw - 1)    # flat lane shift for this 3x3 tap
            if d > 0:
                sh = jnp.concatenate(
                    [img[:, :, d:],
                     jnp.zeros((B, n_img_ch, d), jnp.float32)], axis=2)
            elif d < 0:
                sh = jnp.concatenate(
                    [jnp.zeros((B, n_img_ch, -d), jnp.float32),
                     img[:, :, :HW + d]], axis=2)
            else:
                sh = img
            sh = sh * mask_ref[kh * 3 + kw, :]      # zero out-of-image taps
            ch_views.append([sh[:, ci, :] for ci in range(n_img_ch)])

    # ---- conv (162 scalar-broadcast FMAs) + single-pass BatchNorm + ReLU ----
    feat = []
    for co in range(3):
        acc = jnp.zeros((B, HW), jnp.float32) + cb_ref[co]
        for k in range(9):
            kh, kw = k // 3, k % 3
            taps = ch_views[k]
            for ci in range(n_img_ch):
                widx = ((co * n_img_ch + ci) * 3 + kh) * 3 + kw
                acc = acc + w_ref[widx] * taps[ci]
        # BatchNorm2d training-mode semantics: per-channel batch mean / biased var,
        # computed in one traversal and folded into a single FMA.
        s1 = jnp.sum(acc)
        s2 = jnp.sum(acc * acc)
        mean = s1 * inv_n
        var = jnp.maximum(s2 * inv_n - mean * mean, 0.0)
        scale = g_ref[co] * jax.lax.rsqrt(var + eps)
        shift = bt_ref[co] - mean * scale
        feat.append(jnp.maximum(acc * scale + shift, 0.0))   # BN + ReLU

    # ---- stand-in head: 1x1 conv over [3 conv/BN/ReLU ch ++ 3 flow ch] + sigmoid ----
    z = jnp.zeros((B, HW), jnp.float32) + hb_ref[0]
    for c in range(3):
        z = z + hw_ref[c] * feat[c]
    for c in range(3):
        z = z + hw_ref[3 + c] * xall[:, n_img_ch + c, :]

    # sigmoid: exp on EUP, reciprocal off the VALU (approx -> EUP vrcp)
    o_ref[...] = pl.reciprocal(1.0 + jnp.exp(-z), approx=True)


# -----------------------------------------------------------------------------
# Host-side (trace-time) helper: boundary masks for the 9 conv taps, flat H*W layout.
# -----------------------------------------------------------------------------
def _conv_tap_masks(H, W):
    HW = H * W
    rows = np.arange(HW) // W
    cols = np.arange(HW) % W
    masks = np.zeros((9, HW), np.float32)
    for kh in range(3):
        for kw in range(3):
            dh, dw = kh - 1, kw - 1
            valid = ((rows + dh >= 0) & (rows + dh < H) &
                     (cols + dw >= 0) & (cols + dw < W))
            masks[kh * 3 + kw] = valid.astype(np.float32)
    return masks


# -----------------------------------------------------------------------------
# Parameter init (deterministic, matching the shapes implied by __init__).
# -----------------------------------------------------------------------------
def init_params(key):
    k1, k2, k3, k4 = jax.random.split(key, 4)
    # nn.Conv3d(3, 3, kernel_size=(2,3,3)) weight: (Cout=3, Cin=3, kD=2, kH=3, kW=3)
    conv3d_w = 0.1 * jax.random.normal(k1, (3, 3, 2, 3, 3), jnp.float32)
    conv3d_b = 0.1 * jax.random.normal(k2, (3,), jnp.float32)
    # nn.BatchNorm2d(3) default affine init
    bn_gamma = jnp.ones((3,), jnp.float32)
    bn_beta = jnp.zeros((3,), jnp.float32)
    # stand-in head (see TODO above)
    head_w = 0.1 * jax.random.normal(k3, (6,), jnp.float32)
    head_b = 0.1 * jax.random.normal(k4, (1,), jnp.float32)
    return dict(conv3d_w=conv3d_w, conv3d_b=conv3d_b,
                bn_gamma=bn_gamma, bn_beta=bn_beta,
                head_w=head_w, head_b=head_b)


# -----------------------------------------------------------------------------
# Forward wrapper: one pallas_call, only free (contiguous) reshapes around it.
# -----------------------------------------------------------------------------
@jax.jit
def flowvm_net_forward(x, params):
    B, C, H, W = x.shape
    if C != 9:
        # The C==3 branch goes straight into VSSM, whose definition is not provided.
        raise ValueError(f"Only the 9-channel path is implemented; got C={C}")
    HW = H * W

    x_flat = x.astype(jnp.float32).reshape(B, C, HW)          # lane-dense view
    masks = jnp.asarray(_conv_tap_masks(H, W))                 # (9, HW) constant
    # Conv3d weight (co, ci, d, kh, kw) -> equivalent 2D weight (co, ci*2+d, kh, kw), flat.
    w_flat = params["conv3d_w"].astype(jnp.float32).reshape(3, 6, 3, 3).reshape(-1)

    kernel = functools.partial(fused_flowvm_kernel, W=W)

    out_flat = pl.pallas_call(
        kernel,
        out_shape=jax.ShapeDtypeStruct((B, HW), jnp.float32),
        in_specs=[
            pl.BlockSpec(memory_space=pltpu.MemorySpace.VMEM),   # x (whole array)
            pl.BlockSpec(memory_space=pltpu.MemorySpace.VMEM),   # tap masks
            pl.BlockSpec(memory_space=pltpu.MemorySpace.SMEM),   # conv weights (flat)
            pl.BlockSpec(memory_space=pltpu.MemorySpace.SMEM),   # conv bias
            pl.BlockSpec(memory_space=pltpu.MemorySpace.SMEM),   # bn gamma
            pl.BlockSpec(memory_space=pltpu.MemorySpace.SMEM),   # bn beta
            pl.BlockSpec(memory_space=pltpu.MemorySpace.SMEM),   # head weight
            pl.BlockSpec(memory_space=pltpu.MemorySpace.SMEM),   # head bias
        ],
        out_specs=pl.BlockSpec(memory_space=pltpu.MemorySpace.VMEM),
    )(x_flat, masks, w_flat, params["conv3d_b"], params["bn_gamma"],
      params["bn_beta"], params["head_w"], params["head_b"])

    # Match PyTorch NCHW output shape: (B, num_classes=1, H, W), sigmoid range.
    return out_flat.reshape(B, 1, H, W)


if __name__ == "__main__":
    key = jax.random.PRNGKey(0)
    kx, kp = jax.random.split(key)

    B, C, H, W = 2, 9, 16, 16  # 9 channels = 2 RGB frames (6) + 3 flow channels
    x = jax.random.normal(kx, (B, C, H, W), jnp.float32)
    params = init_params(kp)

    out = flowvm_net_forward(x, params)
    out = jax.block_until_ready(out)

    assert out.shape == (B, 1, H, W), out.shape
    assert bool(jnp.all(jnp.isfinite(out)))
    assert bool(jnp.all((out >= 0.0) & (out <= 1.0)))   # sigmoid output range
    assert float(jnp.std(out)) > 0.0                    # non-degenerate output
    print("KERNEL_OK")
</pallas_src>

<mosaic_0001>
module attributes {stable_mosaic.version = 11 : i64} {
  func.func @fused_flowvm_kernel(%arg0: memref<2x9x256xf32, #tpu.memory_space<vmem>>, %arg1: memref<9x256xf32, #tpu.memory_space<vmem>>, %arg2: memref<162xf32, #tpu.memory_space<smem>>, %arg3: memref<3xf32, #tpu.memory_space<smem>>, %arg4: memref<3xf32, #tpu.memory_space<smem>>, %arg5: memref<3xf32, #tpu.memory_space<smem>>, %arg6: memref<6xf32, #tpu.memory_space<smem>>, %arg7: memref<1xf32, #tpu.memory_space<smem>>, %arg8: memref<2x256xf32, #tpu.memory_space<vmem>>) attributes {dimension_semantics = [], scalar_prefetch = 0 : i64, scratch_operands = 0 : i64, tpu.core_type = #tpu.core_type<tc>} {
    %c0 = arith.constant 0 : index
    %c0_0 = arith.constant 0 : index
    %c0_1 = arith.constant 0 : index
    %0 = vector.load %arg0[%c0, %c0_0, %c0_1] : memref<2x9x256xf32, #tpu.memory_space<vmem>>, vector<2x9x256xf32>
    %1 = vector.extract_strided_slice %0 {offsets = [0, 0, 0], sizes = [2, 6, 256], strides = [1, 1, 1]} : vector<2x9x256xf32> to vector<2x6x256xf32>
    %cst = arith.constant 0.000000e+00 : f32
    %2 = vector.broadcast %cst : f32 to vector<2x6x17xf32>
    %3 = vector.extract_strided_slice %1 {offsets = [0, 0, 0], sizes = [2, 6, 239], strides = [1, 1, 1]} : vector<2x6x256xf32> to vector<2x6x239xf32>
    %4 = tpu.concatenate %2, %3 in 2 : vector<2x6x17xf32>, vector<2x6x239xf32> -> vector<2x6x256xf32>
    %c0_2 = arith.constant 0 : index
    %c0_3 = arith.constant 0 : index
    %5 = vector.load %arg1[%c0_2, %c0_3] : memref<9x256xf32, #tpu.memory_space<vmem>>, vector<1x256xf32>
    %6 = vector.shape_cast %5 : vector<1x256xf32> to vector<256xf32>
    %7 = vector.shape_cast %6 : vector<256xf32> to vector<1x1x256xf32>
    %8 = vector.broadcast %7 : vector<1x1x256xf32> to vector<2x6x256xf32>
    %9 = arith.mulf %4, %8 : vector<2x6x256xf32>
    %10 = vector.extract_strided_slice %9 {offsets = [0, 0, 0], sizes = [2, 1, 256], strides = [1, 1, 1]} : vector<2x6x256xf32> to vector<2x1x256xf32>
    %11 = vector.shape_cast %10 : vector<2x1x256xf32> to vector<2x256xf32>
    %12 = vector.extract_strided_slice %9 {offsets = [0, 1, 0], sizes = [2, 1, 256], strides = [1, 1, 1]} : vector<2x6x256xf32> to vector<2x1x256xf32>
    %13 = vector.shape_cast %12 : vector<2x1x256xf32> to vector<2x256xf32>
    %14 = vector.extract_strided_slice %9 {offsets = [0, 2, 0], sizes = [2, 1, 256], strides = [1, 1, 1]} : vector<2x6x256xf32> to vector<2x1x256xf32>
    %15 = vector.shape_cast %14 : vector<2x1x256xf32> to vector<2x256xf32>
    %16 = vector.extract_strided_slice %9 {offsets = [0, 3, 0], sizes = [2, 1, 256], strides = [1, 1, 1]} : vector<2x6x256xf32> to vector<2x1x256xf32>
    %17 = vector.shape_cast %16 : vector<2x1x256xf32> to vector<2x256xf32>
    %18 = vector.extract_strided_slice %9 {offsets = [0, 4, 0], sizes = [2, 1, 256], strides = [1, 1, 1]} : vector<2x6x256xf32> to vector<2x1x256xf32>
    %19 = vector.shape_cast %18 : vector<2x1x256xf32> to vector<2x256xf32>
    %20 = vector.extract_strided_slice %9 {offsets = [0, 5, 0], sizes = [2, 1, 256], strides = [1, 1, 1]} : vector<2x6x256xf32> to vector<2x1x256xf32>
    %21 = vector.shape_cast %20 : vector<2x1x256xf32> to vector<2x256xf32>
    %cst_4 = arith.constant 0.000000e+00 : f32
    %22 = vector.broadcast %cst_4 : f32 to vector<2x6x16xf32>
    %23 = vector.extract_strided_slice %1 {offsets = [0, 0, 0], sizes = [2, 6, 240], strides = [1, 1, 1]} : vector<2x6x256xf32> to vector<2x6x240xf32>
    %24 = tpu.concatenate %22, %23 in 2 : vector<2x6x16xf32>, vector<2x6x240xf32> -> vector<2x6x256xf32>
    %c1 = arith.constant 1 : index
    %c0_5 = arith.constant 0 : index
    %25 = vector.load %arg1[%c1, %c0_5] : memref<9x256xf32, #tpu.memory_space<vmem>>, vector<1x256xf32>
    %26 = vector.shape_cast %25 : vector<1x256xf32> to vector<256xf32>
    %27 = vector.shape_cast %26 : vector<256xf32> to vector<1x1x256xf32>
    %28 = vector.broadcast %27 : vector<1x1x256xf32> to vector<2x6x256xf32>
    %29 = arith.mulf %24, %28 : vector<2x6x256xf32>
    %30 = vector.extract_strided_slice %29 {offsets = [0, 0, 0], sizes = [2, 1, 256], strides = [1, 1, 1]} : vector<2x6x256xf32> to vector<2x1x256xf32>
    %31 = vector.shape_cast %30 : vector<2x1x256xf32> to vector<2x256xf32>
    %32 = vector.extract_strided_slice %29 {offsets = [0, 1, 0], sizes = [2, 1, 256], strides = [1, 1, 1]} : vector<2x6x256xf32> to vector<2x1x256xf32>
    %33 = vector.shape_cast %32 : vector<2x1x256xf32> to vector<2x256xf32>
    %34 = vector.extract_strided_slice %29 {offsets = [0, 2, 0], sizes = [2, 1, 256], strides = [1, 1, 1]} : vector<2x6x256xf32> to vector<2x1x256xf32>
    %35 = vector.shape_cast %34 : vector<2x1x256xf32> to vector<2x256xf32>
    %36 = vector.extract_strided_slice %29 {offsets = [0, 3, 0], sizes = [2, 1, 256], strides = [1, 1, 1]} : vector<2x6x256xf32> to vector<2x1x256xf32>
    %37 = vector.shape_cast %36 : vector<2x1x256xf32> to vector<2x256xf32>
    %38 = vector.extract_strided_slice %29 {offsets = [0, 4, 0], sizes = [2, 1, 256], strides = [1, 1, 1]} : vector<2x6x256xf32> to vector<2x1x256xf32>
    %39 = vector.shape_cast %38 : vector<2x1x256xf32> to vector<2x256xf32>
    %40 = vector.extract_strided_slice %29 {offsets = [0, 5, 0], sizes = [2, 1, 256], strides = [1, 1, 1]} : vector<2x6x256xf32> to vector<2x1x256xf32>
    %41 = vector.shape_cast %40 : vector<2x1x256xf32> to vector<2x256xf32>
    %cst_6 = arith.constant 0.000000e+00 : f32
    %42 = vector.broadcast %cst_6 : f32 to vector<2x6x15xf32>
    %43 = vector.extract_strided_slice %1 {offsets = [0, 0, 0], sizes = [2, 6, 241], strides = [1, 1, 1]} : vector<2x6x256xf32> to vector<2x6x241xf32>
    %44 = tpu.concatenate %42, %43 in 2 : vector<2x6x15xf32>, vector<2x6x241xf32> -> vector<2x6x256xf32>
    %c2 = arith.constant 2 : index
    %c0_7 = arith.constant 0 : index
    %45 = vector.load %arg1[%c2, %c0_7] : memref<9x256xf32, #tpu.memory_space<vmem>>, vector<1x256xf32>
    %46 = vector.shape_cast %45 : vector<1x256xf32> to vector<256xf32>
    %47 = vector.shape_cast %46 : vector<256xf32> to vector<1x1x256xf32>
    %48 = vector.broadcast %47 : vector<1x1x256xf32> to vector<2x6x256xf32>
    %49 = arith.mulf %44, %48 : vector<2x6x256xf32>
    %50 = vector.extract_strided_slice %49 {offsets = [0, 0, 0], sizes = [2, 1, 256], strides = [1, 1, 1]} : vector<2x6x256xf32> to vector<2x1x256xf32>
    %51 = vector.shape_cast %50 : vector<2x1x256xf32> to vector<2x256xf32>
    %52 = vector.extract_strided_slice %49 {offsets = [0, 1, 0], sizes = [2, 1, 256], strides = [1, 1, 1]} : vector<2x6x256xf32> to vector<2x1x256xf32>
    %53 = vector.shape_cast %52 : vector<2x1x256xf32> to vector<2x256xf32>
    %54 = vector.extract_strided_slice %49 {offsets = [0, 2, 0], sizes = [2, 1, 256], strides = [1, 1, 1]} : vector<2x6x256xf32> to vector<2x1x256xf32>
    %55 = vector.shape_cast %54 : vector<2x1x256xf32> to vector<2x256xf32>
    %56 = vector.extract_strided_slice %49 {offsets = [0, 3, 0], sizes = [2, 1, 256], strides = [1, 1, 1]} : vector<2x6x256xf32> to vector<2x1x256xf32>
    %57 = vector.shape_cast %56 : vector<2x1x256xf32> to vector<2x256xf32>
    %58 = vector.extract_strided_slice %49 {offsets = [0, 4, 0], sizes = [2, 1, 256], strides = [1, 1, 1]} : vector<2x6x256xf32> to vector<2x1x256xf32>
    %59 = vector.shape_cast %58 : vector<2x1x256xf32> to vector<2x256xf32>
    %60 = vector.extract_strided_slice %49 {offsets = [0, 5, 0], sizes = [2, 1, 256], strides = [1, 1, 1]} : vector<2x6x256xf32> to vector<2x1x256xf32>
    %61 = vector.shape_cast %60 : vector<2x1x256xf32> to vector<2x256xf32>
    %cst_8 = arith.constant 0.000000e+00 : f32
    %62 = vector.broadcast %cst_8 : f32 to vector<2x6x1xf32>
    %63 = vector.extract_strided_slice %1 {offsets = [0, 0, 0], sizes = [2, 6, 255], strides = [1, 1, 1]} : vector<2x6x256xf32> to vector<2x6x255xf32>
    %64 = tpu.concatenate %62, %63 in 2 : vector<2x6x1xf32>, vector<2x6x255xf32> -> vector<2x6x256xf32>
    %c3 = arith.constant 3 : index
    %c0_9 = arith.constant 0 : index
    %65 = vector.load %arg1[%c3, %c0_9] : memref<9x256xf32, #tpu.memory_space<vmem>>, vector<1x256xf32>
    %66 = vector.shape_cast %65 : vector<1x256xf32> to vector<256xf32>
    %67 = vector.shape_cast %66 : vector<256xf32> to vector<1x1x256xf32>
    %68 = vector.broadcast %67 : vector<1x1x256xf32> to vector<2x6x256xf32>
    %69 = arith.mulf %64, %68 : vector<2x6x256xf32>
    %70 = vector.extract_strided_slice %69 {offsets = [0, 0, 0], sizes = [2, 1, 256], strides = [1, 1, 1]} : vector<2x6x256xf32> to vector<2x1x256xf32>
    %71 = vector.shape_cast %70 : vector<2x1x256xf32> to vector<2x256xf32>
    %72 = vector.extract_strided_slice %69 {offsets = [0, 1, 0], sizes = [2, 1, 256], strides = [1, 1, 1]} : vector<2x6x256xf32> to vector<2x1x256xf32>
    %73 = vector.shape_cast %72 : vector<2x1x256xf32> to vector<2x256xf32>
    %74 = vector.extract_strided_slice %69 {offsets = [0, 2, 0], sizes = [2, 1, 256], strides = [1, 1, 1]} : vector<2x6x256xf32> to vector<2x1x256xf32>
    %75 = vector.shape_cast %74 : vector<2x1x256xf32> to vector<2x256xf32>
    %76 = vector.extract_strided_slice %69 {offsets = [0, 3, 0], sizes = [2, 1, 256], strides = [1, 1, 1]} : vector<2x6x256xf32> to vector<2x1x256xf32>
    %77 = vector.shape_cast %76 : vector<2x1x256xf32> to vector<2x256xf32>
    %78 = vector.extract_strided_slice %69 {offsets = [0, 4, 0], sizes = [2, 1, 256], strides = [1, 1, 1]} : vector<2x6x256xf32> to vector<2x1x256xf32>
    %79 = vector.shape_cast %78 : vector<2x1x256xf32> to vector<2x256xf32>
    %80 = vector.extract_strided_slice %69 {offsets = [0, 5, 0], sizes = [2, 1, 256], strides = [1, 1, 1]} : vector<2x6x256xf32> to vector<2x1x256xf32>
    %81 = vector.shape_cast %80 : vector<2x1x256xf32> to vector<2x256xf32>
    %c4 = arith.constant 4 : index
    %c0_10 = arith.constant 0 : index
    %82 = vector.load %arg1[%c4, %c0_10] : memref<9x256xf32, #tpu.memory_space<vmem>>, vector<1x256xf32>
    %83 = vector.shape_cast %82 : vector<1x256xf32> to vector<256xf32>
    %84 = vector.shape_cast %83 : vector<256xf32> to vector<1x1x256xf32>
    %85 = vector.broadcast %84 : vector<1x1x256xf32> to vector<2x6x256xf32>
    %86 = arith.mulf %1, %85 : vector<2x6x256xf32>
    %87 = vector.extract_strided_slice %86 {offsets = [0, 0, 0], sizes = [2, 1, 256], strides = [1, 1, 1]} : vector<2x6x256xf32> to vector<2x1x256xf32>
    %88 = vector.shape_cast %87 : vector<2x1x256xf32> to vector<2x256xf32>
    %89 = vector.extract_strided_slice %86 {offsets = [0, 1, 0], sizes = [2, 1, 256], strides = [1, 1, 1]} : vector<2x6x256xf32> to vector<2x1x256xf32>
    %90 = vector.shape_cast %89 : vector<2x1x256xf32> to vector<2x256xf32>
    %91 = vector.extract_strided_slice %86 {offsets = [0, 2, 0], sizes = [2, 1, 256], strides = [1, 1, 1]} : vector<2x6x256xf32> to vector<2x1x256xf32>
    %92 = vector.shape_cast %91 : vector<2x1x256xf32> to vector<2x256xf32>
    %93 = vector.extract_strided_slice %86 {offsets = [0, 3, 0], sizes = [2, 1, 256], strides = [1, 1, 1]} : vector<2x6x256xf32> to vector<2x1x256xf32>
    %94 = vector.shape_cast %93 : vector<2x1x256xf32> to vector<2x256xf32>
    %95 = vector.extract_strided_slice %86 {offsets = [0, 4, 0], sizes = [2, 1, 256], strides = [1, 1, 1]} : vector<2x6x256xf32> to vector<2x1x256xf32>
    %96 = vector.shape_cast %95 : vector<2x1x256xf32> to vector<2x256xf32>
    %97 = vector.extract_strided_slice %86 {offsets = [0, 5, 0], sizes = [2, 1, 256], strides = [1, 1, 1]} : vector<2x6x256xf32> to vector<2x1x256xf32>
    %98 = vector.shape_cast %97 : vector<2x1x256xf32> to vector<2x256xf32>
    %99 = vector.extract_strided_slice %1 {offsets = [0, 0, 1], sizes = [2, 6, 255], strides = [1, 1, 1]} : vector<2x6x256xf32> to vector<2x6x255xf32>
    %cst_11 = arith.constant 0.000000e+00 : f32
    %100 = vector.broadcast %cst_11 : f32 to vector<2x6x1xf32>
    %101 = tpu.concatenate %99, %100 in 2 : vector<2x6x255xf32>, vector<2x6x1xf32> -> vector<2x6x256xf32>
    %c5 = arith.constant 5 : index
    %c0_12 = arith.constant 0 : index
    %102 = vector.load %arg1[%c5, %c0_12] : memref<9x256xf32, #tpu.memory_space<vmem>>, vector<1x256xf32>
    %103 = vector.shape_cast %102 : vector<1x256xf32> to vector<256xf32>
    %104 = vector.shape_cast %103 : vector<256xf32> to vector<1x1x256xf32>
    %105 = vector.broadcast %104 : vector<1x1x256xf32> to vector<2x6x256xf32>
    %106 = arith.mulf %101, %105 : vector<2x6x256xf32>
    %107 = vector.extract_strided_slice %106 {offsets = [0, 0, 0], sizes = [2, 1, 256], strides = [1, 1, 1]} : vector<2x6x256xf32> to vector<2x1x256xf32>
    %108 = vector.shape_cast %107 : vector<2x1x256xf32> to vector<2x256xf32>
    %109 = vector.extract_strided_slice %106 {offsets = [0, 1, 0], sizes = [2, 1, 256], strides = [1, 1, 1]} : vector<2x6x256xf32> to vector<2x1x256xf32>
    %110 = vector.shape_cast %109 : vector<2x1x256xf32> to vector<2x256xf32>
    %111 = vector.extract_strided_slice %106 {offsets = [0, 2, 0], sizes = [2, 1, 256], strides = [1, 1, 1]} : vector<2x6x256xf32> to vector<2x1x256xf32>
    %112 = vector.shape_cast %111 : vector<2x1x256xf32> to vector<2x256xf32>
    %113 = vector.extract_strided_slice %106 {offsets = [0, 3, 0], sizes = [2, 1, 256], strides = [1, 1, 1]} : vector<2x6x256xf32> to vector<2x1x256xf32>
    %114 = vector.shape_cast %113 : vector<2x1x256xf32> to vector<2x256xf32>
    %115 = vector.extract_strided_slice %106 {offsets = [0, 4, 0], sizes = [2, 1, 256], strides = [1, 1, 1]} : vector<2x6x256xf32> to vector<2x1x256xf32>
    %116 = vector.shape_cast %115 : vector<2x1x256xf32> to vector<2x256xf32>
    %117 = vector.extract_strided_slice %106 {offsets = [0, 5, 0], sizes = [2, 1, 256], strides = [1, 1, 1]} : vector<2x6x256xf32> to vector<2x1x256xf32>
    %118 = vector.shape_cast %117 : vector<2x1x256xf32> to vector<2x256xf32>
    %119 = vector.extract_strided_slice %1 {offsets = [0, 0, 15], sizes = [2, 6, 241], strides = [1, 1, 1]} : vector<2x6x256xf32> to vector<2x6x241xf32>
    %cst_13 = arith.constant 0.000000e+00 : f32
    %120 = vector.broadcast %cst_13 : f32 to vector<2x6x15xf32>
    %121 = tpu.concatenate %119, %120 in 2 : vector<2x6x241xf32>, vector<2x6x15xf32> -> vector<2x6x256xf32>
    %c6 = arith.constant 6 : index
    %c0_14 = arith.constant 0 : index
    %122 = vector.load %arg1[%c6, %c0_14] : memref<9x256xf32, #tpu.memory_space<vmem>>, vector<1x256xf32>
    %123 = vector.shape_cast %122 : vector<1x256xf32> to vector<256xf32>
    %124 = vector.shape_cast %123 : vector<256xf32> to vector<1x1x256xf32>
    %125 = vector.broadcast %124 : vector<1x1x256xf32> to vector<2x6x256xf32>
    %126 = arith.mulf %121, %125 : vector<2x6x256xf32>
    %127 = vector.extract_strided_slice %126 {offsets = [0, 0, 0], sizes = [2, 1, 256], strides = [1, 1, 1]} : vector<2x6x256xf32> to vector<2x1x256xf32>
    %128 = vector.shape_cast %127 : vector<2x1x256xf32> to vector<2x256xf32>
    %129 = vector.extract_strided_slice %126 {offsets = [0, 1, 0], sizes = [2, 1, 256], strides = [1, 1, 1]} : vector<2x6x256xf32> to vector<2x1x256xf32>
    %130 = vector.shape_cast %129 : vector<2x1x256xf32> to vector<2x256xf32>
    %131 = vector.extract_strided_slice %126 {offsets = [0, 2, 0], sizes = [2, 1, 256], strides = [1, 1, 1]} : vector<2x6x256xf32> to vector<2x1x256xf32>
    %132 = vector.shape_cast %131 : vector<2x1x256xf32> to vector<2x256xf32>
    %133 = vector.extract_strided_slice %126 {offsets = [0, 3, 0], sizes = [2, 1, 256], strides = [1, 1, 1]} : vector<2x6x256xf32> to vector<2x1x256xf32>
    %134 = vector.shape_cast %133 : vector<2x1x256xf32> to vector<2x256xf32>
    %135 = vector.extract_strided_slice %126 {offsets = [0, 4, 0], sizes = [2, 1, 256], strides = [1, 1, 1]} : vector<2x6x256xf32> to vector<2x1x256xf32>
    %136 = vector.shape_cast %135 : vector<2x1x256xf32> to vector<2x256xf32>
    %137 = vector.extract_strided_slice %126 {offsets = [0, 5, 0], sizes = [2, 1, 256], strides = [1, 1, 1]} : vector<2x6x256xf32> to vector<2x1x256xf32>
    %138 = vector.shape_cast %137 : vector<2x1x256xf32> to vector<2x256xf32>
    %139 = vector.extract_strided_slice %1 {offsets = [0, 0, 16], sizes = [2, 6, 240], strides = [1, 1, 1]} : vector<2x6x256xf32> to vector<2x6x240xf32>
    %cst_15 = arith.constant 0.000000e+00 : f32
    %140 = vector.broadcast %cst_15 : f32 to vector<2x6x16xf32>
    %141 = tpu.concatenate %139, %140 in 2 : vector<2x6x240xf32>, vector<2x6x16xf32> -> vector<2x6x256xf32>
    %c7 = arith.constant 7 : index
    %c0_16 = arith.constant 0 : index
    %142 = vector.load %arg1[%c7, %c0_16] : memref<9x256xf32, #tpu.memory_space<vmem>>, vector<1x256xf32>
    %143 = vector.shape_cast %142 : vector<1x256xf32> to vector<256xf32>
    %144 = vector.shape_cast %143 : vector<256xf32> to vector<1x1x256xf32>
    %145 = vector.broadcast %144 : vector<1x1x256xf32> to vector<2x6x256xf32>
    %146 = arith.mulf %141, %145 : vector<2x6x256xf32>
    %147 = vector.extract_strided_slice %146 {offsets = [0, 0, 0], sizes = [2, 1, 256], strides = [1, 1, 1]} : vector<2x6x256xf32> to vector<2x1x256xf32>
    %148 = vector.shape_cast %147 : vector<2x1x256xf32> to vector<2x256xf32>
    %149 = vector.extract_strided_slice %146 {offsets = [0, 1, 0], sizes = [2, 1, 256], strides = [1, 1, 1]} : vector<2x6x256xf32> to vector<2x1x256xf32>
    %150 = vector.shape_cast %149 : vector<2x1x256xf32> to vector<2x256xf32>
    %151 = vector.extract_strided_slice %146 {offsets = [0, 2, 0], sizes = [2, 1, 256], strides = [1, 1, 1]} : vector<2x6x256xf32> to vector<2x1x256xf32>
    %152 = vector.shape_cast %151 : vector<2x1x256xf32> to vector<2x256xf32>
    %153 = vector.extract_strided_slice %146 {offsets = [0, 3, 0], sizes = [2, 1, 256], strides = [1, 1, 1]} : vector<2x6x256xf32> to vector<2x1x256xf32>
    %154 = vector.shape_cast %153 : vector<2x1x256xf32> to vector<2x256xf32>
    %155 = vector.extract_strided_slice %146 {offsets = [0, 4, 0], sizes = [2, 1, 256], strides = [1, 1, 1]} : vector<2x6x256xf32> to vector<2x1x256xf32>
    %156 = vector.shape_cast %155 : vector<2x1x256xf32> to vector<2x256xf32>
    %157 = vector.extract_strided_slice %146 {offsets = [0, 5, 0], sizes = [2, 1, 256], strides = [1, 1, 1]} : vector<2x6x256xf32> to vector<2x1x256xf32>
    %158 = vector.shape_cast %157 : vector<2x1x256xf32> to vector<2x256xf32>
    %159 = vector.extract_strided_slice %1 {offsets = [0, 0, 17], sizes = [2, 6, 239], strides = [1, 1, 1]} : vector<2x6x256xf32> to vector<2x6x239xf32>
    %cst_17 = arith.constant 0.000000e+00 : f32
    %160 = vector.broadcast %cst_17 : f32 to vector<2x6x17xf32>
    %161 = tpu.concatenate %159, %160 in 2 : vector<2x6x239xf32>, vector<2x6x17xf32> -> vector<2x6x256xf32>
    %c8 = arith.constant 8 : index
    %c0_18 = arith.constant 0 : index
    %162 = vector.load %arg1[%c8, %c0_18] : memref<9x256xf32, #tpu.memory_space<vmem>>, vector<1x256xf32>
    %163 = vector.shape_cast %162 : vector<1x256xf32> to vector<256xf32>
    %164 = vector.shape_cast %163 : vector<256xf32> to vector<1x1x256xf32>
    %165 = vector.broadcast %164 : vector<1x1x256xf32> to vector<2x6x256xf32>
    %166 = arith.mulf %161, %165 : vector<2x6x256xf32>
    %167 = vector.extract_strided_slice %166 {offsets = [0, 0, 0], sizes = [2, 1, 256], strides = [1, 1, 1]} : vector<2x6x256xf32> to vector<2x1x256xf32>
    %168 = vector.shape_cast %167 : vector<2x1x256xf32> to vector<2x256xf32>
    %169 = vector.extract_strided_slice %166 {offsets = [0, 1, 0], sizes = [2, 1, 256], strides = [1, 1, 1]} : vector<2x6x256xf32> to vector<2x1x256xf32>
    %170 = vector.shape_cast %169 : vector<2x1x256xf32> to vector<2x256xf32>
    %171 = vector.extract_strided_slice %166 {offsets = [0, 2, 0], sizes = [2, 1, 256], strides = [1, 1, 1]} : vector<2x6x256xf32> to vector<2x1x256xf32>
    %172 = vector.shape_cast %171 : vector<2x1x256xf32> to vector<2x256xf32>
    %173 = vector.extract_strided_slice %166 {offsets = [0, 3, 0], sizes = [2, 1, 256], strides = [1, 1, 1]} : vector<2x6x256xf32> to vector<2x1x256xf32>
    %174 = vector.shape_cast %173 : vector<2x1x256xf32> to vector<2x256xf32>
    %175 = vector.extract_strided_slice %166 {offsets = [0, 4, 0], sizes = [2, 1, 256], strides = [1, 1, 1]} : vector<2x6x256xf32> to vector<2x1x256xf32>
    %176 = vector.shape_cast %175 : vector<2x1x256xf32> to vector<2x256xf32>
    %177 = vector.extract_strided_slice %166 {offsets = [0, 5, 0], sizes = [2, 1, 256], strides = [1, 1, 1]} : vector<2x6x256xf32> to vector<2x1x256xf32>
    %178 = vector.shape_cast %177 : vector<2x1x256xf32> to vector<2x256xf32>
    %cst_19 = arith.constant 0.000000e+00 : f32
    %179 = vector.broadcast %cst_19 : f32 to vector<2x256xf32>
    %c0_20 = arith.constant 0 : index
    %180 = memref.load %arg3[%c0_20] : memref<3xf32, #tpu.memory_space<smem>>
    %181 = vector.broadcast %180 : f32 to vector<2x256xf32>
    %182 = arith.addf %179, %181 : vector<2x256xf32>
    %c0_21 = arith.constant 0 : index
    %183 = memref.load %arg2[%c0_21] : memref<162xf32, #tpu.memory_space<smem>>
    %184 = vector.broadcast %183 : f32 to vector<2x256xf32>
    %185 = arith.mulf %184, %11 : vector<2x256xf32>
    %186 = arith.addf %182, %185 : vector<2x256xf32>
    %c9 = arith.constant 9 : index
    %187 = memref.load %arg2[%c9] : memref<162xf32, #tpu.memory_space<smem>>
    %188 = vector.broadcast %187 : f32 to vector<2x256xf32>
    %189 = arith.mulf %188, %13 : vector<2x256xf32>
    %190 = arith.addf %186, %189 : vector<2x256xf32>
    %c18 = arith.constant 18 : index
    %191 = memref.load %arg2[%c18] : memref<162xf32, #tpu.memory_space<smem>>
    %192 = vector.broadcast %191 : f32 to vector<2x256xf32>
    %193 = arith.mulf %192, %15 : vector<2x256xf32>
    %194 = arith.addf %190, %193 : vector<2x256xf32>
    %c27 = arith.constant 27 : index
    %195 = memref.load %arg2[%c27] : memref<162xf32, #tpu.memory_space<smem>>
    %196 = vector.broadcast %195 : f32 to vector<2x256xf32>
    %197 = arith.mulf %196, %17 : vector<2x256xf32>
    %198 = arith.addf %194, %197 : vector<2x256xf32>
    %c36 = arith.constant 36 : index
    %199 = memref.load %arg2[%c36] : memref<162xf32, #tpu.memory_space<smem>>
    %200 = vector.broadcast %199 : f32 to vector<2x256xf32>
    %201 = arith.mulf %200, %19 : vector<2x256xf32>
    %202 = arith.addf %198, %201 : vector<2x256xf32>
    %c45 = arith.constant 45 : index
    %203 = memref.load %arg2[%c45] : memref<162xf32, #tpu.memory_space<smem>>
    %204 = vector.broadcast %203 : f32 to vector<2x256xf32>
    %205 = arith.mulf %204, %21 : vector<2x256xf32>
    %206 = arith.addf %202, %205 : vector<2x256xf32>
    %c1_22 = arith.constant 1 : index
    %207 = memref.load %arg2[%c1_22] : memref<162xf32, #tpu.memory_space<smem>>
    %208 = vector.broadcast %207 : f32 to vector<2x256xf32>
    %209 = arith.mulf %208, %31 : vector<2x256xf32>
    %210 = arith.addf %206, %209 : vector<2x256xf32>
    %c10 = arith.constant 10 : index
    %211 = memref.load %arg2[%c10] : memref<162xf32, #tpu.memory_space<smem>>
    %212 = vector.broadcast %211 : f32 to vector<2x256xf32>
    %213 = arith.mulf %212, %33 : vector<2x256xf32>
    %214 = arith.addf %210, %213 : vector<2x256xf32>
    %c19 = arith.constant 19 : index
    %215 = memref.load %arg2[%c19] : memref<162xf32, #tpu.memory_space<smem>>
    %216 = vector.broadcast %215 : f32 to vector<2x256xf32>
    %217 = arith.mulf %216, %35 : vector<2x256xf32>
    %218 = arith.addf %214, %217 : vector<2x256xf32>
    %c28 = arith.constant 28 : index
    %219 = memref.load %arg2[%c28] : memref<162xf32, #tpu.memory_space<smem>>
    %220 = vector.broadcast %219 : f32 to vector<2x256xf32>
    %221 = arith.mulf %220, %37 : vector<2x256xf32>
    %222 = arith.addf %218, %221 : vector<2x256xf32>
    %c37 = arith.constant 37 : index
    %223 = memref.load %arg2[%c37] : memref<162xf32, #tpu.memory_space<smem>>
    %224 = vector.broadcast %223 : f32 to vector<2x256xf32>
    %225 = arith.mulf %224, %39 : vector<2x256xf32>
    %226 = arith.addf %222, %225 : vector<2x256xf32>
    %c46 = arith.constant 46 : index
    %227 = memref.load %arg2[%c46] : memref<162xf32, #tpu.memory_space<smem>>
    %228 = vector.broadcast %227 : f32 to vector<2x256xf32>
    %229 = arith.mulf %228, %41 : vector<2x256xf32>
    %230 = arith.addf %226, %229 : vector<2x256xf32>
    %c2_23 = arith.constant 2 : index
    %231 = memref.load %arg2[%c2_23] : memref<162xf32, #tpu.memory_space<smem>>
    %232 = vector.broadcast %231 : f32 to vector<2x256xf32>
    %233 = arith.mulf %232, %51 : vector<2x256xf32>
    %234 = arith.addf %230, %233 : vector<2x256xf32>
    %c11 = arith.constant 11 : index
    %235 = memref.load %arg2[%c11] : memref<162xf32, #tpu.memory_space<smem>>
    %236 = vector.broadcast %235 : f32 to vector<2x256xf32>
    %237 = arith.mulf %236, %53 : vector<2x256xf32>
    %238 = arith.addf %234, %237 : vector<2x256xf32>
    %c20 = arith.constant 20 : index
    %239 = memref.load %arg2[%c20] : memref<162xf32, #tpu.memory_space<smem>>
    %240 = vector.broadcast %239 : f32 to vector<2x256xf32>
    %241 = arith.mulf %240, %55 : vector<2x256xf32>
    %242 = arith.addf %238, %241 : vector<2x256xf32>
    %c29 = arith.constant 29 : index
    %243 = memref.load %arg2[%c29] : memref<162xf32, #tpu.memory_space<smem>>
    %244 = vector.broadcast %243 : f32 to vector<2x256xf32>
    %245 = arith.mulf %244, %57 : vector<2x256xf32>
    %246 = arith.addf %242, %245 : vector<2x256xf32>
    %c38 = arith.constant 38 : index
    %247 = memref.load %arg2[%c38] : memref<162xf32, #tpu.memory_space<smem>>
    %248 = vector.broadcast %247 : f32 to vector<2x256xf32>
    %249 = arith.mulf %248, %59 : vector<2x256xf32>
    %250 = arith.addf %246, %249 : vector<2x256xf32>
    %c47 = arith.constant 47 : index
    %251 = memref.load %arg2[%c47] : memref<162xf32, #tpu.memory_space<smem>>
    %252 = vector.broadcast %251 : f32 to vector<2x256xf32>
    %253 = arith.mulf %252, %61 : vector<2x256xf32>
    %254 = arith.addf %250, %253 : vector<2x256xf32>
    %c3_24 = arith.constant 3 : index
    %255 = memref.load %arg2[%c3_24] : memref<162xf32, #tpu.memory_space<smem>>
    %256 = vector.broadcast %255 : f32 to vector<2x256xf32>
    %257 = arith.mulf %256, %71 : vector<2x256xf32>
    %258 = arith.addf %254, %257 : vector<2x256xf32>
    %c12 = arith.constant 12 : index
    %259 = memref.load %arg2[%c12] : memref<162xf32, #tpu.memory_space<smem>>
    %260 = vector.broadcast %259 : f32 to vector<2x256xf32>
    %261 = arith.mulf %260, %73 : vector<2x256xf32>
    %262 = arith.addf %258, %261 : vector<2x256xf32>
    %c21 = arith.constant 21 : index
    %263 = memref.load %arg2[%c21] : memref<162xf32, #tpu.memory_space<smem>>
    %264 = vector.broadcast %263 : f32 to vector<2x256xf32>
    %265 = arith.mulf %264, %75 : vector<2x256xf32>
    %266 = arith.addf %262, %265 : vector<2x256xf32>
    %c30 = arith.constant 30 : index
    %267 = memref.load %arg2[%c30] : memref<162xf32, #tpu.memory_space<smem>>
    %268 = vector.broadcast %267 : f32 to vector<2x256xf32>
    %269 = arith.mulf %268, %77 : vector<2x256xf32>
    %270 = arith.addf %266, %269 : vector<2x256xf32>
    %c39 = arith.constant 39 : index
    %271 = memref.load %arg2[%c39] : memref<162xf32, #tpu.memory_space<smem>>
    %272 = vector.broadcast %271 : f32 to vector<2x256xf32>
    %273 = arith.mulf %272, %79 : vector<2x256xf32>
    %274 = arith.addf %270, %273 : vector<2x256xf32>
    %c48 = arith.constant 48 : index
    %275 = memref.load %arg2[%c48] : memref<162xf32, #tpu.memory_space<smem>>
    %276 = vector.broadcast %275 : f32 to vector<2x256xf32>
    %277 = arith.mulf %276, %81 : vector<2x256xf32>
    %278 = arith.addf %274, %277 : vector<2x256xf32>
    %c4_25 = arith.constant 4 : index
    %279 = memref.load %arg2[%c4_25] : memref<162xf32, #tpu.memory_space<smem>>
    %280 = vector.broadcast %279 : f32 to vector<2x256xf32>
    %281 = arith.mulf %280, %88 : vector<2x256xf32>
    %282 = arith.addf %278, %281 : vector<2x256xf32>
    %c13 = arith.constant 13 : index
    %283 = memref.load %arg2[%c13] : memref<162xf32, #tpu.memory_space<smem>>
    %284 = vector.broadcast %283 : f32 to vector<2x256xf32>
    %285 = arith.mulf %284, %90 : vector<2x256xf32>
    %286 = arith.addf %282, %285 : vector<2x256xf32>
    %c22 = arith.constant 22 : index
    %287 = memref.load %arg2[%c22] : memref<162xf32, #tpu.memory_space<smem>>
    %288 = vector.broadcast %287 : f32 to vector<2x256xf32>
    %289 = arith.mulf %288, %92 : vector<2x256xf32>
    %290 = arith.addf %286, %289 : vector<2x256xf32>
    %c31 = arith.constant 31 : index
    %291 = memref.load %arg2[%c31] : memref<162xf32, #tpu.memory_space<smem>>
    %292 = vector.broadcast %291 : f32 to vector<2x256xf32>
    %293 = arith.mulf %292, %94 : vector<2x256xf32>
    %294 = arith.addf %290, %293 : vector<2x256xf32>
    %c40 = arith.constant 40 : index
    %295 = memref.load %arg2[%c40] : memref<162xf32, #tpu.memory_space<smem>>
    %296 = vector.broadcast %295 : f32 to vector<2x256xf32>
    %297 = arith.mulf %296, %96 : vector<2x256xf32>
    %298 = arith.addf %294, %297 : vector<2x256xf32>
    %c49 = arith.constant 49 : index
    %299 = memref.load %arg2[%c49] : memref<162xf32, #tpu.memory_space<smem>>
    %300 = vector.broadcast %299 : f32 to vector<2x256xf32>
    %301 = arith.mulf %300, %98 : vector<2x256xf32>
    %302 = arith.addf %298, %301 : vector<2x256xf32>
    %c5_26 = arith.constant 5 : index
    %303 = memref.load %arg2[%c5_26] : memref<162xf32, #tpu.memory_space<smem>>
    %304 = vector.broadcast %303 : f32 to vector<2x256xf32>
    %305 = arith.mulf %304, %108 : vector<2x256xf32>
    %306 = arith.addf %302, %305 : vector<2x256xf32>
    %c14 = arith.constant 14 : index
    %307 = memref.load %arg2[%c14] : memref<162xf32, #tpu.memory_space<smem>>
    %308 = vector.broadcast %307 : f32 to vector<2x256xf32>
    %309 = arith.mulf %308, %110 : vector<2x256xf32>
    %310 = arith.addf %306, %309 : vector<2x256xf32>
    %c23 = arith.constant 23 : index
    %311 = memref.load %arg2[%c23] : memref<162xf32, #tpu.memory_space<smem>>
    %312 = vector.broadcast %311 : f32 to vector<2x256xf32>
    %313 = arith.mulf %312, %112 : vector<2x256xf32>
    %314 = arith.addf %310, %313 : vector<2x256xf32>
    %c32 = arith.constant 32 : index
    %315 = memref.load %arg2[%c32] : memref<162xf32, #tpu.memory_space<smem>>
    %316 = vector.broadcast %315 : f32 to vector<2x256xf32>
    %317 = arith.mulf %316, %114 : vector<2x256xf32>
    %318 = arith.addf %314, %317 : vector<2x256xf32>
    %c41 = arith.constant 41 : index
    %319 = memref.load %arg2[%c41] : memref<162xf32, #tpu.memory_space<smem>>
    %320 = vector.broadcast %319 : f32 to vector<2x256xf32>
    %321 = arith.mulf %320, %116 : vector<2x256xf32>
    %322 = arith.addf %318, %321 : vector<2x256xf32>
    %c50 = arith.constant 50 : index
    %323 = memref.load %arg2[%c50] : memref<162xf32, #tpu.memory_space<smem>>
    %324 = vector.broadcast %323 : f32 to vector<2x256xf32>
    %325 = arith.mulf %324, %118 : vector<2x256xf32>
    %326 = arith.addf %322, %325 : vector<2x256xf32>
    %c6_27 = arith.constant 6 : index
    %327 = memref.load %arg2[%c6_27] : memref<162xf32, #tpu.memory_space<smem>>
    %328 = vector.broadcast %327 : f32 to vector<2x256xf32>
    %329 = arith.mulf %328, %128 : vector<2x256xf32>
    %330 = arith.addf %326, %329 : vector<2x256xf32>
    %c15 = arith.constant 15 : index
    %331 = memref.load %arg2[%c15] : memref<162xf32, #tpu.memory_space<smem>>
    %332 = vector.broadcast %331 : f32 to vector<2x256xf32>
    %333 = arith.mulf %332, %130 : vector<2x256xf32>
    %334 = arith.addf %330, %333 : vector<2x256xf32>
    %c24 = arith.constant 24 : index
    %335 = memref.load %arg2[%c24] : memref<162xf32, #tpu.memory_space<smem>>
    %336 = vector.broadcast %335 : f32 to vector<2x256xf32>
    %337 = arith.mulf %336, %132 : vector<2x256xf32>
    %338 = arith.addf %334, %337 : vector<2x256xf32>
    %c33 = arith.constant 33 : index
    %339 = memref.load %arg2[%c33] : memref<162xf32, #tpu.memory_space<smem>>
    %340 = vector.broadcast %339 : f32 to vector<2x256xf32>
    %341 = arith.mulf %340, %134 : vector<2x256xf32>
    %342 = arith.addf %338, %341 : vector<2x256xf32>
    %c42 = arith.constant 42 : index
    %343 = memref.load %arg2[%c42] : memref<162xf32, #tpu.memory_space<smem>>
    %344 = vector.broadcast %343 : f32 to vector<2x256xf32>
    %345 = arith.mulf %344, %136 : vector<2x256xf32>
    %346 = arith.addf %342, %345 : vector<2x256xf32>
    %c51 = arith.constant 51 : index
    %347 = memref.load %arg2[%c51] : memref<162xf32, #tpu.memory_space<smem>>
    %348 = vector.broadcast %347 : f32 to vector<2x256xf32>
    %349 = arith.mulf %348, %138 : vector<2x256xf32>
    %350 = arith.addf %346, %349 : vector<2x256xf32>
    %c7_28 = arith.constant 7 : index
    %351 = memref.load %arg2[%c7_28] : memref<162xf32, #tpu.memory_space<smem>>
    %352 = vector.broadcast %351 : f32 to vector<2x256xf32>
    %353 = arith.mulf %352, %148 : vector<2x256xf32>
    %354 = arith.addf %350, %353 : vector<2x256xf32>
    %c16 = arith.constant 16 : index
    %355 = memref.load %arg2[%c16] : memref<162xf32, #tpu.memory_space<smem>>
    %356 = vector.broadcast %355 : f32 to vector<2x256xf32>
    %357 = arith.mulf %356, %150 : vector<2x256xf32>
    %358 = arith.addf %354, %357 : vector<2x256xf32>
    %c25 = arith.constant 25 : index
    %359 = memref.load %arg2[%c25] : memref<162xf32, #tpu.memory_space<smem>>
    %360 = vector.broadcast %359 : f32 to vector<2x256xf32>
    %361 = arith.mulf %360, %152 : vector<2x256xf32>
    %362 = arith.addf %358, %361 : vector<2x256xf32>
    %c34 = arith.constant 34 : index
    %363 = memref.load %arg2[%c34] : memref<162xf32, #tpu.memory_space<smem>>
    %364 = vector.broadcast %363 : f32 to vector<2x256xf32>
    %365 = arith.mulf %364, %154 : vector<2x256xf32>
    %366 = arith.addf %362, %365 : vector<2x256xf32>
    %c43 = arith.constant 43 : index
    %367 = memref.load %arg2[%c43] : memref<162xf32, #tpu.memory_space<smem>>
    %368 = vector.broadcast %367 : f32 to vector<2x256xf32>
    %369 = arith.mulf %368, %156 : vector<2x256xf32>
    %370 = arith.addf %366, %369 : vector<2x256xf32>
    %c52 = arith.constant 52 : index
    %371 = memref.load %arg2[%c52] : memref<162xf32, #tpu.memory_space<smem>>
    %372 = vector.broadcast %371 : f32 to vector<2x256xf32>
    %373 = arith.mulf %372, %158 : vector<2x256xf32>
    %374 = arith.addf %370, %373 : vector<2x256xf32>
    %c8_29 = arith.constant 8 : index
    %375 = memref.load %arg2[%c8_29] : memref<162xf32, #tpu.memory_space<smem>>
    %376 = vector.broadcast %375 : f32 to vector<2x256xf32>
    %377 = arith.mulf %376, %168 : vector<2x256xf32>
    %378 = arith.addf %374, %377 : vector<2x256xf32>
    %c17 = arith.constant 17 : index
    %379 = memref.load %arg2[%c17] : memref<162xf32, #tpu.memory_space<smem>>
    %380 = vector.broadcast %379 : f32 to vector<2x256xf32>
    %381 = arith.mulf %380, %170 : vector<2x256xf32>
    %382 = arith.addf %378, %381 : vector<2x256xf32>
    %c26 = arith.constant 26 : index
    %383 = memref.load %arg2[%c26] : memref<162xf32, #tpu.memory_space<smem>>
    %384 = vector.broadcast %383 : f32 to vector<2x256xf32>
    %385 = arith.mulf %384, %172 : vector<2x256xf32>
    %386 = arith.addf %382, %385 : vector<2x256xf32>
    %c35 = arith.constant 35 : index
    %387 = memref.load %arg2[%c35] : memref<162xf32, #tpu.memory_space<smem>>
    %388 = vector.broadcast %387 : f32 to vector<2x256xf32>
    %389 = arith.mulf %388, %174 : vector<2x256xf32>
    %390 = arith.addf %386, %389 : vector<2x256xf32>
    %c44 = arith.constant 44 : index
    %391 = memref.load %arg2[%c44] : memref<162xf32, #tpu.memory_space<smem>>
    %392 = vector.broadcast %391 : f32 to vector<2x256xf32>
    %393 = arith.mulf %392, %176 : vector<2x256xf32>
    %394 = arith.addf %390, %393 : vector<2x256xf32>
    %c53 = arith.constant 53 : index
    %395 = memref.load %arg2[%c53] : memref<162xf32, #tpu.memory_space<smem>>
    %396 = vector.broadcast %395 : f32 to vector<2x256xf32>
    %397 = arith.mulf %396, %178 : vector<2x256xf32>
    %398 = arith.addf %394, %397 : vector<2x256xf32>
    %399 = vector.shape_cast %398 : vector<2x256xf32> to vector<1x2x256xf32>
    %cst_30 = arith.constant dense<0.000000e+00> : vector<1xf32>
    %400 = vector.multi_reduction <add>, %399, %cst_30 [1, 2] : vector<1x2x256xf32> to vector<1xf32>
    %401 = vector.shape_cast %400 : vector<1xf32> to vector<1x1x1xf32>
    %402 = vector.extract %401[0, 0, 0] : f32 from vector<1x1x1xf32>
    %403 = arith.mulf %398, %398 : vector<2x256xf32>
    %404 = vector.shape_cast %403 : vector<2x256xf32> to vector<1x2x256xf32>
    %cst_31 = arith.constant dense<0.000000e+00> : vector<1xf32>
    %405 = vector.multi_reduction <add>, %404, %cst_31 [1, 2] : vector<1x2x256xf32> to vector<1xf32>
    %406 = vector.shape_cast %405 : vector<1xf32> to vector<1x1x1xf32>
    %407 = vector.extract %406[0, 0, 0] : f32 from vector<1x1x1xf32>
    %cst_32 = arith.constant 0.001953125 : f32
    %408 = arith.mulf %402, %cst_32 : f32
    %cst_33 = arith.constant 0.001953125 : f32
    %409 = arith.mulf %407, %cst_33 : f32
    %410 = arith.mulf %408, %408 : f32
    %411 = arith.subf %409, %410 : f32
    %cst_34 = arith.constant 0.000000e+00 : f32
    %412 = arith.maximumf %411, %cst_34 : f32
    %c0_35 = arith.constant 0 : index
    %413 = memref.load %arg4[%c0_35] : memref<3xf32, #tpu.memory_space<smem>>
    %cst_36 = arith.constant 9.99999974E-6 : f32
    %414 = arith.addf %412, %cst_36 : f32
    %415 = math.rsqrt %414 : f32
    %416 = arith.mulf %413, %415 : f32
    %c0_37 = arith.constant 0 : index
    %417 = memref.load %arg5[%c0_37] : memref<3xf32, #tpu.memory_space<smem>>
    %418 = arith.mulf %408, %416 : f32
    %419 = arith.subf %417, %418 : f32
    %420 = vector.broadcast %416 : f32 to vector<2x256xf32>
    %421 = arith.mulf %398, %420 : vector<2x256xf32>
    %422 = vector.broadcast %419 : f32 to vector<2x256xf32>
    %423 = arith.addf %421, %422 : vector<2x256xf32>
    %cst_38 = arith.constant 0.000000e+00 : f32
    %424 = vector.broadcast %cst_38 : f32 to vector<2x256xf32>
    %425 = arith.maximumf %423, %424 : vector<2x256xf32>
    %cst_39 = arith.constant 0.000000e+00 : f32
    %426 = vector.broadcast %cst_39 : f32 to vector<2x256xf32>
    %c1_40 = arith.constant 1 : index
    %427 = memref.load %arg3[%c1_40] : memref<3xf32, #tpu.memory_space<smem>>
    %428 = vector.broadcast %427 : f32 to vector<2x256xf32>
    %429 = arith.addf %426, %428 : vector<2x256xf32>
    %c54 = arith.constant 54 : index
    %430 = memref.load %arg2[%c54] : memref<162xf32, #tpu.memory_space<smem>>
    %431 = vector.broadcast %430 : f32 to vector<2x256xf32>
    %432 = arith.mulf %431, %11 : vector<2x256xf32>
    %433 = arith.addf %429, %432 : vector<2x256xf32>
    %c63 = arith.constant 63 : index
    %434 = memref.load %arg2[%c63] : memref<162xf32, #tpu.memory_space<smem>>
    %435 = vector.broadcast %434 : f32 to vector<2x256xf32>
    %436 = arith.mulf %435, %13 : vector<2x256xf32>
    %437 = arith.addf %433, %436 : vector<2x256xf32>
    %c72 = arith.constant 72 : index
    %438 = memref.load %arg2[%c72] : memref<162xf32, #tpu.memory_space<smem>>
    %439 = vector.broadcast %438 : f32 to vector<2x256xf32>
    %440 = arith.mulf %439, %15 : vector<2x256xf32>
    %441 = arith.addf %437, %440 : vector<2x256xf32>
    %c81 = arith.constant 81 : index
    %442 = memref.load %arg2[%c81] : memref<162xf32, #tpu.memory_space<smem>>
    %443 = vector.broadcast %442 : f32 to vector<2x256xf32>
    %444 = arith.mulf %443, %17 : vector<2x256xf32>
    %445 = arith.addf %441, %444 : vector<2x256xf32>
    %c90 = arith.constant 90 : index
    %446 = memref.load %arg2[%c90] : memref<162xf32, #tpu.memory_space<smem>>
    %447 = vector.broadcast %446 : f32 to vector<2x256xf32>
    %448 = arith.mulf %447, %19 : vector<2x256xf32>
    %449 = arith.addf %445, %448 : vector<2x256xf32>
    %c99 = arith.constant 99 : index
    %450 = memref.load %arg2[%c99] : memref<162xf32, #tpu.memory_space<smem>>
    %451 = vector.broadcast %450 : f32 to vector<2x256xf32>
    %452 = arith.mulf %451, %21 : vector<2x256xf32>
    %453 = arith.addf %449, %452 : vector<2x256xf32>
    %c55 = arith.constant 55 : index
    %454 = memref.load %arg2[%c55] : memref<162xf32, #tpu.memory_space<smem>>
    %455 = vector.broadcast %454 : f32 to vector<2x256xf32>
    %456 = arith.mulf %455, %31 : vector<2x256xf32>
    %457 = arith.addf %453, %456 : vector<2x256xf32>
    %c64 = arith.constant 64 : index
    %458 = memref.load %arg2[%c64] : memref<162xf32, #tpu.memory_space<smem>>
    %459 = vector.broadcast %458 : f32 to vector<2x256xf32>
    %460 = arith.mulf %459, %33 : vector<2x256xf32>
    %461 = arith.addf %457, %460 : vector<2x256xf32>
    %c73 = arith.constant 73 : index
    %462 = memref.load %arg2[%c73] : memref<162xf32, #tpu.memory_space<smem>>
    %463 = vector.broadcast %462 : f32 to vector<2x256xf32>
    %464 = arith.mulf %463, %35 : vector<2x256xf32>
    %465 = arith.addf %461, %464 : vector<2x256xf32>
    %c82 = arith.constant 82 : index
    %466 = memref.load %arg2[%c82] : memref<162xf32, #tpu.memory_space<smem>>
    %467 = vector.broadcast %466 : f32 to vector<2x256xf32>
    %468 = arith.mulf %467, %37 : vector<2x256xf32>
    %469 = arith.addf %465, %468 : vector<2x256xf32>
    %c91 = arith.constant 91 : index
    %470 = memref.load %arg2[%c91] : memref<162xf32, #tpu.memory_space<smem>>
    %471 = vector.broadcast %470 : f32 to vector<2x256xf32>
    %472 = arith.mulf %471, %39 : vector<2x256xf32>
    %473 = arith.addf %469, %472 : vector<2x256xf32>
    %c100 = arith.constant 100 : index
    %474 = memref.load %arg2[%c100] : memref<162xf32, #tpu.memory_space<smem>>
    %475 = vector.broadcast %474 : f32 to vector<2x256xf32>
    %476 = arith.mulf %475, %41 : vector<2x256xf32>
    %477 = arith.addf %473, %476 : vector<2x256xf32>
    %c56 = arith.constant 56 : index
    %478 = memref.load %arg2[%c56] : memref<162xf32, #tpu.memory_space<smem>>
    %479 = vector.broadcast %478 : f32 to vector<2x256xf32>
    %480 = arith.mulf %479, %51 : vector<2x256xf32>
    %481 = arith.addf %477, %480 : vector<2x256xf32>
    %c65 = arith.constant 65 : index
    %482 = memref.load %arg2[%c65] : memref<162xf32, #tpu.memory_space<smem>>
    %483 = vector.broadcast %482 : f32 to vector<2x256xf32>
    %484 = arith.mulf %483, %53 : vector<2x256xf32>
    %485 = arith.addf %481, %484 : vector<2x256xf32>
    %c74 = arith.constant 74 : index
    %486 = memref.load %arg2[%c74] : memref<162xf32, #tpu.memory_space<smem>>
    %487 = vector.broadcast %486 : f32 to vector<2x256xf32>
    %488 = arith.mulf %487, %55 : vector<2x256xf32>
    %489 = arith.addf %485, %488 : vector<2x256xf32>
    %c83 = arith.constant 83 : index
    %490 = memref.load %arg2[%c83] : memref<162xf32, #tpu.memory_space<smem>>
    %491 = vector.broadcast %490 : f32 to vector<2x256xf32>
    %492 = arith.mulf %491, %57 : vector<2x256xf32>
    %493 = arith.addf %489, %492 : vector<2x256xf32>
    %c92 = arith.constant 92 : index
    %494 = memref.load %arg2[%c92] : memref<162xf32, #tpu.memory_space<smem>>
    %495 = vector.broadcast %494 : f32 to vector<2x256xf32>
    %496 = arith.mulf %495, %59 : vector<2x256xf32>
    %497 = arith.addf %493, %496 : vector<2x256xf32>
    %c101 = arith.constant 101 : index
    %498 = memref.load %arg2[%c101] : memref<162xf32, #tpu.memory_space<smem>>
    %499 = vector.broadcast %498 : f32 to vector<2x256xf32>
    %500 = arith.mulf %499, %61 : vector<2x256xf32>
    %501 = arith.addf %497, %500 : vector<2x256xf32>
    %c57 = arith.constant 57 : index
    %502 = memref.load %arg2[%c57] : memref<162xf32, #tpu.memory_space<smem>>
    %503 = vector.broadcast %502 : f32 to vector<2x256xf32>
    %504 = arith.mulf %503, %71 : vector<2x256xf32>
    %505 = arith.addf %501, %504 : vector<2x256xf32>
    %c66 = arith.constant 66 : index
    %506 = memref.load %arg2[%c66] : memref<162xf32, #tpu.memory_space<smem>>
    %507 = vector.broadcast %506 : f32 to vector<2x256xf32>
    %508 = arith.mulf %507, %73 : vector<2x256xf32>
    %509 = arith.addf %505, %508 : vector<2x256xf32>
    %c75 = arith.constant 75 : index
    %510 = memref.load %arg2[%c75] : memref<162xf32, #tpu.memory_space<smem>>
    %511 = vector.broadcast %510 : f32 to vector<2x256xf32>
    %512 = arith.mulf %511, %75 : vector<2x256xf32>
    %513 = arith.addf %509, %512 : vector<2x256xf32>
    %c84 = arith.constant 84 : index
    %514 = memref.load %arg2[%c84] : memref<162xf32, #tpu.memory_space<smem>>
    %515 = vector.broadcast %514 : f32 to vector<2x256xf32>
    %516 = arith.mulf %515, %77 : vector<2x256xf32>
    %517 = arith.addf %513, %516 : vector<2x256xf32>
    %c93 = arith.constant 93 : index
    %518 = memref.load %arg2[%c93] : memref<162xf32, #tpu.memory_space<smem>>
    %519 = vector.broadcast %518 : f32 to vector<2x256xf32>
    %520 = arith.mulf %519, %79 : vector<2x256xf32>
    %521 = arith.addf %517, %520 : vector<2x256xf32>
    %c102 = arith.constant 102 : index
    %522 = memref.load %arg2[%c102] : memref<162xf32, #tpu.memory_space<smem>>
    %523 = vector.broadcast %522 : f32 to vector<2x256xf32>
    %524 = arith.mulf %523, %81 : vector<2x256xf32>
    %525 = arith.addf %521, %524 : vector<2x256xf32>
    %c58 = arith.constant 58 : index
    %526 = memref.load %arg2[%c58] : memref<162xf32, #tpu.memory_space<smem>>
    %527 = vector.broadcast %526 : f32 to vector<2x256xf32>
    %528 = arith.mulf %527, %88 : vector<2x256xf32>
    %529 = arith.addf %525, %528 : vector<2x256xf32>
    %c67 = arith.constant 67 : index
    %530 = memref.load %arg2[%c67] : memref<162xf32, #tpu.memory_space<smem>>
    %531 = vector.broadcast %530 : f32 to vector<2x256xf32>
    %532 = arith.mulf %531, %90 : vector<2x256xf32>
    %533 = arith.addf %529, %532 : vector<2x256xf32>
    %c76 = arith.constant 76 : index
    %534 = memref.load %arg2[%c76] : memref<162xf32, #tpu.memory_space<smem>>
    %535 = vector.broadcast %534 : f32 to vector<2x256xf32>
    %536 = arith.mulf %535, %92 : vector<2x256xf32>
    %537 = arith.addf %533, %536 : vector<2x256xf32>
    %c85 = arith.constant 85 : index
    %538 = memref.load %arg2[%c85] : memref<162xf32, #tpu.memory_space<smem>>
    %539 = vector.broadcast %538 : f32 to vector<2x256xf32>
    %540 = arith.mulf %539, %94 : vector<2x256xf32>
    %541 = arith.addf %537, %540 : vector<2x256xf32>
    %c94 = arith.constant 94 : index
    %542 = memref.load %arg2[%c94] : memref<162xf32, #tpu.memory_space<smem>>
    %543 = vector.broadcast %542 : f32 to vector<2x256xf32>
    %544 = arith.mulf %543, %96 : vector<2x256xf32>
    %545 = arith.addf %541, %544 : vector<2x256xf32>
    %c103 = arith.constant 103 : index
    %546 = memref.load %arg2[%c103] : memref<162xf32, #tpu.memory_space<smem>>
    %547 = vector.broadcast %546 : f32 to vector<2x256xf32>
    %548 = arith.mulf %547, %98 : vector<2x256xf32>
    %549 = arith.addf %545, %548 : vector<2x256xf32>
    %c59 = arith.constant 59 : index
    %550 = memref.load %arg2[%c59] : memref<162xf32, #tpu.memory_space<smem>>
    %551 = vector.broadcast %550 : f32 to vector<2x256xf32>
    %552 = arith.mulf %551, %108 : vector<2x256xf32>
    %553 = arith.addf %549, %552 : vector<2x256xf32>
    %c68 = arith.constant 68 : index
    %554 = memref.load %arg2[%c68] : memref<162xf32, #tpu.memory_space<smem>>
    %555 = vector.broadcast %554 : f32 to vector<2x256xf32>
    %556 = arith.mulf %555, %110 : vector<2x256xf32>
    %557 = arith.addf %553, %556 : vector<2x256xf32>
    %c77 = arith.constant 77 : index
    %558 = memref.load %arg2[%c77] : memref<162xf32, #tpu.memory_space<smem>>
    %559 = vector.broadcast %558 : f32 to vector<2x256xf32>
    %560 = arith.mulf %559, %112 : vector<2x256xf32>
    %561 = arith.addf %557, %560 : vector<2x256xf32>
    %c86 = arith.constant 86 : index
    %562 = memref.load %arg2[%c86] : memref<162xf32, #tpu.memory_space<smem>>
    %563 = vector.broadcast %562 : f32 to vector<2x256xf32>
    %564 = arith.mulf %563, %114 : vector<2x256xf32>
    %565 = arith.addf %561, %564 : vector<2x256xf32>
    %c95 = arith.constant 95 : index
    %566 = memref.load %arg2[%c95] : memref<162xf32, #tpu.memory_space<smem>>
    %567 = vector.broadcast %566 : f32 to vector<2x256xf32>
    %568 = arith.mulf %567, %116 : vector<2x256xf32>
    %569 = arith.addf %565, %568 : vector<2x256xf32>
    %c104 = arith.constant 104 : index
    %570 = memref.load %arg2[%c104] : memref<162xf32, #tpu.memory_space<smem>>
    %571 = vector.broadcast %570 : f32 to vector<2x256xf32>
    %572 = arith.mulf %571, %118 : vector<2x256xf32>
    %573 = arith.addf %569, %572 : vector<2x256xf32>
    %c60 = arith.constant 60 : index
    %574 = memref.load %arg2[%c60] : memref<162xf32, #tpu.memory_space<smem>>
    %575 = vector.broadcast %574 : f32 to vector<2x256xf32>
    %576 = arith.mulf %575, %128 : vector<2x256xf32>
    %577 = arith.addf %573, %576 : vector<2x256xf32>
    %c69 = arith.constant 69 : index
    %578 = memref.load %arg2[%c69] : memref<162xf32, #tpu.memory_space<smem>>
    %579 = vector.broadcast %578 : f32 to vector<2x256xf32>
    %580 = arith.mulf %579, %130 : vector<2x256xf32>
    %581 = arith.addf %577, %580 : vector<2x256xf32>
    %c78 = arith.constant 78 : index
    %582 = memref.load %arg2[%c78] : memref<162xf32, #tpu.memory_space<smem>>
    %583 = vector.broadcast %582 : f32 to vector<2x256xf32>
    %584 = arith.mulf %583, %132 : vector<2x256xf32>
    %585 = arith.addf %581, %584 : vector<2x256xf32>
    %c87 = arith.constant 87 : index
    %586 = memref.load %arg2[%c87] : memref<162xf32, #tpu.memory_space<smem>>
    %587 = vector.broadcast %586 : f32 to vector<2x256xf32>
    %588 = arith.mulf %587, %134 : vector<2x256xf32>
    %589 = arith.addf %585, %588 : vector<2x256xf32>
    %c96 = arith.constant 96 : index
    %590 = memref.load %arg2[%c96] : memref<162xf32, #tpu.memory_space<smem>>
    %591 = vector.broadcast %590 : f32 to vector<2x256xf32>
    %592 = arith.mulf %591, %136 : vector<2x256xf32>
    %593 = arith.addf %589, %592 : vector<2x256xf32>
    %c105 = arith.constant 105 : index
    %594 = memref.load %arg2[%c105] : memref<162xf32, #tpu.memory_space<smem>>
    %595 = vector.broadcast %594 : f32 to vector<2x256xf32>
    %596 = arith.mulf %595, %138 : vector<2x256xf32>
    %597 = arith.addf %593, %596 : vector<2x256xf32>
    %c61 = arith.constant 61 : index
    %598 = memref.load %arg2[%c61] : memref<162xf32, #tpu.memory_space<smem>>
    %599 = vector.broadcast %598 : f32 to vector<2x256xf32>
    %600 = arith.mulf %599, %148 : vector<2x256xf32>
    %601 = arith.addf %597, %600 : vector<2x256xf32>
    %c70 = arith.constant 70 : index
    %602 = memref.load %arg2[%c70] : memref<162xf32, #tpu.memory_space<smem>>
    %603 = vector.broadcast %602 : f32 to vector<2x256xf32>
    %604 = arith.mulf %603, %150 : vector<2x256xf32>
    %605 = arith.addf %601, %604 : vector<2x256xf32>
    %c79 = arith.constant 79 : index
    %606 = memref.load %arg2[%c79] : memref<162xf32, #tpu.memory_space<smem>>
    %607 = vector.broadcast %606 : f32 to vector<2x256xf32>
    %608 = arith.mulf %607, %152 : vector<2x256xf32>
    %609 = arith.addf %605, %608 : vector<2x256xf32>
    %c88 = arith.constant 88 : index
    %610 = memref.load %arg2[%c88] : memref<162xf32, #tpu.memory_space<smem>>
    %611 = vector.broadcast %610 : f32 to vector<2x256xf32>
    %612 = arith.mulf %611, %154 : vector<2x256xf32>
    %613 = arith.addf %609, %612 : vector<2x256xf32>
    %c97 = arith.constant 97 : index
    %614 = memref.load %arg2[%c97] : memref<162xf32, #tpu.memory_space<smem>>
    %615 = vector.broadcast %614 : f32 to vector<2x256xf32>
    %616 = arith.mulf %615, %156 : vector<2x256xf32>
    %617 = arith.addf %613, %616 : vector<2x256xf32>
    %c106 = arith.constant 106 : index
    %618 = memref.load %arg2[%c106] : memref<162xf32, #tpu.memory_space<smem>>
    %619 = vector.broadcast %618 : f32 to vector<2x256xf32>
    %620 = arith.mulf %619, %158 : vector<2x256xf32>
    %621 = arith.addf %617, %620 : vector<2x256xf32>
    %c62 = arith.constant 62 : index
    %622 = memref.load %arg2[%c62] : memref<162xf32, #tpu.memory_space<smem>>
    %623 = vector.broadcast %622 : f32 to vector<2x256xf32>
    %624 = arith.mulf %623, %168 : vector<2x256xf32>
    %625 = arith.addf %621, %624 : vector<2x256xf32>
    %c71 = arith.constant 71 : index
    %626 = memref.load %arg2[%c71] : memref<162xf32, #tpu.memory_space<smem>>
    %627 = vector.broadcast %626 : f32 to vector<2x256xf32>
    %628 = arith.mulf %627, %170 : vector<2x256xf32>
    %629 = arith.addf %625, %628 : vector<2x256xf32>
    %c80 = arith.constant 80 : index
    %630 = memref.load %arg2[%c80] : memref<162xf32, #tpu.memory_space<smem>>
    %631 = vector.broadcast %630 : f32 to vector<2x256xf32>
    %632 = arith.mulf %631, %172 : vector<2x256xf32>
    %633 = arith.addf %629, %632 : vector<2x256xf32>
    %c89 = arith.constant 89 : index
    %634 = memref.load %arg2[%c89] : memref<162xf32, #tpu.memory_space<smem>>
    %635 = vector.broadcast %634 : f32 to vector<2x256xf32>
    %636 = arith.mulf %635, %174 : vector<2x256xf32>
    %637 = arith.addf %633, %636 : vector<2x256xf32>
    %c98 = arith.constant 98 : index
    %638 = memref.load %arg2[%c98] : memref<162xf32, #tpu.memory_space<smem>>
    %639 = vector.broadcast %638 : f32 to vector<2x256xf32>
    %640 = arith.mulf %639, %176 : vector<2x256xf32>
    %641 = arith.addf %637, %640 : vector<2x256xf32>
    %c107 = arith.constant 107 : index
    %642 = memref.load %arg2[%c107] : memref<162xf32, #tpu.memory_space<smem>>
    %643 = vector.broadcast %642 : f32 to vector<2x256xf32>
    %644 = arith.mulf %643, %178 : vector<2x256xf32>
    %645 = arith.addf %641, %644 : vector<2x256xf32>
    %646 = vector.shape_cast %645 : vector<2x256xf32> to vector<1x2x256xf32>
    %cst_41 = arith.constant dense<0.000000e+00> : vector<1xf32>
    %647 = vector.multi_reduction <add>, %646, %cst_41 [1, 2] : vector<1x2x256xf32> to vector<1xf32>
    %648 = vector.shape_cast %647 : vector<1xf32> to vector<1x1x1xf32>
    %649 = vector.extract %648[0, 0, 0] : f32 from vector<1x1x1xf32>
    %650 = arith.mulf %645, %645 : vector<2x256xf32>
    %651 = vector.shape_cast %650 : vector<2x256xf32> to vector<1x2x256xf32>
    %cst_42 = arith.constant dense<0.000000e+00> : vector<1xf32>
    %652 = vector.multi_reduction <add>, %651, %cst_42 [1, 2] : vector<1x2x256xf32> to vector<1xf32>
    %653 = vector.shape_cast %652 : vector<1xf32> to vector<1x1x1xf32>
    %654 = vector.extract %653[0, 0, 0] : f32 from vector<1x1x1xf32>
    %cst_43 = arith.constant 0.001953125 : f32
    %655 = arith.mulf %649, %cst_43 : f32
    %cst_44 = arith.constant 0.001953125 : f32
    %656 = arith.mulf %654, %cst_44 : f32
    %657 = arith.mulf %655, %655 : f32
    %658 = arith.subf %656, %657 : f32
    %cst_45 = arith.constant 0.000000e+00 : f32
    %659 = arith.maximumf %658, %cst_45 : f32
    %c1_46 = arith.constant 1 : index
    %660 = memref.load %arg4[%c1_46] : memref<3xf32, #tpu.memory_space<smem>>
    %cst_47 = arith.constant 9.99999974E-6 : f32
    %661 = arith.addf %659, %cst_47 : f32
    %662 = math.rsqrt %661 : f32
    %663 = arith.mulf %660, %662 : f32
    %c1_48 = arith.constant 1 : index
    %664 = memref.load %arg5[%c1_48] : memref<3xf32, #tpu.memory_space<smem>>
    %665 = arith.mulf %655, %663 : f32
    %666 = arith.subf %664, %665 : f32
    %667 = vector.broadcast %663 : f32 to vector<2x256xf32>
    %668 = arith.mulf %645, %667 : vector<2x256xf32>
    %669 = vector.broadcast %666 : f32 to vector<2x256xf32>
    %670 = arith.addf %668, %669 : vector<2x256xf32>
    %cst_49 = arith.constant 0.000000e+00 : f32
    %671 = vector.broadcast %cst_49 : f32 to vector<2x256xf32>
    %672 = arith.maximumf %670, %671 : vector<2x256xf32>
    %cst_50 = arith.constant 0.000000e+00 : f32
    %673 = vector.broadcast %cst_50 : f32 to vector<2x256xf32>
    %c2_51 = arith.constant 2 : index
    %674 = memref.load %arg3[%c2_51] : memref<3xf32, #tpu.memory_space<smem>>
    %675 = vector.broadcast %674 : f32 to vector<2x256xf32>
    %676 = arith.addf %673, %675 : vector<2x256xf32>
    %c108 = arith.constant 108 : index
    %677 = memref.load %arg2[%c108] : memref<162xf32, #tpu.memory_space<smem>>
    %678 = vector.broadcast %677 : f32 to vector<2x256xf32>
    %679 = arith.mulf %678, %11 : vector<2x256xf32>
    %680 = arith.addf %676, %679 : vector<2x256xf32>
    %c117 = arith.constant 117 : index
    %681 = memref.load %arg2[%c117] : memref<162xf32, #tpu.memory_space<smem>>
    %682 = vector.broadcast %681 : f32 to vector<2x256xf32>
    %683 = arith.mulf %682, %13 : vector<2x256xf32>
    %684 = arith.addf %680, %683 : vector<2x256xf32>
    %c126 = arith.constant 126 : index
    %685 = memref.load %arg2[%c126] : memref<162xf32, #tpu.memory_space<smem>>
    %686 = vector.broadcast %685 : f32 to vector<2x256xf32>
    %687 = arith.mulf %686, %15 : vector<2x256xf32>
    %688 = arith.addf %684, %687 : vector<2x256xf32>
    %c135 = arith.constant 135 : index
    %689 = memref.load %arg2[%c135] : memref<162xf32, #tpu.memory_space<smem>>
    %690 = vector.broadcast %689 : f32 to vector<2x256xf32>
    %691 = arith.mulf %690, %17 : vector<2x256xf32>
    %692 = arith.addf %688, %691 : vector<2x256xf32>
    %c144 = arith.constant 144 : index
    %693 = memref.load %arg2[%c144] : memref<162xf32, #tpu.memory_space<smem>>
    %694 = vector.broadcast %693 : f32 to vector<2x256xf32>
    %695 = arith.mulf %694, %19 : vector<2x256xf32>
    %696 = arith.addf %692, %695 : vector<2x256xf32>
    %c153 = arith.constant 153 : index
    %697 = memref.load %arg2[%c153] : memref<162xf32, #tpu.memory_space<smem>>
    %698 = vector.broadcast %697 : f32 to vector<2x256xf32>
    %699 = arith.mulf %698, %21 : vector<2x256xf32>
    %700 = arith.addf %696, %699 : vector<2x256xf32>
    %c109 = arith.constant 109 : index
    %701 = memref.load %arg2[%c109] : memref<162xf32, #tpu.memory_space<smem>>
    %702 = vector.broadcast %701 : f32 to vector<2x256xf32>
    %703 = arith.mulf %702, %31 : vector<2x256xf32>
    %704 = arith.addf %700, %703 : vector<2x256xf32>
    %c118 = arith.constant 118 : index
    %705 = memref.load %arg2[%c118] : memref<162xf32, #tpu.memory_space<smem>>
    %706 = vector.broadcast %705 : f32 to vector<2x256xf32>
    %707 = arith.mulf %706, %33 : vector<2x256xf32>
    %708 = arith.addf %704, %707 : vector<2x256xf32>
    %c127 = arith.constant 127 : index
    %709 = memref.load %arg2[%c127] : memref<162xf32, #tpu.memory_space<smem>>
    %710 = vector.broadcast %709 : f32 to vector<2x256xf32>
    %711 = arith.mulf %710, %35 : vector<2x256xf32>
    %712 = arith.addf %708, %711 : vector<2x256xf32>
    %c136 = arith.constant 136 : index
    %713 = memref.load %arg2[%c136] : memref<162xf32, #tpu.memory_space<smem>>
    %714 = vector.broadcast %713 : f32 to vector<2x256xf32>
    %715 = arith.mulf %714, %37 : vector<2x256xf32>
    %716 = arith.addf %712, %715 : vector<2x256xf32>
    %c145 = arith.constant 145 : index
    %717 = memref.load %arg2[%c145] : memref<162xf32, #tpu.memory_space<smem>>
    %718 = vector.broadcast %717 : f32 to vector<2x256xf32>
    %719 = arith.mulf %718, %39 : vector<2x256xf32>
    %720 = arith.addf %716, %719 : vector<2x256xf32>
    %c154 = arith.constant 154 : index
    %721 = memref.load %arg2[%c154] : memref<162xf32, #tpu.memory_space<smem>>
    %722 = vector.broadcast %721 : f32 to vector<2x256xf32>
    %723 = arith.mulf %722, %41 : vector<2x256xf32>
    %724 = arith.addf %720, %723 : vector<2x256xf32>
    %c110 = arith.constant 110 : index
    %725 = memref.load %arg2[%c110] : memref<162xf32, #tpu.memory_space<smem>>
    %726 = vector.broadcast %725 : f32 to vector<2x256xf32>
    %727 = arith.mulf %726, %51 : vector<2x256xf32>
    %728 = arith.addf %724, %727 : vector<2x256xf32>
    %c119 = arith.constant 119 : index
    %729 = memref.load %arg2[%c119] : memref<162xf32, #tpu.memory_space<smem>>
    %730 = vector.broadcast %729 : f32 to vector<2x256xf32>
    %731 = arith.mulf %730, %53 : vector<2x256xf32>
    %732 = arith.addf %728, %731 : vector<2x256xf32>
    %c128 = arith.constant 128 : index
    %733 = memref.load %arg2[%c128] : memref<162xf32, #tpu.memory_space<smem>>
    %734 = vector.broadcast %733 : f32 to vector<2x256xf32>
    %735 = arith.mulf %734, %55 : vector<2x256xf32>
    %736 = arith.addf %732, %735 : vector<2x256xf32>
    %c137 = arith.constant 137 : index
    %737 = memref.load %arg2[%c137] : memref<162xf32, #tpu.memory_space<smem>>
    %738 = vector.broadcast %737 : f32 to vector<2x256xf32>
    %739 = arith.mulf %738, %57 : vector<2x256xf32>
    %740 = arith.addf %736, %739 : vector<2x256xf32>
    %c146 = arith.constant 146 : index
    %741 = memref.load %arg2[%c146] : memref<162xf32, #tpu.memory_space<smem>>
    %742 = vector.broadcast %741 : f32 to vector<2x256xf32>
    %743 = arith.mulf %742, %59 : vector<2x256xf32>
    %744 = arith.addf %740, %743 : vector<2x256xf32>
    %c155 = arith.constant 155 : index
    %745 = memref.load %arg2[%c155] : memref<162xf32, #tpu.memory_space<smem>>
    %746 = vector.broadcast %745 : f32 to vector<2x256xf32>
    %747 = arith.mulf %746, %61 : vector<2x256xf32>
    %748 = arith.addf %744, %747 : vector<2x256xf32>
    %c111 = arith.constant 111 : index
    %749 = memref.load %arg2[%c111] : memref<162xf32, #tpu.memory_space<smem>>
    %750 = vector.broadcast %749 : f32 to vector<2x256xf32>
    %751 = arith.mulf %750, %71 : vector<2x256xf32>
    %752 = arith.addf %748, %751 : vector<2x256xf32>
    %c120 = arith.constant 120 : index
    %753 = memref.load %arg2[%c120] : memref<162xf32, #tpu.memory_space<smem>>
    %754 = vector.broadcast %753 : f32 to vector<2x256xf32>
    %755 = arith.mulf %754, %73 : vector<2x256xf32>
    %756 = arith.addf %752, %755 : vector<2x256xf32>
    %c129 = arith.constant 129 : index
    %757 = memref.load %arg2[%c129] : memref<162xf32, #tpu.memory_space<smem>>
    %758 = vector.broadcast %757 : f32 to vector<2x256xf32>
    %759 = arith.mulf %758, %75 : vector<2x256xf32>
    %760 = arith.addf %756, %759 : vector<2x256xf32>
    %c138 = arith.constant 138 : index
    %761 = memref.load %arg2[%c138] : memref<162xf32, #tpu.memory_space<smem>>
    %762 = vector.broadcast %761 : f32 to vector<2x256xf32>
    %763 = arith.mulf %762, %77 : vector<2x256xf32>
    %764 = arith.addf %760, %763 : vector<2x256xf32>
    %c147 = arith.constant 147 : index
    %765 = memref.load %arg2[%c147] : memref<162xf32, #tpu.memory_space<smem>>
    %766 = vector.broadcast %765 : f32 to vector<2x256xf32>
    %767 = arith.mulf %766, %79 : vector<2x256xf32>
    %768 = arith.addf %764, %767 : vector<2x256xf32>
    %c156 = arith.constant 156 : index
    %769 = memref.load %arg2[%c156] : memref<162xf32, #tpu.memory_space<smem>>
    %770 = vector.broadcast %769 : f32 to vector<2x256xf32>
    %771 = arith.mulf %770, %81 : vector<2x256xf32>
    %772 = arith.addf %768, %771 : vector<2x256xf32>
    %c112 = arith.constant 112 : index
    %773 = memref.load %arg2[%c112] : memref<162xf32, #tpu.memory_space<smem>>
    %774 = vector.broadcast %773 : f32 to vector<2x256xf32>
    %775 = arith.mulf %774, %88 : vector<2x256xf32>
    %776 = arith.addf %772, %775 : vector<2x256xf32>
    %c121 = arith.constant 121 : index
    %777 = memref.load %arg2[%c121] : memref<162xf32, #tpu.memory_space<smem>>
    %778 = vector.broadcast %777 : f32 to vector<2x256xf32>
    %779 = arith.mulf %778, %90 : vector<2x256xf32>
    %780 = arith.addf %776, %779 : vector<2x256xf32>
    %c130 = arith.constant 130 : index
    %781 = memref.load %arg2[%c130] : memref<162xf32, #tpu.memory_space<smem>>
    %782 = vector.broadcast %781 : f32 to vector<2x256xf32>
    %783 = arith.mulf %782, %92 : vector<2x256xf32>
    %784 = arith.addf %780, %783 : vector<2x256xf32>
    %c139 = arith.constant 139 : index
    %785 = memref.load %arg2[%c139] : memref<162xf32, #tpu.memory_space<smem>>
    %786 = vector.broadcast %785 : f32 to vector<2x256xf32>
    %787 = arith.mulf %786, %94 : vector<2x256xf32>
    %788 = arith.addf %784, %787 : vector<2x256xf32>
    %c148 = arith.constant 148 : index
    %789 = memref.load %arg2[%c148] : memref<162xf32, #tpu.memory_space<smem>>
    %790 = vector.broadcast %789 : f32 to vector<2x256xf32>
    %791 = arith.mulf %790, %96 : vector<2x256xf32>
    %792 = arith.addf %788, %791 : vector<2x256xf32>
    %c157 = arith.constant 157 : index
    %793 = memref.load %arg2[%c157] : memref<162xf32, #tpu.memory_space<smem>>
    %794 = vector.broadcast %793 : f32 to vector<2x256xf32>
    %795 = arith.mulf %794, %98 : vector<2x256xf32>
    %796 = arith.addf %792, %795 : vector<2x256xf32>
    %c113 = arith.constant 113 : index
    %797 = memref.load %arg2[%c113] : memref<162xf32, #tpu.memory_space<smem>>
    %798 = vector.broadcast %797 : f32 to vector<2x256xf32>
    %799 = arith.mulf %798, %108 : vector<2x256xf32>
    %800 = arith.addf %796, %799 : vector<2x256xf32>
    %c122 = arith.constant 122 : index
    %801 = memref.load %arg2[%c122] : memref<162xf32, #tpu.memory_space<smem>>
    %802 = vector.broadcast %801 : f32 to vector<2x256xf32>
    %803 = arith.mulf %802, %110 : vector<2x256xf32>
    %804 = arith.addf %800, %803 : vector<2x256xf32>
    %c131 = arith.constant 131 : index
    %805 = memref.load %arg2[%c131] : memref<162xf32, #tpu.memory_space<smem>>
    %806 = vector.broadcast %805 : f32 to vector<2x256xf32>
    %807 = arith.mulf %806, %112 : vector<2x256xf32>
    %808 = arith.addf %804, %807 : vector<2x256xf32>
    %c140 = arith.constant 140 : index
    %809 = memref.load %arg2[%c140] : memref<162xf32, #tpu.memory_space<smem>>
    %810 = vector.broadcast %809 : f32 to vector<2x256xf32>
    %811 = arith.mulf %810, %114 : vector<2x256xf32>
    %812 = arith.addf %808, %811 : vector<2x256xf32>
    %c149 = arith.constant 149 : index
    %813 = memref.load %arg2[%c149] : memref<162xf32, #tpu.memory_space<smem>>
    %814 = vector.broadcast %813 : f32 to vector<2x256xf32>
    %815 = arith.mulf %814, %116 : vector<2x256xf32>
    %816 = arith.addf %812, %815 : vector<2x256xf32>
    %c158 = arith.constant 158 : index
    %817 = memref.load %arg2[%c158] : memref<162xf32, #tpu.memory_space<smem>>
    %818 = vector.broadcast %817 : f32 to vector<2x256xf32>
    %819 = arith.mulf %818, %118 : vector<2x256xf32>
    %820 = arith.addf %816, %819 : vector<2x256xf32>
    %c114 = arith.constant 114 : index
    %821 = memref.load %arg2[%c114] : memref<162xf32, #tpu.memory_space<smem>>
    %822 = vector.broadcast %821 : f32 to vector<2x256xf32>
    %823 = arith.mulf %822, %128 : vector<2x256xf32>
    %824 = arith.addf %820, %823 : vector<2x256xf32>
    %c123 = arith.constant 123 : index
    %825 = memref.load %arg2[%c123] : memref<162xf32, #tpu.memory_space<smem>>
    %826 = vector.broadcast %825 : f32 to vector<2x256xf32>
    %827 = arith.mulf %826, %130 : vector<2x256xf32>
    %828 = arith.addf %824, %827 : vector<2x256xf32>
    %c132 = arith.constant 132 : index
    %829 = memref.load %arg2[%c132] : memref<162xf32, #tpu.memory_space<smem>>
    %830 = vector.broadcast %829 : f32 to vector<2x256xf32>
    %831 = arith.mulf %830, %132 : vector<2x256xf32>
    %832 = arith.addf %828, %831 : vector<2x256xf32>
    %c141 = arith.constant 141 : index
    %833 = memref.load %arg2[%c141] : memref<162xf32, #tpu.memory_space<smem>>
    %834 = vector.broadcast %833 : f32 to vector<2x256xf32>
    %835 = arith.mulf %834, %134 : vector<2x256xf32>
    %836 = arith.addf %832, %835 : vector<2x256xf32>
    %c150 = arith.constant 150 : index
    %837 = memref.load %arg2[%c150] : memref<162xf32, #tpu.memory_space<smem>>
    %838 = vector.broadcast %837 : f32 to vector<2x256xf32>
    %839 = arith.mulf %838, %136 : vector<2x256xf32>
    %840 = arith.addf %836, %839 : vector<2x256xf32>
    %c159 = arith.constant 159 : index
    %841 = memref.load %arg2[%c159] : memref<162xf32, #tpu.memory_space<smem>>
    %842 = vector.broadcast %841 : f32 to vector<2x256xf32>
    %843 = arith.mulf %842, %138 : vector<2x256xf32>
    %844 = arith.addf %840, %843 : vector<2x256xf32>
    %c115 = arith.constant 115 : index
    %845 = memref.load %arg2[%c115] : memref<162xf32, #tpu.memory_space<smem>>
    %846 = vector.broadcast %845 : f32 to vector<2x256xf32>
    %847 = arith.mulf %846, %148 : vector<2x256xf32>
    %848 = arith.addf %844, %847 : vector<2x256xf32>
    %c124 = arith.constant 124 : index
    %849 = memref.load %arg2[%c124] : memref<162xf32, #tpu.memory_space<smem>>
    %850 = vector.broadcast %849 : f32 to vector<2x256xf32>
    %851 = arith.mulf %850, %150 : vector<2x256xf32>
    %852 = arith.addf %848, %851 : vector<2x256xf32>
    %c133 = arith.constant 133 : index
    %853 = memref.load %arg2[%c133] : memref<162xf32, #tpu.memory_space<smem>>
    %854 = vector.broadcast %853 : f32 to vector<2x256xf32>
    %855 = arith.mulf %854, %152 : vector<2x256xf32>
    %856 = arith.addf %852, %855 : vector<2x256xf32>
    %c142 = arith.constant 142 : index
    %857 = memref.load %arg2[%c142] : memref<162xf32, #tpu.memory_space<smem>>
    %858 = vector.broadcast %857 : f32 to vector<2x256xf32>
    %859 = arith.mulf %858, %154 : vector<2x256xf32>
    %860 = arith.addf %856, %859 : vector<2x256xf32>
    %c151 = arith.constant 151 : index
    %861 = memref.load %arg2[%c151] : memref<162xf32, #tpu.memory_space<smem>>
    %862 = vector.broadcast %861 : f32 to vector<2x256xf32>
    %863 = arith.mulf %862, %156 : vector<2x256xf32>
    %864 = arith.addf %860, %863 : vector<2x256xf32>
    %c160 = arith.constant 160 : index
    %865 = memref.load %arg2[%c160] : memref<162xf32, #tpu.memory_space<smem>>
    %866 = vector.broadcast %865 : f32 to vector<2x256xf32>
    %867 = arith.mulf %866, %158 : vector<2x256xf32>
    %868 = arith.addf %864, %867 : vector<2x256xf32>
    %c116 = arith.constant 116 : index
    %869 = memref.load %arg2[%c116] : memref<162xf32, #tpu.memory_space<smem>>
    %870 = vector.broadcast %869 : f32 to vector<2x256xf32>
    %871 = arith.mulf %870, %168 : vector<2x256xf32>
    %872 = arith.addf %868, %871 : vector<2x256xf32>
    %c125 = arith.constant 125 : index
    %873 = memref.load %arg2[%c125] : memref<162xf32, #tpu.memory_space<smem>>
    %874 = vector.broadcast %873 : f32 to vector<2x256xf32>
    %875 = arith.mulf %874, %170 : vector<2x256xf32>
    %876 = arith.addf %872, %875 : vector<2x256xf32>
    %c134 = arith.constant 134 : index
    %877 = memref.load %arg2[%c134] : memref<162xf32, #tpu.memory_space<smem>>
    %878 = vector.broadcast %877 : f32 to vector<2x256xf32>
    %879 = arith.mulf %878, %172 : vector<2x256xf32>
    %880 = arith.addf %876, %879 : vector<2x256xf32>
    %c143 = arith.constant 143 : index
    %881 = memref.load %arg2[%c143] : memref<162xf32, #tpu.memory_space<smem>>
    %882 = vector.broadcast %881 : f32 to vector<2x256xf32>
    %883 = arith.mulf %882, %174 : vector<2x256xf32>
    %884 = arith.addf %880, %883 : vector<2x256xf32>
    %c152 = arith.constant 152 : index
    %885 = memref.load %arg2[%c152] : memref<162xf32, #tpu.memory_space<smem>>
    %886 = vector.broadcast %885 : f32 to vector<2x256xf32>
    %887 = arith.mulf %886, %176 : vector<2x256xf32>
    %888 = arith.addf %884, %887 : vector<2x256xf32>
    %c161 = arith.constant 161 : index
    %889 = memref.load %arg2[%c161] : memref<162xf32, #tpu.memory_space<smem>>
    %890 = vector.broadcast %889 : f32 to vector<2x256xf32>
    %891 = arith.mulf %890, %178 : vector<2x256xf32>
    %892 = arith.addf %888, %891 : vector<2x256xf32>
    %893 = vector.shape_cast %892 : vector<2x256xf32> to vector<1x2x256xf32>
    %cst_52 = arith.constant dense<0.000000e+00> : vector<1xf32>
    %894 = vector.multi_reduction <add>, %893, %cst_52 [1, 2] : vector<1x2x256xf32> to vector<1xf32>
    %895 = vector.shape_cast %894 : vector<1xf32> to vector<1x1x1xf32>
    %896 = vector.extract %895[0, 0, 0] : f32 from vector<1x1x1xf32>
    %897 = arith.mulf %892, %892 : vector<2x256xf32>
    %898 = vector.shape_cast %897 : vector<2x256xf32> to vector<1x2x256xf32>
    %cst_53 = arith.constant dense<0.000000e+00> : vector<1xf32>
    %899 = vector.multi_reduction <add>, %898, %cst_53 [1, 2] : vector<1x2x256xf32> to vector<1xf32>
    %900 = vector.shape_cast %899 : vector<1xf32> to vector<1x1x1xf32>
    %901 = vector.extract %900[0, 0, 0] : f32 from vector<1x1x1xf32>
    %cst_54 = arith.constant 0.001953125 : f32
    %902 = arith.mulf %896, %cst_54 : f32
    %cst_55 = arith.constant 0.001953125 : f32
    %903 = arith.mulf %901, %cst_55 : f32
    %904 = arith.mulf %902, %902 : f32
    %905 = arith.subf %903, %904 : f32
    %cst_56 = arith.constant 0.000000e+00 : f32
    %906 = arith.maximumf %905, %cst_56 : f32
    %c2_57 = arith.constant 2 : index
    %907 = memref.load %arg4[%c2_57] : memref<3xf32, #tpu.memory_space<smem>>
    %cst_58 = arith.constant 9.99999974E-6 : f32
    %908 = arith.addf %906, %cst_58 : f32
    %909 = math.rsqrt %908 : f32
    %910 = arith.mulf %907, %909 : f32
    %c2_59 = arith.constant 2 : index
    %911 = memref.load %arg5[%c2_59] : memref<3xf32, #tpu.memory_space<smem>>
    %912 = arith.mulf %902, %910 : f32
    %913 = arith.subf %911, %912 : f32
    %914 = vector.broadcast %910 : f32 to vector<2x256xf32>
    %915 = arith.mulf %892, %914 : vector<2x256xf32>
    %916 = vector.broadcast %913 : f32 to vector<2x256xf32>
    %917 = arith.addf %915, %916 : vector<2x256xf32>
    %cst_60 = arith.constant 0.000000e+00 : f32
    %918 = vector.broadcast %cst_60 : f32 to vector<2x256xf32>
    %919 = arith.maximumf %917, %918 : vector<2x256xf32>
    %cst_61 = arith.constant 0.000000e+00 : f32
    %920 = vector.broadcast %cst_61 : f32 to vector<2x256xf32>
    %c0_62 = arith.constant 0 : index
    %921 = memref.load %arg7[%c0_62] : memref<1xf32, #tpu.memory_space<smem>>
    %922 = vector.broadcast %921 : f32 to vector<2x256xf32>
    %923 = arith.addf %920, %922 : vector<2x256xf32>
    %c0_63 = arith.constant 0 : index
    %924 = memref.load %arg6[%c0_63] : memref<6xf32, #tpu.memory_space<smem>>
    %925 = vector.broadcast %924 : f32 to vector<2x256xf32>
    %926 = arith.mulf %925, %425 : vector<2x256xf32>
    %927 = arith.addf %923, %926 : vector<2x256xf32>
    %c1_64 = arith.constant 1 : index
    %928 = memref.load %arg6[%c1_64] : memref<6xf32, #tpu.memory_space<smem>>
    %929 = vector.broadcast %928 : f32 to vector<2x256xf32>
    %930 = arith.mulf %929, %672 : vector<2x256xf32>
    %931 = arith.addf %927, %930 : vector<2x256xf32>
    %c2_65 = arith.constant 2 : index
    %932 = memref.load %arg6[%c2_65] : memref<6xf32, #tpu.memory_space<smem>>
    %933 = vector.broadcast %932 : f32 to vector<2x256xf32>
    %934 = arith.mulf %933, %919 : vector<2x256xf32>
    %935 = arith.addf %931, %934 : vector<2x256xf32>
    %c3_66 = arith.constant 3 : index
    %936 = memref.load %arg6[%c3_66] : memref<6xf32, #tpu.memory_space<smem>>
    %937 = vector.extract_strided_slice %0 {offsets = [0, 6, 0], sizes = [2, 1, 256], strides = [1, 1, 1]} : vector<2x9x256xf32> to vector<2x1x256xf32>
    %938 = vector.shape_cast %937 : vector<2x1x256xf32> to vector<2x256xf32>
    %939 = vector.broadcast %936 : f32 to vector<2x256xf32>
    %940 = arith.mulf %939, %938 : vector<2x256xf32>
    %941 = arith.addf %935, %940 : vector<2x256xf32>
    %c4_67 = arith.constant 4 : index
    %942 = memref.load %arg6[%c4_67] : memref<6xf32, #tpu.memory_space<smem>>
    %943 = vector.extract_strided_slice %0 {offsets = [0, 7, 0], sizes = [2, 1, 256], strides = [1, 1, 1]} : vector<2x9x256xf32> to vector<2x1x256xf32>
    %944 = vector.shape_cast %943 : vector<2x1x256xf32> to vector<2x256xf32>
    %945 = vector.broadcast %942 : f32 to vector<2x256xf32>
    %946 = arith.mulf %945, %944 : vector<2x256xf32>
    %947 = arith.addf %941, %946 : vector<2x256xf32>
    %c5_68 = arith.constant 5 : index
    %948 = memref.load %arg6[%c5_68] : memref<6xf32, #tpu.memory_space<smem>>
    %949 = vector.extract_strided_slice %0 {offsets = [0, 8, 0], sizes = [2, 1, 256], strides = [1, 1, 1]} : vector<2x9x256xf32> to vector<2x1x256xf32>
    %950 = vector.shape_cast %949 : vector<2x1x256xf32> to vector<2x256xf32>
    %951 = vector.broadcast %948 : f32 to vector<2x256xf32>
    %952 = arith.mulf %951, %950 : vector<2x256xf32>
    %953 = arith.addf %947, %952 : vector<2x256xf32>
    %cst_69 = arith.constant 0.000000e+00 : f32
    %954 = vector.broadcast %cst_69 : f32 to vector<2x256xf32>
    %955 = arith.subf %954, %953 : vector<2x256xf32>
    %956 = math.exp %955 : vector<2x256xf32>
    %cst_70 = arith.constant 1.000000e+00 : f32
    %957 = vector.broadcast %cst_70 : f32 to vector<2x256xf32>
    %958 = arith.addf %957, %956 : vector<2x256xf32>
    %959 = tpu.reciprocal %958 {approx = true} : vector<2x256xf32> -> vector<2x256xf32>
    %c0_71 = arith.constant 0 : index
    %c0_72 = arith.constant 0 : index
    %960 = vector.load %arg8[%c0_71, %c0_72] : memref<2x256xf32, #tpu.memory_space<vmem>>, vector<2x256xf32>
    tpu.vector_store %arg8[%c0_71, %c0_72], %959 {strides = array<i32>} : memref<2x256xf32, #tpu.memory_space<vmem>>, vector<2x256xf32>,
    return
  }
}

</mosaic_0001>

<llo_original>
// kernel: flowvm_net_forward.1
$region0: #{flowvm_net_forward.1}
  #allocation0 [shape = 'u32[]', space=smem, size = 0x4, offset = 0x4, fixed_abs, tag = 'smem constant byte address 0x4 - core index']
  #allocation1 [shape = 'u32[144,128]{1,0:T(1,128)}', space=vmem, size = 0x12000, scoped, tag = 'internal scratch']
  #allocation2 [shape = 'f32[1]{0:T(128)S(6)}', space=smem, size = 0x200, scoped, tag = 'scoped memory for flowvm_net_forward.1']
  %s0 = inlined_call_operand.vmem [shape: f32[2,9,256], index: 0, kind: input, shape index: {}]
  %s1 = inlined_call_operand.vmem [shape: f32[9,256], index: 1, kind: input, shape index: {}]
  %s2 = inlined_call_operand.vmem [shape: f32[162], index: 2, kind: input, shape index: {}]
  %s3 = inlined_call_operand.vmem [shape: f32[3], index: 3, kind: input, shape index: {}]
  %s4 = inlined_call_operand.vmem [shape: f32[3], index: 4, kind: input, shape index: {}]
  %s5 = inlined_call_operand.vmem [shape: f32[3], index: 5, kind: input, shape index: {}]
  %s6 = inlined_call_operand.vmem [shape: f32[6], index: 6, kind: input, shape index: {}]
  %s7 = inlined_call_operand.<no memory space> [shape: f32[1], index: 7, kind: input, shape index: {}]
  %s8 = inlined_call_operand.vmem [shape: f32[2,256], index: 8, kind: output, shape index: {}]
  %s9 = sld [smem:[#allocation0]]
  $region62: #{flowvm_net_forward.1} parent=0
    _
  %s11 = ssub.s32 1, %s9
  %s12 = scalar_select 0, %s11, %s9
  %13 = sst [smem:[#allocation2]] %s7
  $region1: #{flowvm_net_forward.1} parent=0
    #allocation3 [shape = 'u8[1024]{0}', space=smem, size = 0x400, scoped, tag = 'input window, operand 2, single buffered']
    #allocation4 [shape = 's32[1]{0}', space=sflag, size = 0x4, scoped, tag = 'scoped memory for flowvm_net_forward.1']
    #allocation5 [shape = 'u8[512]{0}', space=smem, size = 0x200, scoped, tag = 'input window, operand 3, single buffered']
    #allocation6 [shape = 's32[1]{0}', space=sflag, size = 0x4, scoped, tag = 'scoped memory for flowvm_net_forward.1']
    #allocation7 [shape = 'u8[512]{0}', space=smem, size = 0x200, scoped, tag = 'input window, operand 4, single buffered']
    #allocation8 [shape = 'u8[512]{0}', space=smem, size = 0x200, scoped, tag = 'input window, operand 5, single buffered']
    #allocation9 [shape = 's32[1]{0}', space=sflag, size = 0x4, scoped, tag = 'scoped memory for flowvm_net_forward.1']
    #allocation10 [shape = 'u8[512]{0}', space=smem, size = 0x200, scoped, tag = 'input window, operand 6, single buffered']
    %14 = vsyncpa [#allocation4], 0
    %15 = vsyncpa [#allocation6], 0
    %16 = vsyncpa [#allocation9], 0
    // Predicated region
    $region2: #{flowvm_net_forward.1} parent=1 // pred_check
      _
    $region3: #{flowvm_net_forward.1} parent=1 // pred_check_branch
      %18 = sbr.rel (0) target = $region5
    $region4: #{flowvm_net_forward.1} parent=1 // pred_region
      _
    $region5: #{flowvm_net_forward.1} parent=1 // pred_fallthru
      _
    // Predicated region
    $region6: #{flowvm_net_forward.1} parent=1 // pred_check
      _
    $region7: #{flowvm_net_forward.1} parent=1 // pred_check_branch
      %20 = sbr.rel (0) target = $region9
    $region8: #{flowvm_net_forward.1} parent=1 // pred_region
      _
    $region9: #{flowvm_net_forward.1} parent=1 // pred_fallthru
      _
    // Predicated region
    $region10: #{flowvm_net_forward.1} parent=1 // pred_check
      _
    $region11: #{flowvm_net_forward.1} parent=1 // pred_check_branch
      %22 = sbr.rel (0) target = $region13
    $region12: #{flowvm_net_forward.1} parent=1 // pred_region
      %s24 = ssub.s32 32, 32
      %25 = vsyncadd [#allocation4], %s24
      %s27 = sshll.u32 %s2, 4
      %s28 = int_to_ptr.vmem [resolvable:$true] %s27
      %30 = dma.vmem_to_smem %s28, 32, [#allocation3], [#allocation4]
    $region13: #{flowvm_net_forward.1} parent=1 // pred_fallthru
      _
    // Predicated region
    $region14: #{flowvm_net_forward.1} parent=1 // pred_check
      _
    $region15: #{flowvm_net_forward.1} parent=1 // pred_check_branch
      %32 = sbr.rel (0) target = $region17
    $region16: #{flowvm_net_forward.1} parent=1 // pred_region
      %s34 = ssub.s32 16, 16
      %35 = vsyncadd [#allocation6], %s34
      %s37 = sshll.u32 %s3, 4
      %s38 = int_to_ptr.vmem [resolvable:$true] %s37
      %40 = dma.vmem_to_smem %s38, 16, [#allocation5], [#allocation6]
    $region17: #{flowvm_net_forward.1} parent=1 // pred_fallthru
      _
    // Predicated region
    $region18: #{flowvm_net_forward.1} parent=1 // pred_check
      _
    $region19: #{flowvm_net_forward.1} parent=1 // pred_check_branch
      %42 = sbr.rel (0) target = $region21
    $region20: #{flowvm_net_forward.1} parent=1 // pred_region
      %s44 = ssub.s32 16, 16
      %45 = vsyncadd [#allocation6], %s44
      %s47 = sshll.u32 %s4, 4
      %s48 = int_to_ptr.vmem [resolvable:$true] %s47
      %50 = dma.vmem_to_smem %s48, 16, [#allocation7], [#allocation6]
    $region21: #{flowvm_net_forward.1} parent=1 // pred_fallthru
      _
    // Predicated region
    $region22: #{flowvm_net_forward.1} parent=1 // pred_check
      _
    $region23: #{flowvm_net_forward.1} parent=1 // pred_check_branch
      %52 = sbr.rel (0) target = $region25
    $region24: #{flowvm_net_forward.1} parent=1 // pred_region
      %s54 = ssub.s32 16, 16
      %55 = vsyncadd [#allocation9], %s54
      %s57 = sshll.u32 %s5, 4
      %s58 = int_to_ptr.vmem [resolvable:$true] %s57
      %60 = dma.vmem_to_smem %s58, 16, [#allocation8], [#allocation9]
    $region25: #{flowvm_net_forward.1} parent=1 // pred_fallthru
      _
    // Predicated region
    $region26: #{flowvm_net_forward.1} parent=1 // pred_check
      _
    $region27: #{flowvm_net_forward.1} parent=1 // pred_check_branch
      %62 = sbr.rel (0) target = $region29
    $region28: #{flowvm_net_forward.1} parent=1 // pred_region
      %s64 = ssub.s32 16, 16
      %65 = vsyncadd [#allocation9], %s64
      %s67 = sshll.u32 %s6, 4
      %s68 = int_to_ptr.vmem [resolvable:$true] %s67
      %70 = dma.vmem_to_smem %s68, 16, [#allocation10], [#allocation9]
    $region29: #{flowvm_net_forward.1} parent=1 // pred_fallthru
      _
    // Predicated region
    $region30: #{flowvm_net_forward.1} parent=1 // pred_check
      _
    $region31: #{flowvm_net_forward.1} parent=1 // pred_check_branch
      %72 = sbr.rel (0) target = $region33
    $region32: #{flowvm_net_forward.1} parent=1 // pred_region
      _
    $region33: #{flowvm_net_forward.1} parent=1 // pred_fallthru
      _
    // Predicated region
    $region34: #{flowvm_net_forward.1} parent=1 // pred_check
      _
    $region35: #{flowvm_net_forward.1} parent=1 // pred_check_branch
      %74 = sbr.rel (0) target = $region37
    $region36: #{flowvm_net_forward.1} parent=1 // pred_region
      %75 = dma.done [#allocation4], 32
    $region37: #{flowvm_net_forward.1} parent=1 // pred_fallthru
      _
    // Predicated region
    $region38: #{flowvm_net_forward.1} parent=1 // pred_check
      _
    $region39: #{flowvm_net_forward.1} parent=1 // pred_check_branch
      %77 = sbr.rel (0) target = $region41
    $region40: #{flowvm_net_forward.1} parent=1 // pred_region
      %78 = dma.done [#allocation6], 16
    $region41: #{flowvm_net_forward.1} parent=1 // pred_fallthru
      _
    // Predicated region
    $region42: #{flowvm_net_forward.1} parent=1 // pred_check
      _
    $region43: #{flowvm_net_forward.1} parent=1 // pred_check_branch
      %80 = sbr.rel (0) target = $region45
    $region44: #{flowvm_net_forward.1} parent=1 // pred_region
      %81 = dma.done [#allocation6], 16
    $region45: #{flowvm_net_forward.1} parent=1 // pred_fallthru
      _
    // Predicated region
    $region46: #{flowvm_net_forward.1} parent=1 // pred_check
      _
    $region47: #{flowvm_net_forward.1} parent=1 // pred_check_branch
      %83 = sbr.rel (0) target = $region49
    $region48: #{flowvm_net_forward.1} parent=1 // pred_region
      %84 = dma.done [#allocation9], 16
    $region49: #{flowvm_net_forward.1} parent=1 // pred_fallthru
      _
    // Predicated region
    $region50: #{flowvm_net_forward.1} parent=1 // pred_check
      _
    $region51: #{flowvm_net_forward.1} parent=1 // pred_check_branch
      %86 = sbr.rel (0) target = $region53
    $region52: #{flowvm_net_forward.1} parent=1 // pred_region
      %87 = dma.done [#allocation9], 16
    $region53: #{flowvm_net_forward.1} parent=1 // pred_fallthru
      _
    %88 = sfence
    %v89 = vld [vmem:[%s0] sm:$0xff]
    %v90 = vld [vmem:[%s0 + $0x8] sm:$0xff]
    %v91 = vld [vmem:[%s0 + $0x10] sm:$0x1]
    %v92 = vld [vmem:[%s0 + $0x18] sm:$0x1]
    %v93 = vld [vmem:[%s0 + $0x20] sm:$0xff]
    %v94 = vld [vmem:[%s0 + $0x28] sm:$0xff]
    %v95 = vld [vmem:[%s0 + $0x30] sm:$0x1]
    %v96 = vld [vmem:[%s0 + $0x38] sm:$0x1]
    %101 = vrot.lane.b32.xlu0 %v89, 17
    %v102 = vpop.permute.xlu0 %101
    %103 = vrot.lane.b32.xlu0 %v90, 17
    %v104 = vpop.permute.xlu0 %103
    %105 = vrot.lane.b32.xlu0 %v93, 17
    %v106 = vpop.permute.xlu0 %105
    %107 = vrot.lane.b32.xlu0 %v94, 17
    %v108 = vpop.permute.xlu0 %107
    %vm109 = vcmask 138240
    %v110 = vsel %vm109, %v102, %v104
    %v111 = vsel %vm109, %v106, %v108
    %v116 = vsel %vm109, 0.0, %v102
    %v117 = vsel %vm109, 0.0, %v106
    %v118 = vld [vmem:[%s1] ss:$8 sm:$0x3]
    %v120 = vlaneseq
    %v121 = vshrl.u32 %v120, 7
    %v122 = vsub.s32 0, %v121
    %v123 = vrot.slane %v118, %v122
    %v124 = vlaneseq
    %v125 = vshrl.u32 %v124, 7
    %v126 = vsub.s32 1, %v125
    %v127 = vrot.slane %v118, %v126
    %v130 = vmul.f32 %v116, %v123
    %v131 = vmul.f32 %v110, %v127
    %v132 = vmul.f32 %v117, %v123
    %v133 = vmul.f32 %v111, %v127
    %134 = vrot.lane.b32.xlu0 %v89, 16
    %v135 = vpop.permute.xlu0 %134
    %136 = vrot.lane.b32.xlu0 %v90, 16
    %v137 = vpop.permute.xlu0 %136
    %138 = vrot.lane.b32.xlu0 %v93, 16
    %v139 = vpop.permute.xlu0 %138
    %140 = vrot.lane.b32.xlu0 %v94, 16
    %v141 = vpop.permute.xlu0 %140
    %vm142 = vcmask 130048
    %v143 = vsel %vm142, %v135, %v137
    %v144 = vsel %vm142, %v139, %v141
    %v149 = vsel %vm142, 0.0, %v135
    %v150 = vsel %vm142, 0.0, %v139
    %s151 = scalar_lea.vmem %s1, 1
    %v152 = vld [vmem:[%s151] ss:$8 sm:$0x3]
    %v154 = vlaneseq
    %v155 = vshrl.u32 %v154, 7
    %v156 = vsub.s32 0, %v155
    %v157 = vrot.slane %v152, %v156
    %v158 = vlaneseq
    %v159 = vshrl.u32 %v158, 7
    %v160 = vsub.s32 1, %v159
    %v161 = vrot.slane %v152, %v160
    %v164 = vmul.f32 %v149, %v157
    %v165 = vmul.f32 %v143, %v161
    %v166 = vmul.f32 %v150, %v157
    %v167 = vmul.f32 %v144, %v161
    %168 = vrot.lane.b32.xlu0 %v89, 15
    %v169 = vpop.permute.xlu0 %168
    %170 = vrot.lane.b32.xlu0 %v90, 15
    %v171 = vpop.permute.xlu0 %170
    %172 = vrot.lane.b32.xlu0 %v93, 15
    %v173 = vpop.permute.xlu0 %172
    %174 = vrot.lane.b32.xlu0 %v94, 15
    %v175 = vpop.permute.xlu0 %174
    %vm176 = vcmask 121856
    %v177 = vsel %vm176, %v169, %v171
    %v178 = vsel %vm176, %v173, %v175
    %v183 = vsel %vm176, 0.0, %v169
    %v184 = vsel %vm176, 0.0, %v173
    %s185 = scalar_lea.vmem %s1, 2
    %v186 = vld [vmem:[%s185] ss:$8 sm:$0x3]
    %v188 = vlaneseq
    %v189 = vshrl.u32 %v188, 7
    %v190 = vsub.s32 0, %v189
    %v191 = vrot.slane %v186, %v190
    %v192 = vlaneseq
    %v193 = vshrl.u32 %v192, 7
    %v194 = vsub.s32 1, %v193
    %v195 = vrot.slane %v186, %v194
    %v198 = vmul.f32 %v183, %v191
    %v199 = vmul.f32 %v177, %v195
    %v200 = vmul.f32 %v184, %v191
    %v201 = vmul.f32 %v178, %v195
    %202 = vrot.lane.b32.xlu0 %v89, 1
    %v203 = vpop.permute.xlu0 %202
    %204 = vrot.lane.b32.xlu0 %v90, 1
    %v205 = vpop.permute.xlu0 %204
    %206 = vrot.lane.b32.xlu0 %v93, 1
    %v207 = vpop.permute.xlu0 %206
    %208 = vrot.lane.b32.xlu0 %v94, 1
    %v209 = vpop.permute.xlu0 %208
    %vm210 = vcmask 7168
    %v211 = vsel %vm210, %v203, %v205
    %v212 = vsel %vm210, %v207, %v209
    %v217 = vsel %vm210, 0.0, %v203
    %v218 = vsel %vm210, 0.0, %v207
    %s219 = scalar_lea.vmem %s1, 3
    %v220 = vld [vmem:[%s219] ss:$8 sm:$0x3]
    %v222 = vlaneseq
    %v223 = vshrl.u32 %v222, 7
    %v224 = vsub.s32 0, %v223
    %v225 = vrot.slane %v220, %v224
    %v226 = vlaneseq
    %v227 = vshrl.u32 %v226, 7
    %v228 = vsub.s32 1, %v227
    %v229 = vrot.slane %v220, %v228
    %v232 = vmul.f32 %v217, %v225
    %v233 = vmul.f32 %v211, %v229
    %v234 = vmul.f32 %v218, %v225
    %v235 = vmul.f32 %v212, %v229
    %s236 = scalar_lea.vmem %s1, 4
    %v237 = vld [vmem:[%s236] ss:$8 sm:$0x3]
    %v239 = vlaneseq
    %v240 = vshrl.u32 %v239, 7
    %v241 = vsub.s32 0, %v240
    %v242 = vrot.slane %v237, %v241
    %v243 = vlaneseq
    %v244 = vshrl.u32 %v243, 7
    %v245 = vsub.s32 1, %v244
    %v246 = vrot.slane %v237, %v245
    %v249 = vmul.f32 %v89, %v242
    %v250 = vmul.f32 %v90, %v246
    %v251 = vmul.f32 %v93, %v242
    %v252 = vmul.f32 %v94, %v246
    %253 = vrot.lane.b32.xlu0 %v89, 127
    %v254 = vpop.permute.xlu0 %253
    %255 = vrot.lane.b32.xlu0 %v90, 127
    %v256 = vpop.permute.xlu0 %255
    %257 = vrot.lane.b32.xlu0 %v93, 127
    %v258 = vpop.permute.xlu0 %257
    %259 = vrot.lane.b32.xlu0 %v94, 127
    %v260 = vpop.permute.xlu0 %259
    %vm261 = vcmask 1039360
    %v262 = vsel %vm261, %v254, %v256
    %v263 = vsel %vm261, %v258, %v260
    %v268 = vsel %vm261, %v256, 0.0
    %v269 = vsel %vm261, %v260, 0.0
    %s270 = scalar_lea.vmem %s1, 5
    %v271 = vld [vmem:[%s270] ss:$8 sm:$0x3]
    %v273 = vlaneseq
    %v274 = vshrl.u32 %v273, 7
    %v275 = vsub.s32 0, %v274
    %v276 = vrot.slane %v271, %v275
    %v277 = vlaneseq
    %v278 = vshrl.u32 %v277, 7
    %v279 = vsub.s32 1, %v278
    %v280 = vrot.slane %v271, %v279
    %v283 = vmul.f32 %v262, %v276
    %v284 = vmul.f32 %v268, %v280
    %v285 = vmul.f32 %v263, %v276
    %v286 = vmul.f32 %v269, %v280
    %287 = vrot.lane.b32.xlu0 %v89, 113
    %v288 = vpop.permute.xlu0 %287
    %289 = vrot.lane.b32.xlu0 %v90, 113
    %v290 = vpop.permute.xlu0 %289
    %291 = vrot.lane.b32.xlu0 %v93, 113
    %v292 = vpop.permute.xlu0 %291
    %293 = vrot.lane.b32.xlu0 %v94, 113
    %v294 = vpop.permute.xlu0 %293
    %vm295 = vcmask 924672
    %v296 = vsel %vm295, %v288, %v290
    %v297 = vsel %vm295, %v292, %v294
    %v302 = vsel %vm295, %v290, 0.0
    %v303 = vsel %vm295, %v294, 0.0
    %s304 = scalar_lea.vmem %s1, 6
    %v305 = vld [vmem:[%s304] ss:$8 sm:$0x3]
    %v307 = vlaneseq
    %v308 = vshrl.u32 %v307, 7
    %v309 = vsub.s32 0, %v308
    %v310 = vrot.slane %v305, %v309
    %v311 = vlaneseq
    %v312 = vshrl.u32 %v311, 7
    %v313 = vsub.s32 1, %v312
    %v314 = vrot.slane %v305, %v313
    %v317 = vmul.f32 %v296, %v310
    %v318 = vmul.f32 %v302, %v314
    %v319 = vmul.f32 %v297, %v310
    %v320 = vmul.f32 %v303, %v314
    %321 = vrot.lane.b32.xlu0 %v89, 112
    %v322 = vpop.permute.xlu0 %321
    %323 = vrot.lane.b32.xlu0 %v90, 112
    %v324 = vpop.permute.xlu0 %323
    %325 = vrot.lane.b32.xlu0 %v93, 112
    %v326 = vpop.permute.xlu0 %325
    %327 = vrot.lane.b32.xlu0 %v94, 112
    %v328 = vpop.permute.xlu0 %327
    %vm329 = vcmask 916480
    %v330 = vsel %vm329, %v322, %v324
    %v331 = vsel %vm329, %v326, %v328
    %v336 = vsel %vm329, %v324, 0.0
    %v337 = vsel %vm329, %v328, 0.0
    %s338 = scalar_lea.vmem %s1, 7
    %v339 = vld [vmem:[%s338] ss:$8 sm:$0x3]
    %v341 = vlaneseq
    %v342 = vshrl.u32 %v341, 7
    %v343 = vsub.s32 0, %v342
    %v344 = vrot.slane %v339, %v343
    %v345 = vlaneseq
    %v346 = vshrl.u32 %v345, 7
    %v347 = vsub.s32 1, %v346
    %v348 = vrot.slane %v339, %v347
    %v351 = vmul.f32 %v330, %v344
    %v352 = vmul.f32 %v336, %v348
    %v353 = vmul.f32 %v331, %v344
    %v354 = vmul.f32 %v337, %v348
    %355 = vrot.lane.b32.xlu0 %v89, 111
    %v356 = vpop.permute.xlu0 %355
    %357 = vrot.lane.b32.xlu0 %v90, 111
    %v358 = vpop.permute.xlu0 %357
    %359 = vrot.lane.b32.xlu0 %v93, 111
    %v360 = vpop.permute.xlu0 %359
    %361 = vrot.lane.b32.xlu0 %v94, 111
    %v362 = vpop.permute.xlu0 %361
    %vm363 = vcmask 908288
    %v364 = vsel %vm363, %v356, %v358
    %v365 = vsel %vm363, %v360, %v362
    %v370 = vsel %vm363, %v358, 0.0
    %v371 = vsel %vm363, %v362, 0.0
    %s372 = scalar_lea.vmem %s1, 16
    %v373 = vld [vmem:[%s372] ss:$8 sm:$0x3]
    %v375 = vlaneseq
    %v376 = vshrl.u32 %v375, 7
    %v377 = vsub.s32 0, %v376
    %v378 = vrot.slane %v373, %v377
    %v379 = vlaneseq
    %v380 = vshrl.u32 %v379, 7
    %v381 = vsub.s32 1, %v380
    %v382 = vrot.slane %v373, %v381
    %v385 = vmul.f32 %v364, %v378
    %v386 = vmul.f32 %v370, %v382
    %v387 = vmul.f32 %v365, %v378
    %v388 = vmul.f32 %v371, %v382
    %s389 = sld [smem:[#allocation5]]
    %v390 = vstv %s389
    %v391 = vadd.f32 %v390, 0.0
    %s392 = sld [smem:[#allocation3]]
    %v393 = vstv %s392
    %v394 = vmul.f32 %v393, %v130
    %v395 = vmul.f32 %v393, %v131
    %v396 = vmul.f32 %v393, %v132
    %v397 = vmul.f32 %v393, %v133
    %v398 = vadd.f32 %v391, %v394
    %v399 = vadd.f32 %v391, %v395
    %v400 = vadd.f32 %v391, %v396
    %v401 = vadd.f32 %v391, %v397
    %s402 = sld [smem:[#allocation3 + $0x9]]
    %v403 = vstv %s402
    %v404 = vmul.f32 %v403, %v130
    %v405 = vmul.f32 %v403, %v131
    %v406 = vmul.f32 %v403, %v132
    %v407 = vmul.f32 %v403, %v133
    %v412 = vrot.slane %v404, 1
    %v413 = vrot.slane %v405, 1
    %v414 = vrot.slane %v406, 1
    %v415 = vrot.slane %v407, 1
    %v420 = vadd.f32 %v398, %v412
    %v421 = vadd.f32 %v399, %v413
    %v422 = vadd.f32 %v400, %v414
    %v423 = vadd.f32 %v401, %v415
    %s424 = sld [smem:[#allocation3 + $0x12]]
    %v425 = vstv %s424
    %v426 = vmul.f32 %v425, %v130
    %v427 = vmul.f32 %v425, %v131
    %v428 = vmul.f32 %v425, %v132
    %v429 = vmul.f32 %v425, %v133
    %v434 = vrot.slane %v426, 2
    %v435 = vrot.slane %v427, 2
    %v436 = vrot.slane %v428, 2
    %v437 = vrot.slane %v429, 2
    %v442 = vadd.f32 %v420, %v434
    %v443 = vadd.f32 %v421, %v435
    %v444 = vadd.f32 %v422, %v436
    %v445 = vadd.f32 %v423, %v437
    %s446 = sld [smem:[#allocation3 + $0x1b]]
    %v447 = vstv %s446
    %v448 = vmul.f32 %v447, %v130
    %v449 = vmul.f32 %v447, %v131
    %v450 = vmul.f32 %v447, %v132
    %v451 = vmul.f32 %v447, %v133
    %v456 = vrot.slane %v448, 3
    %v457 = vrot.slane %v449, 3
    %v458 = vrot.slane %v450, 3
    %v459 = vrot.slane %v451, 3
    %v464 = vadd.f32 %v442, %v456
    %v465 = vadd.f32 %v443, %v457
    %v466 = vadd.f32 %v444, %v458
    %v467 = vadd.f32 %v445, %v459
    %s468 = sld [smem:[#allocation3 + $0x24]]
    %v469 = vstv %s468
    %v470 = vmul.f32 %v469, %v130
    %v471 = vmul.f32 %v469, %v131
    %v472 = vmul.f32 %v469, %v132
    %v473 = vmul.f32 %v469, %v133
    %v478 = vrot.slane %v470, 4
    %v479 = vrot.slane %v471, 4
    %v480 = vrot.slane %v472, 4
    %v481 = vrot.slane %v473, 4
    %v486 = vadd.f32 %v464, %v478
    %v487 = vadd.f32 %v465, %v479
    %v488 = vadd.f32 %v466, %v480
    %v489 = vadd.f32 %v467, %v481
    %s490 = sld [smem:[#allocation3 + $0x2d]]
    %v491 = vstv %s490
    %v492 = vmul.f32 %v491, %v130
    %v493 = vmul.f32 %v491, %v131
    %v494 = vmul.f32 %v491, %v132
    %v495 = vmul.f32 %v491, %v133
    %v500 = vrot.slane %v492, 5
    %v501 = vrot.slane %v493, 5
    %v502 = vrot.slane %v494, 5
    %v503 = vrot.slane %v495, 5
    %v508 = vadd.f32 %v486, %v500
    %v509 = vadd.f32 %v487, %v501
    %v510 = vadd.f32 %v488, %v502
    %v511 = vadd.f32 %v489, %v503
    %s512 = sld [smem:[#allocation3 + $0x1]]
    %v513 = vstv %s512
    %v514 = vmul.f32 %v513, %v164
    %v515 = vmul.f32 %v513, %v165
    %v516 = vmul.f32 %v513, %v166
    %v517 = vmul.f32 %v513, %v167
    %v518 = vadd.f32 %v508, %v514
    %v519 = vadd.f32 %v509, %v515
    %v520 = vadd.f32 %v510, %v516
    %v521 = vadd.f32 %v511, %v517
    %s522 = sld [smem:[#allocation3 + $0xa]]
    %v523 = vstv %s522
    %v524 = vmul.f32 %v523, %v164
    %v525 = vmul.f32 %v523, %v165
    %v526 = vmul.f32 %v523, %v166
    %v527 = vmul.f32 %v523, %v167
    %v532 = vrot.slane %v524, 1
    %v533 = vrot.slane %v525, 1
    %v534 = vrot.slane %v526, 1
    %v535 = vrot.slane %v527, 1
    %v540 = vadd.f32 %v518, %v532
    %v541 = vadd.f32 %v519, %v533
    %v542 = vadd.f32 %v520, %v534
    %v543 = vadd.f32 %v521, %v535
    %s544 = sld [smem:[#allocation3 + $0x13]]
    %v545 = vstv %s544
    %v546 = vmul.f32 %v545, %v164
    %v547 = vmul.f32 %v545, %v165
    %v548 = vmul.f32 %v545, %v166
    %v549 = vmul.f32 %v545, %v167
    %v554 = vrot.slane %v546, 2
    %v555 = vrot.slane %v547, 2
    %v556 = vrot.slane %v548, 2
    %v557 = vrot.slane %v549, 2
    %v562 = vadd.f32 %v540, %v554
    %v563 = vadd.f32 %v541, %v555
    %v564 = vadd.f32 %v542, %v556
    %v565 = vadd.f32 %v543, %v557
    %s566 = sld [smem:[#allocation3 + $0x1c]]
    %v567 = vstv %s566
    %v568 = vmul.f32 %v567, %v164
    %v569 = vmul.f32 %v567, %v165
    %v570 = vmul.f32 %v567, %v166
    %v571 = vmul.f32 %v567, %v167
    %v576 = vrot.slane %v568, 3
    %v577 = vrot.slane %v569, 3
    %v578 = vrot.slane %v570, 3
    %v579 = vrot.slane %v571, 3
    %v584 = vadd.f32 %v562, %v576
    %v585 = vadd.f32 %v563, %v577
    %v586 = vadd.f32 %v564, %v578
    %v587 = vadd.f32 %v565, %v579
    %s588 = sld [smem:[#allocation3 + $0x25]]
    %v589 = vstv %s588
    %v590 = vmul.f32 %v589, %v164
    %v591 = vmul.f32 %v589, %v165
    %v592 = vmul.f32 %v589, %v166
    %v593 = vmul.f32 %v589, %v167
    %v598 = vrot.slane %v590, 4
    %v599 = vrot.slane %v591, 4
    %v600 = vrot.slane %v592, 4
    %v601 = vrot.slane %v593, 4
    %v606 = vadd.f32 %v584, %v598
    %v607 = vadd.f32 %v585, %v599
    %v608 = vadd.f32 %v586, %v600
    %v609 = vadd.f32 %v587, %v601
    %s610 = sld [smem:[#allocation3 + $0x2e]]
    %v611 = vstv %s610
    %v612 = vmul.f32 %v611, %v164
    %v613 = vmul.f32 %v611, %v165
    %v614 = vmul.f32 %v611, %v166
    %v615 = vmul.f32 %v611, %v167
    %v620 = vrot.slane %v612, 5
    %v621 = vrot.slane %v613, 5
    %v622 = vrot.slane %v614, 5
    %v623 = vrot.slane %v615, 5
    %v628 = vadd.f32 %v606, %v620
    %v629 = vadd.f32 %v607, %v621
    %v630 = vadd.f32 %v608, %v622
    %v631 = vadd.f32 %v609, %v623
    %s632 = sld [smem:[#allocation3 + $0x2]]
    %v633 = vstv %s632
    %v634 = vmul.f32 %v633, %v198
    %v635 = vmul.f32 %v633, %v199
    %v636 = vmul.f32 %v633, %v200
    %v637 = vmul.f32 %v633, %v201
    %v638 = vadd.f32 %v628, %v634
    %v639 = vadd.f32 %v629, %v635
    %v640 = vadd.f32 %v630, %v636
    %v641 = vadd.f32 %v631, %v637
    %s642 = sld [smem:[#allocation3 + $0xb]]
    %v643 = vstv %s642
    %v644 = vmul.f32 %v643, %v198
    %v645 = vmul.f32 %v643, %v199
    %v646 = vmul.f32 %v643, %v200
    %v647 = vmul.f32 %v643, %v201
    %v652 = vrot.slane %v644, 1
    %v653 = vrot.slane %v645, 1
    %v654 = vrot.slane %v646, 1
    %v655 = vrot.slane %v647, 1
    %v660 = vadd.f32 %v638, %v652
    %v661 = vadd.f32 %v639, %v653
    %v662 = vadd.f32 %v640, %v654
    %v663 = vadd.f32 %v641, %v655
    %s664 = sld [smem:[#allocation3 + $0x14]]
    %v665 = vstv %s664
    %v666 = vmul.f32 %v665, %v198
    %v667 = vmul.f32 %v665, %v199
    %v668 = vmul.f32 %v665, %v200
    %v669 = vmul.f32 %v665, %v201
    %v674 = vrot.slane %v666, 2
    %v675 = vrot.slane %v667, 2
    %v676 = vrot.slane %v668, 2
    %v677 = vrot.slane %v669, 2
    %v682 = vadd.f32 %v660, %v674
    %v683 = vadd.f32 %v661, %v675
    %v684 = vadd.f32 %v662, %v676
    %v685 = vadd.f32 %v663, %v677
    %s686 = sld [smem:[#allocation3 + $0x1d]]
    %v687 = vstv %s686
    %v688 = vmul.f32 %v687, %v198
    %v689 = vmul.f32 %v687, %v199
    %v690 = vmul.f32 %v687, %v200
    %v691 = vmul.f32 %v687, %v201
    %v696 = vrot.slane %v688, 3
    %v697 = vrot.slane %v689, 3
    %v698 = vrot.slane %v690, 3
    %v699 = vrot.slane %v691, 3
    %v704 = vadd.f32 %v682, %v696
    %v705 = vadd.f32 %v683, %v697
    %v706 = vadd.f32 %v684, %v698
    %v707 = vadd.f32 %v685, %v699
    %s708 = sld [smem:[#allocation3 + $0x26]]
    %v709 = vstv %s708
    %v710 = vmul.f32 %v709, %v198
    %v711 = vmul.f32 %v709, %v199
    %v712 = vmul.f32 %v709, %v200
    %v713 = vmul.f32 %v709, %v201
    %v718 = vrot.slane %v710, 4
    %v719 = vrot.slane %v711, 4
    %v720 = vrot.slane %v712, 4
    %v721 = vrot.slane %v713, 4
    %v726 = vadd.f32 %v704, %v718
    %v727 = vadd.f32 %v705, %v719
    %v728 = vadd.f32 %v706, %v720
    %v729 = vadd.f32 %v707, %v721
    %s730 = sld [smem:[#allocation3 + $0x2f]]
    %v731 = vstv %s730
    %v732 = vmul.f32 %v731, %v198
    %v733 = vmul.f32 %v731, %v199
    %v734 = vmul.f32 %v731, %v200
    %v735 = vmul.f32 %v731, %v201
    %v740 = vrot.slane %v732, 5
    %v741 = vrot.slane %v733, 5
    %v742 = vrot.slane %v734, 5
    %v743 = vrot.slane %v735, 5
    %v748 = vadd.f32 %v726, %v740
    %v749 = vadd.f32 %v727, %v741
    %v750 = vadd.f32 %v728, %v742
    %v751 = vadd.f32 %v729, %v743
    %s752 = sld [smem:[#allocation3 + $0x3]]
    %v753 = vstv %s752
    %v754 = vmul.f32 %v753, %v232
    %v755 = vmul.f32 %v753, %v233
    %v756 = vmul.f32 %v753, %v234
    %v757 = vmul.f32 %v753, %v235
    %v758 = vadd.f32 %v748, %v754
    %v759 = vadd.f32 %v749, %v755
    %v760 = vadd.f32 %v750, %v756
    %v761 = vadd.f32 %v751, %v757
    %s762 = sld [smem:[#allocation3 + $0xc]]
    %v763 = vstv %s762
    %v764 = vmul.f32 %v763, %v232
    %v765 = vmul.f32 %v763, %v233
    %v766 = vmul.f32 %v763, %v234
    %v767 = vmul.f32 %v763, %v235
    %v772 = vrot.slane %v764, 1
    %v773 = vrot.slane %v765, 1
    %v774 = vrot.slane %v766, 1
    %v775 = vrot.slane %v767, 1
    %v780 = vadd.f32 %v758, %v772
    %v781 = vadd.f32 %v759, %v773
    %v782 = vadd.f32 %v760, %v774
    %v783 = vadd.f32 %v761, %v775
    %s784 = sld [smem:[#allocation3 + $0x15]]
    %v785 = vstv %s784
    %v786 = vmul.f32 %v785, %v232
    %v787 = vmul.f32 %v785, %v233
    %v788 = vmul.f32 %v785, %v234
    %v789 = vmul.f32 %v785, %v235
    %v794 = vrot.slane %v786, 2
    %v795 = vrot.slane %v787, 2
    %v796 = vrot.slane %v788, 2
    %v797 = vrot.slane %v789, 2
    %v802 = vadd.f32 %v780, %v794
    %v803 = vadd.f32 %v781, %v795
    %v804 = vadd.f32 %v782, %v796
    %v805 = vadd.f32 %v783, %v797
    %s806 = sld [smem:[#allocation3 + $0x1e]]
    %v807 = vstv %s806
    %v808 = vmul.f32 %v807, %v232
    %v809 = vmul.f32 %v807, %v233
    %v810 = vmul.f32 %v807, %v234
    %v811 = vmul.f32 %v807, %v235
    %v816 = vrot.slane %v808, 3
    %v817 = vrot.slane %v809, 3
    %v818 = vrot.slane %v810, 3
    %v819 = vrot.slane %v811, 3
    %v824 = vadd.f32 %v802, %v816
    %v825 = vadd.f32 %v803, %v817
    %v826 = vadd.f32 %v804, %v818
    %v827 = vadd.f32 %v805, %v819
    %s828 = sld [smem:[#allocation3 + $0x27]]
    %v829 = vstv %s828
    %v830 = vmul.f32 %v829, %v232
    %v831 = vmul.f32 %v829, %v233
    %v832 = vmul.f32 %v829, %v234
    %v833 = vmul.f32 %v829, %v235
    %v838 = vrot.slane %v830, 4
    %v839 = vrot.slane %v831, 4
    %v840 = vrot.slane %v832, 4
    %v841 = vrot.slane %v833, 4
    %v846 = vadd.f32 %v824, %v838
    %v847 = vadd.f32 %v825, %v839
    %v848 = vadd.f32 %v826, %v840
    %v849 = vadd.f32 %v827, %v841
    %s850 = sld [smem:[#allocation3 + $0x30]]
    %v851 = vstv %s850
    %v852 = vmul.f32 %v851, %v232
    %v853 = vmul.f32 %v851, %v233
    %v854 = vmul.f32 %v851, %v234
    %v855 = vmul.f32 %v851, %v235
    %v860 = vrot.slane %v852, 5
    %v861 = vrot.slane %v853, 5
    %v862 = vrot.slane %v854, 5
    %v863 = vrot.slane %v855, 5
    %v868 = vadd.f32 %v846, %v860
    %v869 = vadd.f32 %v847, %v861
    %v870 = vadd.f32 %v848, %v862
    %v871 = vadd.f32 %v849, %v863
    %s872 = sld [smem:[#allocation3 + $0x4]]
    %v873 = vstv %s872
    %v874 = vmul.f32 %v873, %v249
    %v875 = vmul.f32 %v873, %v250
    %v876 = vmul.f32 %v873, %v251
    %v877 = vmul.f32 %v873, %v252
    %v878 = vadd.f32 %v868, %v874
    %v879 = vadd.f32 %v869, %v875
    %v880 = vadd.f32 %v870, %v876
    %v881 = vadd.f32 %v871, %v877
    %s882 = sld [smem:[#allocation3 + $0xd]]
    %v883 = vstv %s882
    %v884 = vmul.f32 %v883, %v249
    %v885 = vmul.f32 %v883, %v250
    %v886 = vmul.f32 %v883, %v251
    %v887 = vmul.f32 %v883, %v252
    %v892 = vrot.slane %v884, 1
    %v893 = vrot.slane %v885, 1
    %v894 = vrot.slane %v886, 1
    %v895 = vrot.slane %v887, 1
    %v900 = vadd.f32 %v878, %v892
    %v901 = vadd.f32 %v879, %v893
    %v902 = vadd.f32 %v880, %v894
    %v903 = vadd.f32 %v881, %v895
    %s904 = sld [smem:[#allocation3 + $0x16]]
    %v905 = vstv %s904
    %v906 = vmul.f32 %v905, %v249
    %v907 = vmul.f32 %v905, %v250
    %v908 = vmul.f32 %v905, %v251
    %v909 = vmul.f32 %v905, %v252
    %v914 = vrot.slane %v906, 2
    %v915 = vrot.slane %v907, 2
    %v916 = vrot.slane %v908, 2
    %v917 = vrot.slane %v909, 2
    %v922 = vadd.f32 %v900, %v914
    %v923 = vadd.f32 %v901, %v915
    %v924 = vadd.f32 %v902, %v916
    %v925 = vadd.f32 %v903, %v917
    %s926 = sld [smem:[#allocation3 + $0x1f]]
    %v927 = vstv %s926
    %v928 = vmul.f32 %v927, %v249
    %v929 = vmul.f32 %v927, %v250
    %v930 = vmul.f32 %v927, %v251
    %v931 = vmul.f32 %v927, %v252
    %v936 = vrot.slane %v928, 3
    %v937 = vrot.slane %v929, 3
    %v938 = vrot.slane %v930, 3
    %v939 = vrot.slane %v931, 3
    %v944 = vadd.f32 %v922, %v936
    %v945 = vadd.f32 %v923, %v937
    %v946 = vadd.f32 %v924, %v938
    %v947 = vadd.f32 %v925, %v939
    %s948 = sld [smem:[#allocation3 + $0x28]]
    %v949 = vstv %s948
    %v950 = vmul.f32 %v949, %v249
    %v951 = vmul.f32 %v949, %v250
    %v952 = vmul.f32 %v949, %v251
    %v953 = vmul.f32 %v949, %v252
    %v958 = vrot.slane %v950, 4
    %v959 = vrot.slane %v951, 4
    %v960 = vrot.slane %v952, 4
    %v961 = vrot.slane %v953, 4
    %v966 = vadd.f32 %v944, %v958
    %v967 = vadd.f32 %v945, %v959
    %v968 = vadd.f32 %v946, %v960
    %v969 = vadd.f32 %v947, %v961
    %s970 = sld [smem:[#allocation3 + $0x31]]
    %v971 = vstv %s970
    %v972 = vmul.f32 %v971, %v249
    %v973 = vmul.f32 %v971, %v250
    %v974 = vmul.f32 %v971, %v251
    %v975 = vmul.f32 %v971, %v252
    %v980 = vrot.slane %v972, 5
    %v981 = vrot.slane %v973, 5
    %v982 = vrot.slane %v974, 5
    %v983 = vrot.slane %v975, 5
    %v988 = vadd.f32 %v966, %v980
    %v989 = vadd.f32 %v967, %v981
    %v990 = vadd.f32 %v968, %v982
    %v991 = vadd.f32 %v969, %v983
    %s992 = sld [smem:[#allocation3 + $0x5]]
    %v993 = vstv %s992
    %v994 = vmul.f32 %v993, %v283
    %v995 = vmul.f32 %v993, %v284
    %v996 = vmul.f32 %v993, %v285
    %v997 = vmul.f32 %v993, %v286
    %v998 = vadd.f32 %v988, %v994
    %v999 = vadd.f32 %v989, %v995
    %v1000 = vadd.f32 %v990, %v996
    %v1001 = vadd.f32 %v991, %v997
    %s1002 = sld [smem:[#allocation3 + $0xe]]
    %v1003 = vstv %s1002
    %v1004 = vmul.f32 %v1003, %v283
    %v1005 = vmul.f32 %v1003, %v284
    %v1006 = vmul.f32 %v1003, %v285
    %v1007 = vmul.f32 %v1003, %v286
    %v1012 = vrot.slane %v1004, 1
    %v1013 = vrot.slane %v1005, 1
    %v1014 = vrot.slane %v1006, 1
    %v1015 = vrot.slane %v1007, 1
    %v1020 = vadd.f32 %v998, %v1012
    %v1021 = vadd.f32 %v999, %v1013
    %v1022 = vadd.f32 %v1000, %v1014
    %v1023 = vadd.f32 %v1001, %v1015
    %s1024 = sld [smem:[#allocation3 + $0x17]]
    %v1025 = vstv %s1024
    %v1026 = vmul.f32 %v1025, %v283
    %v1027 = vmul.f32 %v1025, %v284
    %v1028 = vmul.f32 %v1025, %v285
    %v1029 = vmul.f32 %v1025, %v286
    %v1034 = vrot.slane %v1026, 2
    %v1035 = vrot.slane %v1027, 2
    %v1036 = vrot.slane %v1028, 2
    %v1037 = vrot.slane %v1029, 2
    %v1042 = vadd.f32 %v1020, %v1034
    %v1043 = vadd.f32 %v1021, %v1035
    %v1044 = vadd.f32 %v1022, %v1036
    %v1045 = vadd.f32 %v1023, %v1037
    %s1046 = sld [smem:[#allocation3 + $0x20]]
    %v1047 = vstv %s1046
    %v1048 = vmul.f32 %v1047, %v283
    %v1049 = vmul.f32 %v1047, %v284
    %v1050 = vmul.f32 %v1047, %v285
    %v1051 = vmul.f32 %v1047, %v286
    %v1056 = vrot.slane %v1048, 3
    %v1057 = vrot.slane %v1049, 3
    %v1058 = vrot.slane %v1050, 3
    %v1059 = vrot.slane %v1051, 3
    %v1064 = vadd.f32 %v1042, %v1056
    %v1065 = vadd.f32 %v1043, %v1057
    %v1066 = vadd.f32 %v1044, %v1058
    %v1067 = vadd.f32 %v1045, %v1059
    %s1068 = sld [smem:[#allocation3 + $0x29]]
    %v1069 = vstv %s1068
    %v1070 = vmul.f32 %v1069, %v283
    %v1071 = vmul.f32 %v1069, %v284
    %v1072 = vmul.f32 %v1069, %v285
    %v1073 = vmul.f32 %v1069, %v286
    %v1078 = vrot.slane %v1070, 4
    %v1079 = vrot.slane %v1071, 4
    %v1080 = vrot.slane %v1072, 4
    %v1081 = vrot.slane %v1073, 4
    %v1086 = vadd.f32 %v1064, %v1078
    %v1087 = vadd.f32 %v1065, %v1079
    %v1088 = vadd.f32 %v1066, %v1080
    %v1089 = vadd.f32 %v1067, %v1081
    %s1090 = sld [smem:[#allocation3 + $0x32]]
    %v1091 = vstv %s1090
    %v1092 = vmul.f32 %v1091, %v283
    %v1093 = vmul.f32 %v1091, %v284
    %v1094 = vmul.f32 %v1091, %v285
    %v1095 = vmul.f32 %v1091, %v286
    %v1100 = vrot.slane %v1092, 5
    %v1101 = vrot.slane %v1093, 5
    %v1102 = vrot.slane %v1094, 5
    %v1103 = vrot.slane %v1095, 5
    %v1108 = vadd.f32 %v1086, %v1100
    %v1109 = vadd.f32 %v1087, %v1101
    %v1110 = vadd.f32 %v1088, %v1102
    %v1111 = vadd.f32 %v1089, %v1103
    %s1112 = sld [smem:[#allocation3 + $0x6]]
    %v1113 = vstv %s1112
    %v1114 = vmul.f32 %v1113, %v317
    %v1115 = vmul.f32 %v1113, %v318
    %v1116 = vmul.f32 %v1113, %v319
    %v1117 = vmul.f32 %v1113, %v320
    %v1118 = vadd.f32 %v1108, %v1114
    %v1119 = vadd.f32 %v1109, %v1115
    %v1120 = vadd.f32 %v1110, %v1116
    %v1121 = vadd.f32 %v1111, %v1117
    %s1122 = sld [smem:[#allocation3 + $0xf]]
    %v1123 = vstv %s1122
    %v1124 = vmul.f32 %v1123, %v317
    %v1125 = vmul.f32 %v1123, %v318
    %v1126 = vmul.f32 %v1123, %v319
    %v1127 = vmul.f32 %v1123, %v320
    %v1132 = vrot.slane %v1124, 1
    %v1133 = vrot.slane %v1125, 1
    %v1134 = vrot.slane %v1126, 1
    %v1135 = vrot.slane %v1127, 1
    %v1140 = vadd.f32 %v1118, %v1132
    %v1141 = vadd.f32 %v1119, %v1133
    %v1142 = vadd.f32 %v1120, %v1134
    %v1143 = vadd.f32 %v1121, %v1135
    %s1144 = sld [smem:[#allocation3 + $0x18]]
    %v1145 = vstv %s1144
    %v1146 = vmul.f32 %v1145, %v317
    %v1147 = vmul.f32 %v1145, %v318
    %v1148 = vmul.f32 %v1145, %v319
    %v1149 = vmul.f32 %v1145, %v320
    %v1154 = vrot.slane %v1146, 2
    %v1155 = vrot.slane %v1147, 2
    %v1156 = vrot.slane %v1148, 2
    %v1157 = vrot.slane %v1149, 2
    %v1162 = vadd.f32 %v1140, %v1154
    %v1163 = vadd.f32 %v1141, %v1155
    %v1164 = vadd.f32 %v1142, %v1156
    %v1165 = vadd.f32 %v1143, %v1157
    %s1166 = sld [smem:[#allocation3 + $0x21]]
    %v1167 = vstv %s1166
    %v1168 = vmul.f32 %v1167, %v317
    %v1169 = vmul.f32 %v1167, %v318
    %v1170 = vmul.f32 %v1167, %v319
    %v1171 = vmul.f32 %v1167, %v320
    %v1176 = vrot.slane %v1168, 3
    %v1177 = vrot.slane %v1169, 3
    %v1178 = vrot.slane %v1170, 3
    %v1179 = vrot.slane %v1171, 3
    %v1184 = vadd.f32 %v1162, %v1176
    %v1185 = vadd.f32 %v1163, %v1177
    %v1186 = vadd.f32 %v1164, %v1178
    %v1187 = vadd.f32 %v1165, %v1179
    %s1188 = sld [smem:[#allocation3 + $0x2a]]
    %v1189 = vstv %s1188
    %v1190 = vmul.f32 %v1189, %v317
    %v1191 = vmul.f32 %v1189, %v318
    %v1192 = vmul.f32 %v1189, %v319
    %v1193 = vmul.f32 %v1189, %v320
    %v1198 = vrot.slane %v1190, 4
    %v1199 = vrot.slane %v1191, 4
    %v1200 = vrot.slane %v1192, 4
    %v1201 = vrot.slane %v1193, 4
    %v1206 = vadd.f32 %v1184, %v1198
    %v1207 = vadd.f32 %v1185, %v1199
    %v1208 = vadd.f32 %v1186, %v1200
    %v1209 = vadd.f32 %v1187, %v1201
    %s1210 = sld [smem:[#allocation3 + $0x33]]
    %v1211 = vstv %s1210
    %v1212 = vmul.f32 %v1211, %v317
    %v1213 = vmul.f32 %v1211, %v318
    %v1214 = vmul.f32 %v1211, %v319
    %v1215 = vmul.f32 %v1211, %v320
    %v1220 = vrot.slane %v1212, 5
    %v1221 = vrot.slane %v1213, 5
    %v1222 = vrot.slane %v1214, 5
    %v1223 = vrot.slane %v1215, 5
    %v1228 = vadd.f32 %v1206, %v1220
    %v1229 = vadd.f32 %v1207, %v1221
    %v1230 = vadd.f32 %v1208, %v1222
    %v1231 = vadd.f32 %v1209, %v1223
    %s1232 = sld [smem:[#allocation3 + $0x7]]
    %v1233 = vstv %s1232
    %v1234 = vmul.f32 %v1233, %v351
    %v1235 = vmul.f32 %v1233, %v352
    %v1236 = vmul.f32 %v1233, %v353
    %v1237 = vmul.f32 %v1233, %v354
    %v1238 = vadd.f32 %v1228, %v1234
    %v1239 = vadd.f32 %v1229, %v1235
    %v1240 = vadd.f32 %v1230, %v1236
    %v1241 = vadd.f32 %v1231, %v1237
    %s1242 = sld [smem:[#allocation3 + $0x10]]
    %v1243 = vstv %s1242
    %v1244 = vmul.f32 %v1243, %v351
    %v1245 = vmul.f32 %v1243, %v352
    %v1246 = vmul.f32 %v1243, %v353
    %v1247 = vmul.f32 %v1243, %v354
    %v1252 = vrot.slane %v1244, 1
    %v1253 = vrot.slane %v1245, 1
    %v1254 = vrot.slane %v1246, 1
    %v1255 = vrot.slane %v1247, 1
    %v1260 = vadd.f32 %v1238, %v1252
    %v1261 = vadd.f32 %v1239, %v1253
    %v1262 = vadd.f32 %v1240, %v1254
    %v1263 = vadd.f32 %v1241, %v1255
    %s1264 = sld [smem:[#allocation3 + $0x19]]
    %v1265 = vstv %s1264
    %v1266 = vmul.f32 %v1265, %v351
    %v1267 = vmul.f32 %v1265, %v352
    %v1268 = vmul.f32 %v1265, %v353
    %v1269 = vmul.f32 %v1265, %v354
    %v1274 = vrot.slane %v1266, 2
    %v1275 = vrot.slane %v1267, 2
    %v1276 = vrot.slane %v1268, 2
    %v1277 = vrot.slane %v1269, 2
    %v1282 = vadd.f32 %v1260, %v1274
    %v1283 = vadd.f32 %v1261, %v1275
    %v1284 = vadd.f32 %v1262, %v1276
    %v1285 = vadd.f32 %v1263, %v1277
    %s1286 = sld [smem:[#allocation3 + $0x22]]
    %v1287 = vstv %s1286
    %v1288 = vmul.f32 %v1287, %v351
    %v1289 = vmul.f32 %v1287, %v352
    %v1290 = vmul.f32 %v1287, %v353
    %v1291 = vmul.f32 %v1287, %v354
    %v1296 = vrot.slane %v1288, 3
    %v1297 = vrot.slane %v1289, 3
    %v1298 = vrot.slane %v1290, 3
    %v1299 = vrot.slane %v1291, 3
    %v1304 = vadd.f32 %v1282, %v1296
    %v1305 = vadd.f32 %v1283, %v1297
    %v1306 = vadd.f32 %v1284, %v1298
    %v1307 = vadd.f32 %v1285, %v1299
    %s1308 = sld [smem:[#allocation3 + $0x2b]]
    %v1309 = vstv %s1308
    %v1310 = vmul.f32 %v1309, %v351
    %v1311 = vmul.f32 %v1309, %v352
    %v1312 = vmul.f32 %v1309, %v353
    %v1313 = vmul.f32 %v1309, %v354
    %v1318 = vrot.slane %v1310, 4
    %v1319 = vrot.slane %v1311, 4
    %v1320 = vrot.slane %v1312, 4
    %v1321 = vrot.slane %v1313, 4
    %v1326 = vadd.f32 %v1304, %v1318
    %v1327 = vadd.f32 %v1305, %v1319
    %v1328 = vadd.f32 %v1306, %v1320
    %v1329 = vadd.f32 %v1307, %v1321
    %s1330 = sld [smem:[#allocation3 + $0x34]]
    %v1331 = vstv %s1330
    %v1332 = vmul.f32 %v1331, %v351
    %v1333 = vmul.f32 %v1331, %v352
    %v1334 = vmul.f32 %v1331, %v353
    %v1335 = vmul.f32 %v1331, %v354
    %v1340 = vrot.slane %v1332, 5
    %v1341 = vrot.slane %v1333, 5
    %v1342 = vrot.slane %v1334, 5
    %v1343 = vrot.slane %v1335, 5
    %v1348 = vadd.f32 %v1326, %v1340
    %v1349 = vadd.f32 %v1327, %v1341
    %v1350 = vadd.f32 %v1328, %v1342
    %v1351 = vadd.f32 %v1329, %v1343
    %s1352 = sld [smem:[#allocation3 + $0x8]]
    %v1353 = vstv %s1352
    %v1354 = vmul.f32 %v1353, %v385
    %v1355 = vmul.f32 %v1353, %v386
    %v1356 = vmul.f32 %v1353, %v387
    %v1357 = vmul.f32 %v1353, %v388
    %v1358 = vadd.f32 %v1348, %v1354
    %v1359 = vadd.f32 %v1349, %v1355
    %v1360 = vadd.f32 %v1350, %v1356
    %v1361 = vadd.f32 %v1351, %v1357
    %s1362 = sld [smem:[#allocation3 + $0x11]]
    %v1363 = vstv %s1362
    %v1364 = vmul.f32 %v1363, %v385
    %v1365 = vmul.f32 %v1363, %v386
    %v1366 = vmul.f32 %v1363, %v387
    %v1367 = vmul.f32 %v1363, %v388
    %v1372 = vrot.slane %v1364, 1
    %v1373 = vrot.slane %v1365, 1
    %v1374 = vrot.slane %v1366, 1
    %v1375 = vrot.slane %v1367, 1
    %v1380 = vadd.f32 %v1358, %v1372
    %v1381 = vadd.f32 %v1359, %v1373
    %v1382 = vadd.f32 %v1360, %v1374
    %v1383 = vadd.f32 %v1361, %v1375
    %s1384 = sld [smem:[#allocation3 + $0x1a]]
    %v1385 = vstv %s1384
    %v1386 = vmul.f32 %v1385, %v385
    %v1387 = vmul.f32 %v1385, %v386
    %v1388 = vmul.f32 %v1385, %v387
    %v1389 = vmul.f32 %v1385, %v388
    %v1394 = vrot.slane %v1386, 2
    %v1395 = vrot.slane %v1387, 2
    %v1396 = vrot.slane %v1388, 2
    %v1397 = vrot.slane %v1389, 2
    %v1402 = vadd.f32 %v1380, %v1394
    %v1403 = vadd.f32 %v1381, %v1395
    %v1404 = vadd.f32 %v1382, %v1396
    %v1405 = vadd.f32 %v1383, %v1397
    %s1406 = sld [smem:[#allocation3 + $0x23]]
    %v1407 = vstv %s1406
    %v1408 = vmul.f32 %v1407, %v385
    %v1409 = vmul.f32 %v1407, %v386
    %v1410 = vmul.f32 %v1407, %v387
    %v1411 = vmul.f32 %v1407, %v388
    %v1416 = vrot.slane %v1408, 3
    %v1417 = vrot.slane %v1409, 3
    %v1418 = vrot.slane %v1410, 3
    %v1419 = vrot.slane %v1411, 3
    %v1424 = vadd.f32 %v1402, %v1416
    %v1425 = vadd.f32 %v1403, %v1417
    %v1426 = vadd.f32 %v1404, %v1418
    %v1427 = vadd.f32 %v1405, %v1419
    %s1428 = sld [smem:[#allocation3 + $0x2c]]
    %v1429 = vstv %s1428
    %v1430 = vmul.f32 %v1429, %v385
    %v1431 = vmul.f32 %v1429, %v386
    %v1432 = vmul.f32 %v1429, %v387
    %v1433 = vmul.f32 %v1429, %v388
    %v1438 = vrot.slane %v1430, 4
    %v1439 = vrot.slane %v1431, 4
    %v1440 = vrot.slane %v1432, 4
    %v1441 = vrot.slane %v1433, 4
    %v1446 = vadd.f32 %v1424, %v1438
    %v1447 = vadd.f32 %v1425, %v1439
    %v1448 = vadd.f32 %v1426, %v1440
    %v1449 = vadd.f32 %v1427, %v1441
    %s1450 = sld [smem:[#allocation3 + $0x35]]
    %v1451 = vstv %s1450
    %v1452 = vmul.f32 %v1451, %v385
    %v1453 = vmul.f32 %v1451, %v386
    %v1454 = vmul.f32 %v1451, %v387
    %v1455 = vmul.f32 %v1451, %v388
    %v1460 = vrot.slane %v1452, 5
    %v1461 = vrot.slane %v1453, 5
    %v1462 = vrot.slane %v1454, 5
    %v1463 = vrot.slane %v1455, 5
    %v1468 = vadd.f32 %v1446, %v1460
    %v1469 = vadd.f32 %v1447, %v1461
    %v1470 = vadd.f32 %v1448, %v1462
    %v1471 = vadd.f32 %v1449, %v1463
    %v1476 = vrot.slane %v1470, 7
    %vm1477 = vcmask 1041409
    %v1478 = vsel %vm1477, %v1476, %v1468
    %v1479 = vrot.slane %v1471, 7
    %v1480 = vsel %vm1477, %v1479, %v1469
    %vm1483 = vcmask 1041408
    %v1484 = vsel %vm1483, %v1478, 0.0
    %v1485 = vsel %vm1483, %v1480, 0.0
    %v1486 = vadd.f32 %v1484, %v1485
    %1487 = vadd.xlane.f32.xlu0 %v1486
    %v1488 = vpop.xlane.xlu0 %1487
    %v1489 = vrot.slane %v1488, 4
    %v1490 = vadd.f32 %v1488, %v1489
    %v1491 = vrot.slane %v1490, 2
    %v1492 = vadd.f32 %v1490, %v1491
    %v1493 = vrot.slane %v1492, 1
    %v1494 = vadd.f32 %v1492, %v1493
    %s1495 = vtos %v1494
    %v1496 = vmul.f32 %v1468, %v1468
    %v1497 = vmul.f32 %v1469, %v1469
    %v1498 = vmul.f32 %v1470, %v1470
    %v1499 = vmul.f32 %v1471, %v1471
    %v1504 = vrot.slane %v1498, 7
    %v1505 = vsel %vm1477, %v1504, %v1496
    %v1506 = vrot.slane %v1499, 7
    %v1507 = vsel %vm1477, %v1506, %v1497
    %v1510 = vsel %vm1483, %v1505, 0.0
    %v1511 = vsel %vm1483, %v1507, 0.0
    %v1512 = vadd.f32 %v1510, %v1511
    %1513 = vadd.xlane.f32.xlu0 %v1512
    %v1514 = vpop.xlane.xlu0 %1513
    %v1515 = vrot.slane %v1514, 4
    %v1516 = vadd.f32 %v1514, %v1515
    %v1517 = vrot.slane %v1516, 2
    %v1518 = vadd.f32 %v1516, %v1517
    %v1519 = vrot.slane %v1518, 1
    %v1520 = vadd.f32 %v1518, %v1519
    %s1521 = vtos %v1520
    %s1522 = smul.f32 %s1495, 0.001953125
    %s1523 = smul.f32 %s1521, 0.001953125
    %s1524 = smul.f32 %s1522, %s1522
    %s1525 = ssub.f32 %s1523, %s1524
    %s1526 = smax.f32 %s1525, 0.0
    %s1527 = sld [smem:[#allocation7]]
    %s1528 = sadd.f32 %s1526, 1e-05
    %v1529 = vstv %s1528
    %v1530 = vrsqrt.pop %v1529
    %s1531 = vtos %v1530
    %s1532 = smul.f32 %s1527, %s1531
    %s1533 = sld [smem:[#allocation8]]
    %s1534 = smul.f32 %s1522, %s1532
    %s1535 = ssub.f32 %s1533, %s1534
    %v1536 = vstv %s1532
    %v1537 = vmul.f32 %v1468, %v1536
    %v1538 = vmul.f32 %v1469, %v1536
    %v1539 = vmul.f32 %v1470, %v1536
    %v1540 = vmul.f32 %v1471, %v1536
    %v1541 = vstv %s1535
    %v1542 = vadd.f32 %v1537, %v1541
    %v1543 = vadd.f32 %v1538, %v1541
    %v1544 = vadd.f32 %v1539, %v1541
    %v1545 = vadd.f32 %v1540, %v1541
    %v1546 = vmax.f32 %v1542, 0.0
    %v1547 = vmax.f32 %v1543, 0.0
    %v1548 = vmax.f32 %v1544, 0.0
    %v1549 = vmax.f32 %v1545, 0.0
    %s1550 = sld [smem:[#allocation5 + $0x1]]
    %v1551 = vstv %s1550
    %v1552 = vadd.f32 %v1551, 0.0
    %s1553 = sld [smem:[#allocation3 + $0x36]]
    %v1554 = vstv %s1553
    %v1555 = vmul.f32 %v1554, %v130
    %v1556 = vmul.f32 %v1554, %v131
    %v1557 = vmul.f32 %v1554, %v132
    %v1558 = vmul.f32 %v1554, %v133
    %v1559 = vadd.f32 %v1552, %v1555
    %v1560 = vadd.f32 %v1552, %v1556
    %v1561 = vadd.f32 %v1552, %v1557
    %v1562 = vadd.f32 %v1552, %v1558
    %s1563 = sld [smem:[#allocation3 + $0x3f]]
    %v1564 = vstv %s1563
    %v1565 = vmul.f32 %v1564, %v130
    %v1566 = vmul.f32 %v1564, %v131
    %v1567 = vmul.f32 %v1564, %v132
    %v1568 = vmul.f32 %v1564, %v133
    %v1573 = vrot.slane %v1565, 1
    %v1574 = vrot.slane %v1566, 1
    %v1575 = vrot.slane %v1567, 1
    %v1576 = vrot.slane %v1568, 1
    %v1581 = vadd.f32 %v1559, %v1573
    %v1582 = vadd.f32 %v1560, %v1574
    %v1583 = vadd.f32 %v1561, %v1575
    %v1584 = vadd.f32 %v1562, %v1576
    %s1585 = sld [smem:[#allocation3 + $0x48]]
    %v1586 = vstv %s1585
    %v1587 = vmul.f32 %v1586, %v130
    %v1588 = vmul.f32 %v1586, %v131
    %v1589 = vmul.f32 %v1586, %v132
    %v1590 = vmul.f32 %v1586, %v133
    %v1595 = vrot.slane %v1587, 2
    %v1596 = vrot.slane %v1588, 2
    %v1597 = vrot.slane %v1589, 2
    %v1598 = vrot.slane %v1590, 2
    %v1603 = vadd.f32 %v1581, %v1595
    %v1604 = vadd.f32 %v1582, %v1596
    %v1605 = vadd.f32 %v1583, %v1597
    %v1606 = vadd.f32 %v1584, %v1598
    %s1607 = sld [smem:[#allocation3 + $0x51]]
    %v1608 = vstv %s1607
    %v1609 = vmul.f32 %v1608, %v130
    %v1610 = vmul.f32 %v1608, %v131
    %v1611 = vmul.f32 %v1608, %v132
    %v1612 = vmul.f32 %v1608, %v133
    %v1617 = vrot.slane %v1609, 3
    %v1618 = vrot.slane %v1610, 3
    %v1619 = vrot.slane %v1611, 3
    %v1620 = vrot.slane %v1612, 3
    %v1625 = vadd.f32 %v1603, %v1617
    %v1626 = vadd.f32 %v1604, %v1618
    %v1627 = vadd.f32 %v1605, %v1619
    %v1628 = vadd.f32 %v1606, %v1620
    %s1629 = sld [smem:[#allocation3 + $0x5a]]
    %v1630 = vstv %s1629
    %v1631 = vmul.f32 %v1630, %v130
    %v1632 = vmul.f32 %v1630, %v131
    %v1633 = vmul.f32 %v1630, %v132
    %v1634 = vmul.f32 %v1630, %v133
    %v1639 = vrot.slane %v1631, 4
    %v1640 = vrot.slane %v1632, 4
    %v1641 = vrot.slane %v1633, 4
    %v1642 = vrot.slane %v1634, 4
    %v1647 = vadd.f32 %v1625, %v1639
    %v1648 = vadd.f32 %v1626, %v1640
    %v1649 = vadd.f32 %v1627, %v1641
    %v1650 = vadd.f32 %v1628, %v1642
    %s1651 = sld [smem:[#allocation3 + $0x63]]
    %v1652 = vstv %s1651
    %v1653 = vmul.f32 %v1652, %v130
    %v1654 = vmul.f32 %v1652, %v131
    %v1655 = vmul.f32 %v1652, %v132
    %v1656 = vmul.f32 %v1652, %v133
    %v1661 = vrot.slane %v1653, 5
    %v1662 = vrot.slane %v1654, 5
    %v1663 = vrot.slane %v1655, 5
    %v1664 = vrot.slane %v1656, 5
    %v1669 = vadd.f32 %v1647, %v1661
    %v1670 = vadd.f32 %v1648, %v1662
    %v1671 = vadd.f32 %v1649, %v1663
    %v1672 = vadd.f32 %v1650, %v1664
    %s1673 = sld [smem:[#allocation3 + $0x37]]
    %v1674 = vstv %s1673
    %v1675 = vmul.f32 %v1674, %v164
    %v1676 = vmul.f32 %v1674, %v165
    %v1677 = vmul.f32 %v1674, %v166
    %v1678 = vmul.f32 %v1674, %v167
    %v1679 = vadd.f32 %v1669, %v1675
    %v1680 = vadd.f32 %v1670, %v1676
    %v1681 = vadd.f32 %v1671, %v1677
    %v1682 = vadd.f32 %v1672, %v1678
    %s1683 = sld [smem:[#allocation3 + $0x40]]
    %v1684 = vstv %s1683
    %v1685 = vmul.f32 %v1684, %v164
    %v1686 = vmul.f32 %v1684, %v165
    %v1687 = vmul.f32 %v1684, %v166
    %v1688 = vmul.f32 %v1684, %v167
    %v1693 = vrot.slane %v1685, 1
    %v1694 = vrot.slane %v1686, 1
    %v1695 = vrot.slane %v1687, 1
    %v1696 = vrot.slane %v1688, 1
    %v1701 = vadd.f32 %v1679, %v1693
    %v1702 = vadd.f32 %v1680, %v1694
    %v1703 = vadd.f32 %v1681, %v1695
    %v1704 = vadd.f32 %v1682, %v1696
    %s1705 = sld [smem:[#allocation3 + $0x49]]
    %v1706 = vstv %s1705
    %v1707 = vmul.f32 %v1706, %v164
    %v1708 = vmul.f32 %v1706, %v165
    %v1709 = vmul.f32 %v1706, %v166
    %v1710 = vmul.f32 %v1706, %v167
    %v1715 = vrot.slane %v1707, 2
    %v1716 = vrot.slane %v1708, 2
    %v1717 = vrot.slane %v1709, 2
    %v1718 = vrot.slane %v1710, 2
    %v1723 = vadd.f32 %v1701, %v1715
    %v1724 = vadd.f32 %v1702, %v1716
    %v1725 = vadd.f32 %v1703, %v1717
    %v1726 = vadd.f32 %v1704, %v1718
    %s1727 = sld [smem:[#allocation3 + $0x52]]
    %v1728 = vstv %s1727
    %v1729 = vmul.f32 %v1728, %v164
    %v1730 = vmul.f32 %v1728, %v165
    %v1731 = vmul.f32 %v1728, %v166
    %v1732 = vmul.f32 %v1728, %v167
    %v1737 = vrot.slane %v1729, 3
    %v1738 = vrot.slane %v1730, 3
    %v1739 = vrot.slane %v1731, 3
    %v1740 = vrot.slane %v1732, 3
    %v1745 = vadd.f32 %v1723, %v1737
    %v1746 = vadd.f32 %v1724, %v1738
    %v1747 = vadd.f32 %v1725, %v1739
    %v1748 = vadd.f32 %v1726, %v1740
    %s1749 = sld [smem:[#allocation3 + $0x5b]]
    %v1750 = vstv %s1749
    %v1751 = vmul.f32 %v1750, %v164
    %v1752 = vmul.f32 %v1750, %v165
    %v1753 = vmul.f32 %v1750, %v166
    %v1754 = vmul.f32 %v1750, %v167
    %v1759 = vrot.slane %v1751, 4
    %v1760 = vrot.slane %v1752, 4
    %v1761 = vrot.slane %v1753, 4
    %v1762 = vrot.slane %v1754, 4
    %v1767 = vadd.f32 %v1745, %v1759
    %v1768 = vadd.f32 %v1746, %v1760
    %v1769 = vadd.f32 %v1747, %v1761
    %v1770 = vadd.f32 %v1748, %v1762
    %s1771 = sld [smem:[#allocation3 + $0x64]]
    %v1772 = vstv %s1771
    %v1773 = vmul.f32 %v1772, %v164
    %v1774 = vmul.f32 %v1772, %v165
    %v1775 = vmul.f32 %v1772, %v166
    %v1776 = vmul.f32 %v1772, %v167
    %v1781 = vrot.slane %v1773, 5
    %v1782 = vrot.slane %v1774, 5
    %v1783 = vrot.slane %v1775, 5
    %v1784 = vrot.slane %v1776, 5
    %v1789 = vadd.f32 %v1767, %v1781
    %v1790 = vadd.f32 %v1768, %v1782
    %v1791 = vadd.f32 %v1769, %v1783
    %v1792 = vadd.f32 %v1770, %v1784
    %s1793 = sld [smem:[#allocation3 + $0x38]]
    %v1794 = vstv %s1793
    %v1795 = vmul.f32 %v1794, %v198
    %v1796 = vmul.f32 %v1794, %v199
    %v1797 = vmul.f32 %v1794, %v200
    %v1798 = vmul.f32 %v1794, %v201
    %v1799 = vadd.f32 %v1789, %v1795
    %v1800 = vadd.f32 %v1790, %v1796
    %v1801 = vadd.f32 %v1791, %v1797
    %v1802 = vadd.f32 %v1792, %v1798
    %s1803 = sld [smem:[#allocation3 + $0x41]]
    %v1804 = vstv %s1803
    %v1805 = vmul.f32 %v1804, %v198
    %v1806 = vmul.f32 %v1804, %v199
    %v1807 = vmul.f32 %v1804, %v200
    %v1808 = vmul.f32 %v1804, %v201
    %v1813 = vrot.slane %v1805, 1
    %v1814 = vrot.slane %v1806, 1
    %v1815 = vrot.slane %v1807, 1
    %v1816 = vrot.slane %v1808, 1
    %v1821 = vadd.f32 %v1799, %v1813
    %v1822 = vadd.f32 %v1800, %v1814
    %v1823 = vadd.f32 %v1801, %v1815
    %v1824 = vadd.f32 %v1802, %v1816
    %s1825 = sld [smem:[#allocation3 + $0x4a]]
    %v1826 = vstv %s1825
    %v1827 = vmul.f32 %v1826, %v198
    %v1828 = vmul.f32 %v1826, %v199
    %v1829 = vmul.f32 %v1826, %v200
    %v1830 = vmul.f32 %v1826, %v201
    %v1835 = vrot.slane %v1827, 2
    %v1836 = vrot.slane %v1828, 2
    %v1837 = vrot.slane %v1829, 2
    %v1838 = vrot.slane %v1830, 2
    %v1843 = vadd.f32 %v1821, %v1835
    %v1844 = vadd.f32 %v1822, %v1836
    %v1845 = vadd.f32 %v1823, %v1837
    %v1846 = vadd.f32 %v1824, %v1838
    %s1847 = sld [smem:[#allocation3 + $0x53]]
    %v1848 = vstv %s1847
    %v1849 = vmul.f32 %v1848, %v198
    %v1850 = vmul.f32 %v1848, %v199
    %v1851 = vmul.f32 %v1848, %v200
    %v1852 = vmul.f32 %v1848, %v201
    %v1857 = vrot.slane %v1849, 3
    %v1858 = vrot.slane %v1850, 3
    %v1859 = vrot.slane %v1851, 3
    %v1860 = vrot.slane %v1852, 3
    %v1865 = vadd.f32 %v1843, %v1857
    %v1866 = vadd.f32 %v1844, %v1858
    %v1867 = vadd.f32 %v1845, %v1859
    %v1868 = vadd.f32 %v1846, %v1860
    %s1869 = sld [smem:[#allocation3 + $0x5c]]
    %v1870 = vstv %s1869
    %v1871 = vmul.f32 %v1870, %v198
    %v1872 = vmul.f32 %v1870, %v199
    %v1873 = vmul.f32 %v1870, %v200
    %v1874 = vmul.f32 %v1870, %v201
    %v1879 = vrot.slane %v1871, 4
    %v1880 = vrot.slane %v1872, 4
    %v1881 = vrot.slane %v1873, 4
    %v1882 = vrot.slane %v1874, 4
    %v1887 = vadd.f32 %v1865, %v1879
    %v1888 = vadd.f32 %v1866, %v1880
    %v1889 = vadd.f32 %v1867, %v1881
    %v1890 = vadd.f32 %v1868, %v1882
    %s1891 = sld [smem:[#allocation3 + $0x65]]
    %v1892 = vstv %s1891
    %v1893 = vmul.f32 %v1892, %v198
    %v1894 = vmul.f32 %v1892, %v199
    %v1895 = vmul.f32 %v1892, %v200
    %v1896 = vmul.f32 %v1892, %v201
    %v1901 = vrot.slane %v1893, 5
    %v1902 = vrot.slane %v1894, 5
    %v1903 = vrot.slane %v1895, 5
    %v1904 = vrot.slane %v1896, 5
    %v1909 = vadd.f32 %v1887, %v1901
    %v1910 = vadd.f32 %v1888, %v1902
    %v1911 = vadd.f32 %v1889, %v1903
    %v1912 = vadd.f32 %v1890, %v1904
    %s1913 = sld [smem:[#allocation3 + $0x39]]
    %v1914 = vstv %s1913
    %v1915 = vmul.f32 %v1914, %v232
    %v1916 = vmul.f32 %v1914, %v233
    %v1917 = vmul.f32 %v1914, %v234
    %v1918 = vmul.f32 %v1914, %v235
    %v1919 = vadd.f32 %v1909, %v1915
    %v1920 = vadd.f32 %v1910, %v1916
    %v1921 = vadd.f32 %v1911, %v1917
    %v1922 = vadd.f32 %v1912, %v1918
    %s1923 = sld [smem:[#allocation3 + $0x42]]
    %v1924 = vstv %s1923
    %v1925 = vmul.f32 %v1924, %v232
    %v1926 = vmul.f32 %v1924, %v233
    %v1927 = vmul.f32 %v1924, %v234
    %v1928 = vmul.f32 %v1924, %v235
    %v1933 = vrot.slane %v1925, 1
    %v1934 = vrot.slane %v1926, 1
    %v1935 = vrot.slane %v1927, 1
    %v1936 = vrot.slane %v1928, 1
    %v1941 = vadd.f32 %v1919, %v1933
    %v1942 = vadd.f32 %v1920, %v1934
    %v1943 = vadd.f32 %v1921, %v1935
    %v1944 = vadd.f32 %v1922, %v1936
    %s1945 = sld [smem:[#allocation3 + $0x4b]]
    %v1946 = vstv %s1945
    %v1947 = vmul.f32 %v1946, %v232
    %v1948 = vmul.f32 %v1946, %v233
    %v1949 = vmul.f32 %v1946, %v234
    %v1950 = vmul.f32 %v1946, %v235
    %v1955 = vrot.slane %v1947, 2
    %v1956 = vrot.slane %v1948, 2
    %v1957 = vrot.slane %v1949, 2
    %v1958 = vrot.slane %v1950, 2
    %v1963 = vadd.f32 %v1941, %v1955
    %v1964 = vadd.f32 %v1942, %v1956
    %v1965 = vadd.f32 %v1943, %v1957
    %v1966 = vadd.f32 %v1944, %v1958
    %s1967 = sld [smem:[#allocation3 + $0x54]]
    %v1968 = vstv %s1967
    %v1969 = vmul.f32 %v1968, %v232
    %v1970 = vmul.f32 %v1968, %v233
    %v1971 = vmul.f32 %v1968, %v234
    %v1972 = vmul.f32 %v1968, %v235
    %v1977 = vrot.slane %v1969, 3
    %v1978 = vrot.slane %v1970, 3
    %v1979 = vrot.slane %v1971, 3
    %v1980 = vrot.slane %v1972, 3
    %v1985 = vadd.f32 %v1963, %v1977
    %v1986 = vadd.f32 %v1964, %v1978
    %v1987 = vadd.f32 %v1965, %v1979
    %v1988 = vadd.f32 %v1966, %v1980
    %s1989 = sld [smem:[#allocation3 + $0x5d]]
    %v1990 = vstv %s1989
    %v1991 = vmul.f32 %v1990, %v232
    %v1992 = vmul.f32 %v1990, %v233
    %v1993 = vmul.f32 %v1990, %v234
    %v1994 = vmul.f32 %v1990, %v235
    %v1999 = vrot.slane %v1991, 4
    %v2000 = vrot.slane %v1992, 4
    %v2001 = vrot.slane %v1993, 4
    %v2002 = vrot.slane %v1994, 4
    %v2007 = vadd.f32 %v1985, %v1999
    %v2008 = vadd.f32 %v1986, %v2000
    %v2009 = vadd.f32 %v1987, %v2001
    %v2010 = vadd.f32 %v1988, %v2002
    %s2011 = sld [smem:[#allocation3 + $0x66]]
    %v2012 = vstv %s2011
    %v2013 = vmul.f32 %v2012, %v232
    %v2014 = vmul.f32 %v2012, %v233
    %v2015 = vmul.f32 %v2012, %v234
    %v2016 = vmul.f32 %v2012, %v235
    %v2021 = vrot.slane %v2013, 5
    %v2022 = vrot.slane %v2014, 5
    %v2023 = vrot.slane %v2015, 5
    %v2024 = vrot.slane %v2016, 5
    %v2029 = vadd.f32 %v2007, %v2021
    %v2030 = vadd.f32 %v2008, %v2022
    %v2031 = vadd.f32 %v2009, %v2023
    %v2032 = vadd.f32 %v2010, %v2024
    %s2033 = sld [smem:[#allocation3 + $0x3a]]
    %v2034 = vstv %s2033
    %v2035 = vmul.f32 %v2034, %v249
    %v2036 = vmul.f32 %v2034, %v250
    %v2037 = vmul.f32 %v2034, %v251
    %v2038 = vmul.f32 %v2034, %v252
    %v2039 = vadd.f32 %v2029, %v2035
    %v2040 = vadd.f32 %v2030, %v2036
    %v2041 = vadd.f32 %v2031, %v2037
    %v2042 = vadd.f32 %v2032, %v2038
    %s2043 = sld [smem:[#allocation3 + $0x43]]
    %v2044 = vstv %s2043
    %v2045 = vmul.f32 %v2044, %v249
    %v2046 = vmul.f32 %v2044, %v250
    %v2047 = vmul.f32 %v2044, %v251
    %v2048 = vmul.f32 %v2044, %v252
    %v2053 = vrot.slane %v2045, 1
    %v2054 = vrot.slane %v2046, 1
    %v2055 = vrot.slane %v2047, 1
    %v2056 = vrot.slane %v2048, 1
    %v2061 = vadd.f32 %v2039, %v2053
    %v2062 = vadd.f32 %v2040, %v2054
    %v2063 = vadd.f32 %v2041, %v2055
    %v2064 = vadd.f32 %v2042, %v2056
    %s2065 = sld [smem:[#allocation3 + $0x4c]]
    %v2066 = vstv %s2065
    %v2067 = vmul.f32 %v2066, %v249
    %v2068 = vmul.f32 %v2066, %v250
    %v2069 = vmul.f32 %v2066, %v251
    %v2070 = vmul.f32 %v2066, %v252
    %v2075 = vrot.slane %v2067, 2
    %v2076 = vrot.slane %v2068, 2
    %v2077 = vrot.slane %v2069, 2
    %v2078 = vrot.slane %v2070, 2
    %v2083 = vadd.f32 %v2061, %v2075
    %v2084 = vadd.f32 %v2062, %v2076
    %v2085 = vadd.f32 %v2063, %v2077
    %v2086 = vadd.f32 %v2064, %v2078
    %s2087 = sld [smem:[#allocation3 + $0x55]]
    %v2088 = vstv %s2087
    %v2089 = vmul.f32 %v2088, %v249
    %v2090 = vmul.f32 %v2088, %v250
    %v2091 = vmul.f32 %v2088, %v251
    %v2092 = vmul.f32 %v2088, %v252
    %v2097 = vrot.slane %v2089, 3
    %v2098 = vrot.slane %v2090, 3
    %v2099 = vrot.slane %v2091, 3
    %v2100 = vrot.slane %v2092, 3
    %v2105 = vadd.f32 %v2083, %v2097
    %v2106 = vadd.f32 %v2084, %v2098
    %v2107 = vadd.f32 %v2085, %v2099
    %v2108 = vadd.f32 %v2086, %v2100
    %s2109 = sld [smem:[#allocation3 + $0x5e]]
    %v2110 = vstv %s2109
    %v2111 = vmul.f32 %v2110, %v249
    %v2112 = vmul.f32 %v2110, %v250
    %v2113 = vmul.f32 %v2110, %v251
    %v2114 = vmul.f32 %v2110, %v252
    %v2119 = vrot.slane %v2111, 4
    %v2120 = vrot.slane %v2112, 4
    %v2121 = vrot.slane %v2113, 4
    %v2122 = vrot.slane %v2114, 4
    %v2127 = vadd.f32 %v2105, %v2119
    %v2128 = vadd.f32 %v2106, %v2120
    %v2129 = vadd.f32 %v2107, %v2121
    %v2130 = vadd.f32 %v2108, %v2122
    %s2131 = sld [smem:[#allocation3 + $0x67]]
    %v2132 = vstv %s2131
    %v2133 = vmul.f32 %v2132, %v249
    %v2134 = vmul.f32 %v2132, %v250
    %v2135 = vmul.f32 %v2132, %v251
    %v2136 = vmul.f32 %v2132, %v252
    %v2141 = vrot.slane %v2133, 5
    %v2142 = vrot.slane %v2134, 5
    %v2143 = vrot.slane %v2135, 5
    %v2144 = vrot.slane %v2136, 5
    %v2149 = vadd.f32 %v2127, %v2141
    %v2150 = vadd.f32 %v2128, %v2142
    %v2151 = vadd.f32 %v2129, %v2143
    %v2152 = vadd.f32 %v2130, %v2144
    %s2153 = sld [smem:[#allocation3 + $0x3b]]
    %v2154 = vstv %s2153
    %v2155 = vmul.f32 %v2154, %v283
    %v2156 = vmul.f32 %v2154, %v284
    %v2157 = vmul.f32 %v2154, %v285
    %v2158 = vmul.f32 %v2154, %v286
    %v2159 = vadd.f32 %v2149, %v2155
    %v2160 = vadd.f32 %v2150, %v2156
    %v2161 = vadd.f32 %v2151, %v2157
    %v2162 = vadd.f32 %v2152, %v2158
    %s2163 = sld [smem:[#allocation3 + $0x44]]
    %v2164 = vstv %s2163
    %v2165 = vmul.f32 %v2164, %v283
    %v2166 = vmul.f32 %v2164, %v284
    %v2167 = vmul.f32 %v2164, %v285
    %v2168 = vmul.f32 %v2164, %v286
    %v2173 = vrot.slane %v2165, 1
    %v2174 = vrot.slane %v2166, 1
    %v2175 = vrot.slane %v2167, 1
    %v2176 = vrot.slane %v2168, 1
    %v2181 = vadd.f32 %v2159, %v2173
    %v2182 = vadd.f32 %v2160, %v2174
    %v2183 = vadd.f32 %v2161, %v2175
    %v2184 = vadd.f32 %v2162, %v2176
    %s2185 = sld [smem:[#allocation3 + $0x4d]]
    %v2186 = vstv %s2185
    %v2187 = vmul.f32 %v2186, %v283
    %v2188 = vmul.f32 %v2186, %v284
    %v2189 = vmul.f32 %v2186, %v285
    %v2190 = vmul.f32 %v2186, %v286
    %v2195 = vrot.slane %v2187, 2
    %v2196 = vrot.slane %v2188, 2
    %v2197 = vrot.slane %v2189, 2
    %v2198 = vrot.slane %v2190, 2
    %v2203 = vadd.f32 %v2181, %v2195
    %v2204 = vadd.f32 %v2182, %v2196
    %v2205 = vadd.f32 %v2183, %v2197
    %v2206 = vadd.f32 %v2184, %v2198
    %s2207 = sld [smem:[#allocation3 + $0x56]]
    %v2208 = vstv %s2207
    %v2209 = vmul.f32 %v2208, %v283
    %v2210 = vmul.f32 %v2208, %v284
    %v2211 = vmul.f32 %v2208, %v285
    %v2212 = vmul.f32 %v2208, %v286
    %v2217 = vrot.slane %v2209, 3
    %v2218 = vrot.slane %v2210, 3
    %v2219 = vrot.slane %v2211, 3
    %v2220 = vrot.slane %v2212, 3
    %v2225 = vadd.f32 %v2203, %v2217
    %v2226 = vadd.f32 %v2204, %v2218
    %v2227 = vadd.f32 %v2205, %v2219
    %v2228 = vadd.f32 %v2206, %v2220
    %s2229 = sld [smem:[#allocation3 + $0x5f]]
    %v2230 = vstv %s2229
    %v2231 = vmul.f32 %v2230, %v283
    %v2232 = vmul.f32 %v2230, %v284
    %v2233 = vmul.f32 %v2230, %v285
    %v2234 = vmul.f32 %v2230, %v286
    %v2239 = vrot.slane %v2231, 4
    %v2240 = vrot.slane %v2232, 4
    %v2241 = vrot.slane %v2233, 4
    %v2242 = vrot.slane %v2234, 4
    %v2247 = vadd.f32 %v2225, %v2239
    %v2248 = vadd.f32 %v2226, %v2240
    %v2249 = vadd.f32 %v2227, %v2241
    %v2250 = vadd.f32 %v2228, %v2242
    %s2251 = sld [smem:[#allocation3 + $0x68]]
    %v2252 = vstv %s2251
    %v2253 = vmul.f32 %v2252, %v283
    %v2254 = vmul.f32 %v2252, %v284
    %v2255 = vmul.f32 %v2252, %v285
    %v2256 = vmul.f32 %v2252, %v286
    %v2261 = vrot.slane %v2253, 5
    %v2262 = vrot.slane %v2254, 5
    %v2263 = vrot.slane %v2255, 5
    %v2264 = vrot.slane %v2256, 5
    %v2269 = vadd.f32 %v2247, %v2261
    %v2270 = vadd.f32 %v2248, %v2262
    %v2271 = vadd.f32 %v2249, %v2263
    %v2272 = vadd.f32 %v2250, %v2264
    %s2273 = sld [smem:[#allocation3 + $0x3c]]
    %v2274 = vstv %s2273
    %v2275 = vmul.f32 %v2274, %v317
    %v2276 = vmul.f32 %v2274, %v318
    %v2277 = vmul.f32 %v2274, %v319
    %v2278 = vmul.f32 %v2274, %v320
    %v2279 = vadd.f32 %v2269, %v2275
    %v2280 = vadd.f32 %v2270, %v2276
    %v2281 = vadd.f32 %v2271, %v2277
    %v2282 = vadd.f32 %v2272, %v2278
    %s2283 = sld [smem:[#allocation3 + $0x45]]
    %v2284 = vstv %s2283
    %v2285 = vmul.f32 %v2284, %v317
    %v2286 = vmul.f32 %v2284, %v318
    %v2287 = vmul.f32 %v2284, %v319
    %v2288 = vmul.f32 %v2284, %v320
    %v2293 = vrot.slane %v2285, 1
    %v2294 = vrot.slane %v2286, 1
    %v2295 = vrot.slane %v2287, 1
    %v2296 = vrot.slane %v2288, 1
    %v2301 = vadd.f32 %v2279, %v2293
    %v2302 = vadd.f32 %v2280, %v2294
    %v2303 = vadd.f32 %v2281, %v2295
    %v2304 = vadd.f32 %v2282, %v2296
    %s2305 = sld [smem:[#allocation3 + $0x4e]]
    %v2306 = vstv %s2305
    %v2307 = vmul.f32 %v2306, %v317
    %v2308 = vmul.f32 %v2306, %v318
    %v2309 = vmul.f32 %v2306, %v319
    %v2310 = vmul.f32 %v2306, %v320
    %v2315 = vrot.slane %v2307, 2
    %v2316 = vrot.slane %v2308, 2
    %v2317 = vrot.slane %v2309, 2
    %v2318 = vrot.slane %v2310, 2
    %v2323 = vadd.f32 %v2301, %v2315
    %v2324 = vadd.f32 %v2302, %v2316
    %v2325 = vadd.f32 %v2303, %v2317
    %v2326 = vadd.f32 %v2304, %v2318
    %s2327 = sld [smem:[#allocation3 + $0x57]]
    %v2328 = vstv %s2327
    %v2329 = vmul.f32 %v2328, %v317
    %v2330 = vmul.f32 %v2328, %v318
    %v2331 = vmul.f32 %v2328, %v319
    %v2332 = vmul.f32 %v2328, %v320
    %v2337 = vrot.slane %v2329, 3
    %v2338 = vrot.slane %v2330, 3
    %v2339 = vrot.slane %v2331, 3
    %v2340 = vrot.slane %v2332, 3
    %v2345 = vadd.f32 %v2323, %v2337
    %v2346 = vadd.f32 %v2324, %v2338
    %v2347 = vadd.f32 %v2325, %v2339
    %v2348 = vadd.f32 %v2326, %v2340
    %s2349 = sld [smem:[#allocation3 + $0x60]]
    %v2350 = vstv %s2349
    %v2351 = vmul.f32 %v2350, %v317
    %v2352 = vmul.f32 %v2350, %v318
    %v2353 = vmul.f32 %v2350, %v319
    %v2354 = vmul.f32 %v2350, %v320
    %v2359 = vrot.slane %v2351, 4
    %v2360 = vrot.slane %v2352, 4
    %v2361 = vrot.slane %v2353, 4
    %v2362 = vrot.slane %v2354, 4
    %v2367 = vadd.f32 %v2345, %v2359
    %v2368 = vadd.f32 %v2346, %v2360
    %v2369 = vadd.f32 %v2347, %v2361
    %v2370 = vadd.f32 %v2348, %v2362
    %s2371 = sld [smem:[#allocation3 + $0x69]]
    %v2372 = vstv %s2371
    %v2373 = vmul.f32 %v2372, %v317
    %v2374 = vmul.f32 %v2372, %v318
    %v2375 = vmul.f32 %v2372, %v319
    %v2376 = vmul.f32 %v2372, %v320
    %v2381 = vrot.slane %v2373, 5
    %v2382 = vrot.slane %v2374, 5
    %v2383 = vrot.slane %v2375, 5
    %v2384 = vrot.slane %v2376, 5
    %v2389 = vadd.f32 %v2367, %v2381
    %v2390 = vadd.f32 %v2368, %v2382
    %v2391 = vadd.f32 %v2369, %v2383
    %v2392 = vadd.f32 %v2370, %v2384
    %s2393 = sld [smem:[#allocation3 + $0x3d]]
    %v2394 = vstv %s2393
    %v2395 = vmul.f32 %v2394, %v351
    %v2396 = vmul.f32 %v2394, %v352
    %v2397 = vmul.f32 %v2394, %v353
    %v2398 = vmul.f32 %v2394, %v354
    %v2399 = vadd.f32 %v2389, %v2395
    %v2400 = vadd.f32 %v2390, %v2396
    %v2401 = vadd.f32 %v2391, %v2397
    %v2402 = vadd.f32 %v2392, %v2398
    %s2403 = sld [smem:[#allocation3 + $0x46]]
    %v2404 = vstv %s2403
    %v2405 = vmul.f32 %v2404, %v351
    %v2406 = vmul.f32 %v2404, %v352
    %v2407 = vmul.f32 %v2404, %v353
    %v2408 = vmul.f32 %v2404, %v354
    %v2413 = vrot.slane %v2405, 1
    %v2414 = vrot.slane %v2406, 1
    %v2415 = vrot.slane %v2407, 1
    %v2416 = vrot.slane %v2408, 1
    %v2421 = vadd.f32 %v2399, %v2413
    %v2422 = vadd.f32 %v2400, %v2414
    %v2423 = vadd.f32 %v2401, %v2415
    %v2424 = vadd.f32 %v2402, %v2416
    %s2425 = sld [smem:[#allocation3 + $0x4f]]
    %v2426 = vstv %s2425
    %v2427 = vmul.f32 %v2426, %v351
    %v2428 = vmul.f32 %v2426, %v352
    %v2429 = vmul.f32 %v2426, %v353
    %v2430 = vmul.f32 %v2426, %v354
    %v2435 = vrot.slane %v2427, 2
    %v2436 = vrot.slane %v2428, 2
    %v2437 = vrot.slane %v2429, 2
    %v2438 = vrot.slane %v2430, 2
    %v2443 = vadd.f32 %v2421, %v2435
    %v2444 = vadd.f32 %v2422, %v2436
    %v2445 = vadd.f32 %v2423, %v2437
    %v2446 = vadd.f32 %v2424, %v2438
    %s2447 = sld [smem:[#allocation3 + $0x58]]
    %v2448 = vstv %s2447
    %v2449 = vmul.f32 %v2448, %v351
    %v2450 = vmul.f32 %v2448, %v352
    %v2451 = vmul.f32 %v2448, %v353
    %v2452 = vmul.f32 %v2448, %v354
    %v2457 = vrot.slane %v2449, 3
    %v2458 = vrot.slane %v2450, 3
    %v2459 = vrot.slane %v2451, 3
    %v2460 = vrot.slane %v2452, 3
    %v2465 = vadd.f32 %v2443, %v2457
    %v2466 = vadd.f32 %v2444, %v2458
    %v2467 = vadd.f32 %v2445, %v2459
    %v2468 = vadd.f32 %v2446, %v2460
    %s2469 = sld [smem:[#allocation3 + $0x61]]
    %v2470 = vstv %s2469
    %v2471 = vmul.f32 %v2470, %v351
    %v2472 = vmul.f32 %v2470, %v352
    %v2473 = vmul.f32 %v2470, %v353
    %v2474 = vmul.f32 %v2470, %v354
    %v2479 = vrot.slane %v2471, 4
    %v2480 = vrot.slane %v2472, 4
    %v2481 = vrot.slane %v2473, 4
    %v2482 = vrot.slane %v2474, 4
    %v2487 = vadd.f32 %v2465, %v2479
    %v2488 = vadd.f32 %v2466, %v2480
    %v2489 = vadd.f32 %v2467, %v2481
    %v2490 = vadd.f32 %v2468, %v2482
    %s2491 = sld [smem:[#allocation3 + $0x6a]]
    %v2492 = vstv %s2491
    %v2493 = vmul.f32 %v2492, %v351
    %v2494 = vmul.f32 %v2492, %v352
    %v2495 = vmul.f32 %v2492, %v353
    %v2496 = vmul.f32 %v2492, %v354
    %v2501 = vrot.slane %v2493, 5
    %v2502 = vrot.slane %v2494, 5
    %v2503 = vrot.slane %v2495, 5
    %v2504 = vrot.slane %v2496, 5
    %v2509 = vadd.f32 %v2487, %v2501
    %v2510 = vadd.f32 %v2488, %v2502
    %v2511 = vadd.f32 %v2489, %v2503
    %v2512 = vadd.f32 %v2490, %v2504
    %s2513 = sld [smem:[#allocation3 + $0x3e]]
    %v2514 = vstv %s2513
    %v2515 = vmul.f32 %v2514, %v385
    %v2516 = vmul.f32 %v2514, %v386
    %v2517 = vmul.f32 %v2514, %v387
    %v2518 = vmul.f32 %v2514, %v388
    %v2519 = vadd.f32 %v2509, %v2515
    %v2520 = vadd.f32 %v2510, %v2516
    %v2521 = vadd.f32 %v2511, %v2517
    %v2522 = vadd.f32 %v2512, %v2518
    %s2523 = sld [smem:[#allocation3 + $0x47]]
    %v2524 = vstv %s2523
    %v2525 = vmul.f32 %v2524, %v385
    %v2526 = vmul.f32 %v2524, %v386
    %v2527 = vmul.f32 %v2524, %v387
    %v2528 = vmul.f32 %v2524, %v388
    %v2533 = vrot.slane %v2525, 1
    %v2534 = vrot.slane %v2526, 1
    %v2535 = vrot.slane %v2527, 1
    %v2536 = vrot.slane %v2528, 1
    %v2541 = vadd.f32 %v2519, %v2533
    %v2542 = vadd.f32 %v2520, %v2534
    %v2543 = vadd.f32 %v2521, %v2535
    %v2544 = vadd.f32 %v2522, %v2536
    %s2545 = sld [smem:[#allocation3 + $0x50]]
    %v2546 = vstv %s2545
    %v2547 = vmul.f32 %v2546, %v385
    %v2548 = vmul.f32 %v2546, %v386
    %v2549 = vmul.f32 %v2546, %v387
    %v2550 = vmul.f32 %v2546, %v388
    %v2555 = vrot.slane %v2547, 2
    %v2556 = vrot.slane %v2548, 2
    %v2557 = vrot.slane %v2549, 2
    %v2558 = vrot.slane %v2550, 2
    %v2563 = vadd.f32 %v2541, %v2555
    %v2564 = vadd.f32 %v2542, %v2556
    %v2565 = vadd.f32 %v2543, %v2557
    %v2566 = vadd.f32 %v2544, %v2558
    %s2567 = sld [smem:[#allocation3 + $0x59]]
    %v2568 = vstv %s2567
    %v2569 = vmul.f32 %v2568, %v385
    %v2570 = vmul.f32 %v2568, %v386
    %v2571 = vmul.f32 %v2568, %v387
    %v2572 = vmul.f32 %v2568, %v388
    %v2577 = vrot.slane %v2569, 3
    %v2578 = vrot.slane %v2570, 3
    %v2579 = vrot.slane %v2571, 3
    %v2580 = vrot.slane %v2572, 3
    %v2585 = vadd.f32 %v2563, %v2577
    %v2586 = vadd.f32 %v2564, %v2578
    %v2587 = vadd.f32 %v2565, %v2579
    %v2588 = vadd.f32 %v2566, %v2580
    %s2589 = sld [smem:[#allocation3 + $0x62]]
    %v2590 = vstv %s2589
    %v2591 = vmul.f32 %v2590, %v385
    %v2592 = vmul.f32 %v2590, %v386
    %v2593 = vmul.f32 %v2590, %v387
    %v2594 = vmul.f32 %v2590, %v388
    %v2599 = vrot.slane %v2591, 4
    %v2600 = vrot.slane %v2592, 4
    %v2601 = vrot.slane %v2593, 4
    %v2602 = vrot.slane %v2594, 4
    %v2607 = vadd.f32 %v2585, %v2599
    %v2608 = vadd.f32 %v2586, %v2600
    %v2609 = vadd.f32 %v2587, %v2601
    %v2610 = vadd.f32 %v2588, %v2602
    %s2611 = sld [smem:[#allocation3 + $0x6b]]
    %v2612 = vstv %s2611
    %v2613 = vmul.f32 %v2612, %v385
    %v2614 = vmul.f32 %v2612, %v386
    %v2615 = vmul.f32 %v2612, %v387
    %v2616 = vmul.f32 %v2612, %v388
    %v2621 = vrot.slane %v2613, 5
    %v2622 = vrot.slane %v2614, 5
    %v2623 = vrot.slane %v2615, 5
    %v2624 = vrot.slane %v2616, 5
    %v2629 = vadd.f32 %v2607, %v2621
    %v2630 = vadd.f32 %v2608, %v2622
    %v2631 = vadd.f32 %v2609, %v2623
    %v2632 = vadd.f32 %v2610, %v2624
    %v2637 = vrot.slane %v2631, 7
    %v2638 = vsel %vm1477, %v2637, %v2629
    %v2639 = vrot.slane %v2632, 7
    %v2640 = vsel %vm1477, %v2639, %v2630
    %v2643 = vsel %vm1483, %v2638, 0.0
    %v2644 = vsel %vm1483, %v2640, 0.0
    %v2645 = vadd.f32 %v2643, %v2644
    %2646 = vadd.xlane.f32.xlu0 %v2645
    %v2647 = vpop.xlane.xlu0 %2646
    %v2648 = vrot.slane %v2647, 4
    %v2649 = vadd.f32 %v2647, %v2648
    %v2650 = vrot.slane %v2649, 2
    %v2651 = vadd.f32 %v2649, %v2650
    %v2652 = vrot.slane %v2651, 1
    %v2653 = vadd.f32 %v2651, %v2652
    %s2654 = vtos %v2653
    %v2655 = vmul.f32 %v2629, %v2629
    %v2656 = vmul.f32 %v2630, %v2630
    %v2657 = vmul.f32 %v2631, %v2631
    %v2658 = vmul.f32 %v2632, %v2632
    %v2663 = vrot.slane %v2657, 7
    %v2664 = vsel %vm1477, %v2663, %v2655
    %v2665 = vrot.slane %v2658, 7
    %v2666 = vsel %vm1477, %v2665, %v2656
    %v2669 = vsel %vm1483, %v2664, 0.0
    %v2670 = vsel %vm1483, %v2666, 0.0
    %v2671 = vadd.f32 %v2669, %v2670
    %2672 = vadd.xlane.f32.xlu0 %v2671
    %v2673 = vpop.xlane.xlu0 %2672
    %v2674 = vrot.slane %v2673, 4
    %v2675 = vadd.f32 %v2673, %v2674
    %v2676 = vrot.slane %v2675, 2
    %v2677 = vadd.f32 %v2675, %v2676
    %v2678 = vrot.slane %v2677, 1
    %v2679 = vadd.f32 %v2677, %v2678
    %s2680 = vtos %v2679
    %s2681 = smul.f32 %s2654, 0.001953125
    %s2682 = smul.f32 %s2680, 0.001953125
    %s2683 = smul.f32 %s2681, %s2681
    %s2684 = ssub.f32 %s2682, %s2683
    %s2685 = smax.f32 %s2684, 0.0
    %s2686 = sld [smem:[#allocation7 + $0x1]]
    %s2687 = sadd.f32 %s2685, 1e-05
    %v2688 = vstv %s2687
    %v2689 = vrsqrt.pop %v2688
    %s2690 = vtos %v2689
    %s2691 = smul.f32 %s2686, %s2690
    %s2692 = sld [smem:[#allocation8 + $0x1]]
    %s2693 = smul.f32 %s2681, %s2691
    %s2694 = ssub.f32 %s2692, %s2693
    %v2695 = vstv %s2691
    %v2696 = vmul.f32 %v2629, %v2695
    %v2697 = vmul.f32 %v2630, %v2695
    %v2698 = vmul.f32 %v2631, %v2695
    %v2699 = vmul.f32 %v2632, %v2695
    %v2700 = vstv %s2694
    %v2701 = vadd.f32 %v2696, %v2700
    %v2702 = vadd.f32 %v2697, %v2700
    %v2703 = vadd.f32 %v2698, %v2700
    %v2704 = vadd.f32 %v2699, %v2700
    %v2705 = vmax.f32 %v2701, 0.0
    %v2706 = vmax.f32 %v2702, 0.0
    %v2707 = vmax.f32 %v2703, 0.0
    %v2708 = vmax.f32 %v2704, 0.0
    %s2709 = sld [smem:[#allocation5 + $0x2]]
    %v2710 = vstv %s2709
    %v2711 = vadd.f32 %v2710, 0.0
    %s2712 = sld [smem:[#allocation3 + $0x6c]]
    %v2713 = vstv %s2712
    %v2714 = vmul.f32 %v2713, %v130
    %v2715 = vmul.f32 %v2713, %v131
    %v2716 = vmul.f32 %v2713, %v132
    %v2717 = vmul.f32 %v2713, %v133
    %v2718 = vadd.f32 %v2711, %v2714
    %v2719 = vadd.f32 %v2711, %v2715
    %v2720 = vadd.f32 %v2711, %v2716
    %v2721 = vadd.f32 %v2711, %v2717
    %s2722 = sld [smem:[#allocation3 + $0x75]]
    %v2723 = vstv %s2722
    %v2724 = vmul.f32 %v2723, %v130
    %v2725 = vmul.f32 %v2723, %v131
    %v2726 = vmul.f32 %v2723, %v132
    %v2727 = vmul.f32 %v2723, %v133
    %v2732 = vrot.slane %v2724, 1
    %v2733 = vrot.slane %v2725, 1
    %v2734 = vrot.slane %v2726, 1
    %v2735 = vrot.slane %v2727, 1
    %v2740 = vadd.f32 %v2718, %v2732
    %v2741 = vadd.f32 %v2719, %v2733
    %v2742 = vadd.f32 %v2720, %v2734
    %v2743 = vadd.f32 %v2721, %v2735
    %s2744 = sld [smem:[#allocation3 + $0x7e]]
    %v2745 = vstv %s2744
    %v2746 = vmul.f32 %v2745, %v130
    %v2747 = vmul.f32 %v2745, %v131
    %v2748 = vmul.f32 %v2745, %v132
    %v2749 = vmul.f32 %v2745, %v133
    %v2754 = vrot.slane %v2746, 2
    %v2755 = vrot.slane %v2747, 2
    %v2756 = vrot.slane %v2748, 2
    %v2757 = vrot.slane %v2749, 2
    %v2762 = vadd.f32 %v2740, %v2754
    %v2763 = vadd.f32 %v2741, %v2755
    %v2764 = vadd.f32 %v2742, %v2756
    %v2765 = vadd.f32 %v2743, %v2757
    %s2766 = sld [smem:[#allocation3 + $0x87]]
    %v2767 = vstv %s2766
    %v2768 = vmul.f32 %v2767, %v130
    %v2769 = vmul.f32 %v2767, %v131
    %v2770 = vmul.f32 %v2767, %v132
    %v2771 = vmul.f32 %v2767, %v133
    %v2776 = vrot.slane %v2768, 3
    %v2777 = vrot.slane %v2769, 3
    %v2778 = vrot.slane %v2770, 3
    %v2779 = vrot.slane %v2771, 3
    %v2784 = vadd.f32 %v2762, %v2776
    %v2785 = vadd.f32 %v2763, %v2777
    %v2786 = vadd.f32 %v2764, %v2778
    %v2787 = vadd.f32 %v2765, %v2779
    %s2788 = sld [smem:[#allocation3 + $0x90]]
    %v2789 = vstv %s2788
    %v2790 = vmul.f32 %v2789, %v130
    %v2791 = vmul.f32 %v2789, %v131
    %v2792 = vmul.f32 %v2789, %v132
    %v2793 = vmul.f32 %v2789, %v133
    %v2798 = vrot.slane %v2790, 4
    %v2799 = vrot.slane %v2791, 4
    %v2800 = vrot.slane %v2792, 4
    %v2801 = vrot.slane %v2793, 4
    %v2806 = vadd.f32 %v2784, %v2798
    %v2807 = vadd.f32 %v2785, %v2799
    %v2808 = vadd.f32 %v2786, %v2800
    %v2809 = vadd.f32 %v2787, %v2801
    %s2810 = sld [smem:[#allocation3 + $0x99]]
    %v2811 = vstv %s2810
    %v2812 = vmul.f32 %v2811, %v130
    %v2813 = vmul.f32 %v2811, %v131
    %v2814 = vmul.f32 %v2811, %v132
    %v2815 = vmul.f32 %v2811, %v133
    %v2820 = vrot.slane %v2812, 5
    %v2821 = vrot.slane %v2813, 5
    %v2822 = vrot.slane %v2814, 5
    %v2823 = vrot.slane %v2815, 5
    %v2828 = vadd.f32 %v2806, %v2820
    %v2829 = vadd.f32 %v2807, %v2821
    %v2830 = vadd.f32 %v2808, %v2822
    %v2831 = vadd.f32 %v2809, %v2823
    %s2832 = sld [smem:[#allocation3 + $0x6d]]
    %v2833 = vstv %s2832
    %v2834 = vmul.f32 %v2833, %v164
    %v2835 = vmul.f32 %v2833, %v165
    %v2836 = vmul.f32 %v2833, %v166
    %v2837 = vmul.f32 %v2833, %v167
    %v2838 = vadd.f32 %v2828, %v2834
    %v2839 = vadd.f32 %v2829, %v2835
    %v2840 = vadd.f32 %v2830, %v2836
    %v2841 = vadd.f32 %v2831, %v2837
    %s2842 = sld [smem:[#allocation3 + $0x76]]
    %v2843 = vstv %s2842
    %v2844 = vmul.f32 %v2843, %v164
    %v2845 = vmul.f32 %v2843, %v165
    %v2846 = vmul.f32 %v2843, %v166
    %v2847 = vmul.f32 %v2843, %v167
    %v2852 = vrot.slane %v2844, 1
    %v2853 = vrot.slane %v2845, 1
    %v2854 = vrot.slane %v2846, 1
    %v2855 = vrot.slane %v2847, 1
    %v2860 = vadd.f32 %v2838, %v2852
    %v2861 = vadd.f32 %v2839, %v2853
    %v2862 = vadd.f32 %v2840, %v2854
    %v2863 = vadd.f32 %v2841, %v2855
    %s2864 = sld [smem:[#allocation3 + $0x7f]]
    %v2865 = vstv %s2864
    %v2866 = vmul.f32 %v2865, %v164
    %v2867 = vmul.f32 %v2865, %v165
    %v2868 = vmul.f32 %v2865, %v166
    %v2869 = vmul.f32 %v2865, %v167
    %v2874 = vrot.slane %v2866, 2
    %v2875 = vrot.slane %v2867, 2
    %v2876 = vrot.slane %v2868, 2
    %v2877 = vrot.slane %v2869, 2
    %v2882 = vadd.f32 %v2860, %v2874
    %v2883 = vadd.f32 %v2861, %v2875
    %v2884 = vadd.f32 %v2862, %v2876
    %v2885 = vadd.f32 %v2863, %v2877
    %s2886 = sld [smem:[#allocation3 + $0x88]]
    %v2887 = vstv %s2886
    %v2888 = vmul.f32 %v2887, %v164
    %v2889 = vmul.f32 %v2887, %v165
    %v2890 = vmul.f32 %v2887, %v166
    %v2891 = vmul.f32 %v2887, %v167
    %v2896 = vrot.slane %v2888, 3
    %v2897 = vrot.slane %v2889, 3
    %v2898 = vrot.slane %v2890, 3
    %v2899 = vrot.slane %v2891, 3
    %v2904 = vadd.f32 %v2882, %v2896
    %v2905 = vadd.f32 %v2883, %v2897
    %v2906 = vadd.f32 %v2884, %v2898
    %v2907 = vadd.f32 %v2885, %v2899
    %s2908 = sld [smem:[#allocation3 + $0x91]]
    %v2909 = vstv %s2908
    %v2910 = vmul.f32 %v2909, %v164
    %v2911 = vmul.f32 %v2909, %v165
    %v2912 = vmul.f32 %v2909, %v166
    %v2913 = vmul.f32 %v2909, %v167
    %v2918 = vrot.slane %v2910, 4
    %v2919 = vrot.slane %v2911, 4
    %v2920 = vrot.slane %v2912, 4
    %v2921 = vrot.slane %v2913, 4
    %v2926 = vadd.f32 %v2904, %v2918
    %v2927 = vadd.f32 %v2905, %v2919
    %v2928 = vadd.f32 %v2906, %v2920
    %v2929 = vadd.f32 %v2907, %v2921
    %s2930 = sld [smem:[#allocation3 + $0x9a]]
    %v2931 = vstv %s2930
    %v2932 = vmul.f32 %v2931, %v164
    %v2933 = vmul.f32 %v2931, %v165
    %v2934 = vmul.f32 %v2931, %v166
    %v2935 = vmul.f32 %v2931, %v167
    %v2940 = vrot.slane %v2932, 5
    %v2941 = vrot.slane %v2933, 5
    %v2942 = vrot.slane %v2934, 5
    %v2943 = vrot.slane %v2935, 5
    %v2948 = vadd.f32 %v2926, %v2940
    %v2949 = vadd.f32 %v2927, %v2941
    %v2950 = vadd.f32 %v2928, %v2942
    %v2951 = vadd.f32 %v2929, %v2943
    %s2952 = sld [smem:[#allocation3 + $0x6e]]
    %v2953 = vstv %s2952
    %v2954 = vmul.f32 %v2953, %v198
    %v2955 = vmul.f32 %v2953, %v199
    %v2956 = vmul.f32 %v2953, %v200
    %v2957 = vmul.f32 %v2953, %v201
    %v2958 = vadd.f32 %v2948, %v2954
    %v2959 = vadd.f32 %v2949, %v2955
    %v2960 = vadd.f32 %v2950, %v2956
    %v2961 = vadd.f32 %v2951, %v2957
    %s2962 = sld [smem:[#allocation3 + $0x77]]
    %v2963 = vstv %s2962
    %v2964 = vmul.f32 %v2963, %v198
    %v2965 = vmul.f32 %v2963, %v199
    %v2966 = vmul.f32 %v2963, %v200
    %v2967 = vmul.f32 %v2963, %v201
    %v2972 = vrot.slane %v2964, 1
    %v2973 = vrot.slane %v2965, 1
    %v2974 = vrot.slane %v2966, 1
    %v2975 = vrot.slane %v2967, 1
    %v2980 = vadd.f32 %v2958, %v2972
    %v2981 = vadd.f32 %v2959, %v2973
    %v2982 = vadd.f32 %v2960, %v2974
    %v2983 = vadd.f32 %v2961, %v2975
    %s2984 = sld [smem:[#allocation3 + $0x80]]
    %v2985 = vstv %s2984
    %v2986 = vmul.f32 %v2985, %v198
    %v2987 = vmul.f32 %v2985, %v199
    %v2988 = vmul.f32 %v2985, %v200
    %v2989 = vmul.f32 %v2985, %v201
    %v2994 = vrot.slane %v2986, 2
    %v2995 = vrot.slane %v2987, 2
    %v2996 = vrot.slane %v2988, 2
    %v2997 = vrot.slane %v2989, 2
    %v3002 = vadd.f32 %v2980, %v2994
    %v3003 = vadd.f32 %v2981, %v2995
    %v3004 = vadd.f32 %v2982, %v2996
    %v3005 = vadd.f32 %v2983, %v2997
    %s3006 = sld [smem:[#allocation3 + $0x89]]
    %v3007 = vstv %s3006
    %v3008 = vmul.f32 %v3007, %v198
    %v3009 = vmul.f32 %v3007, %v199
    %v3010 = vmul.f32 %v3007, %v200
    %v3011 = vmul.f32 %v3007, %v201
    %v3016 = vrot.slane %v3008, 3
    %v3017 = vrot.slane %v3009, 3
    %v3018 = vrot.slane %v3010, 3
    %v3019 = vrot.slane %v3011, 3
    %v3024 = vadd.f32 %v3002, %v3016
    %v3025 = vadd.f32 %v3003, %v3017
    %v3026 = vadd.f32 %v3004, %v3018
    %v3027 = vadd.f32 %v3005, %v3019
    %s3028 = sld [smem:[#allocation3 + $0x92]]
    %v3029 = vstv %s3028
    %v3030 = vmul.f32 %v3029, %v198
    %v3031 = vmul.f32 %v3029, %v199
    %v3032 = vmul.f32 %v3029, %v200
    %v3033 = vmul.f32 %v3029, %v201
    %v3038 = vrot.slane %v3030, 4
    %v3039 = vrot.slane %v3031, 4
    %v3040 = vrot.slane %v3032, 4
    %v3041 = vrot.slane %v3033, 4
    %v3046 = vadd.f32 %v3024, %v3038
    %v3047 = vadd.f32 %v3025, %v3039
    %v3048 = vadd.f32 %v3026, %v3040
    %v3049 = vadd.f32 %v3027, %v3041
    %s3050 = sld [smem:[#allocation3 + $0x9b]]
    %v3051 = vstv %s3050
    %v3052 = vmul.f32 %v3051, %v198
    %v3053 = vmul.f32 %v3051, %v199
    %v3054 = vmul.f32 %v3051, %v200
    %v3055 = vmul.f32 %v3051, %v201
    %v3060 = vrot.slane %v3052, 5
    %v3061 = vrot.slane %v3053, 5
    %v3062 = vrot.slane %v3054, 5
    %v3063 = vrot.slane %v3055, 5
    %v3068 = vadd.f32 %v3046, %v3060
    %v3069 = vadd.f32 %v3047, %v3061
    %v3070 = vadd.f32 %v3048, %v3062
    %v3071 = vadd.f32 %v3049, %v3063
    %s3072 = sld [smem:[#allocation3 + $0x6f]]
    %v3073 = vstv %s3072
    %v3074 = vmul.f32 %v3073, %v232
    %v3075 = vmul.f32 %v3073, %v233
    %v3076 = vmul.f32 %v3073, %v234
    %v3077 = vmul.f32 %v3073, %v235
    %v3078 = vadd.f32 %v3068, %v3074
    %v3079 = vadd.f32 %v3069, %v3075
    %v3080 = vadd.f32 %v3070, %v3076
    %v3081 = vadd.f32 %v3071, %v3077
    %s3082 = sld [smem:[#allocation3 + $0x78]]
    %v3083 = vstv %s3082
    %v3084 = vmul.f32 %v3083, %v232
    %v3085 = vmul.f32 %v3083, %v233
    %v3086 = vmul.f32 %v3083, %v234
    %v3087 = vmul.f32 %v3083, %v235
    %v3092 = vrot.slane %v3084, 1
    %v3093 = vrot.slane %v3085, 1
    %v3094 = vrot.slane %v3086, 1
    %v3095 = vrot.slane %v3087, 1
    %v3100 = vadd.f32 %v3078, %v3092
    %v3101 = vadd.f32 %v3079, %v3093
    %v3102 = vadd.f32 %v3080, %v3094
    %v3103 = vadd.f32 %v3081, %v3095
    %s3104 = sld [smem:[#allocation3 + $0x81]]
    %v3105 = vstv %s3104
    %v3106 = vmul.f32 %v3105, %v232
    %v3107 = vmul.f32 %v3105, %v233
    %v3108 = vmul.f32 %v3105, %v234
    %v3109 = vmul.f32 %v3105, %v235
    %v3114 = vrot.slane %v3106, 2
    %v3115 = vrot.slane %v3107, 2
    %v3116 = vrot.slane %v3108, 2
    %v3117 = vrot.slane %v3109, 2
    %v3122 = vadd.f32 %v3100, %v3114
    %v3123 = vadd.f32 %v3101, %v3115
    %v3124 = vadd.f32 %v3102, %v3116
    %v3125 = vadd.f32 %v3103, %v3117
    %s3126 = sld [smem:[#allocation3 + $0x8a]]
    %v3127 = vstv %s3126
    %v3128 = vmul.f32 %v3127, %v232
    %v3129 = vmul.f32 %v3127, %v233
    %v3130 = vmul.f32 %v3127, %v234
    %v3131 = vmul.f32 %v3127, %v235
    %v3136 = vrot.slane %v3128, 3
    %v3137 = vrot.slane %v3129, 3
    %v3138 = vrot.slane %v3130, 3
    %v3139 = vrot.slane %v3131, 3
    %v3144 = vadd.f32 %v3122, %v3136
    %v3145 = vadd.f32 %v3123, %v3137
    %v3146 = vadd.f32 %v3124, %v3138
    %v3147 = vadd.f32 %v3125, %v3139
    %s3148 = sld [smem:[#allocation3 + $0x93]]
    %v3149 = vstv %s3148
    %v3150 = vmul.f32 %v3149, %v232
    %v3151 = vmul.f32 %v3149, %v233
    %v3152 = vmul.f32 %v3149, %v234
    %v3153 = vmul.f32 %v3149, %v235
    %v3158 = vrot.slane %v3150, 4
    %v3159 = vrot.slane %v3151, 4
    %v3160 = vrot.slane %v3152, 4
    %v3161 = vrot.slane %v3153, 4
    %v3166 = vadd.f32 %v3144, %v3158
    %v3167 = vadd.f32 %v3145, %v3159
    %v3168 = vadd.f32 %v3146, %v3160
    %v3169 = vadd.f32 %v3147, %v3161
    %s3170 = sld [smem:[#allocation3 + $0x9c]]
    %v3171 = vstv %s3170
    %v3172 = vmul.f32 %v3171, %v232
    %v3173 = vmul.f32 %v3171, %v233
    %v3174 = vmul.f32 %v3171, %v234
    %v3175 = vmul.f32 %v3171, %v235
    %v3180 = vrot.slane %v3172, 5
    %v3181 = vrot.slane %v3173, 5
    %v3182 = vrot.slane %v3174, 5
    %v3183 = vrot.slane %v3175, 5
    %v3188 = vadd.f32 %v3166, %v3180
    %v3189 = vadd.f32 %v3167, %v3181
    %v3190 = vadd.f32 %v3168, %v3182
    %v3191 = vadd.f32 %v3169, %v3183
    %s3192 = sld [smem:[#allocation3 + $0x70]]
    %v3193 = vstv %s3192
    %v3194 = vmul.f32 %v3193, %v249
    %v3195 = vmul.f32 %v3193, %v250
    %v3196 = vmul.f32 %v3193, %v251
    %v3197 = vmul.f32 %v3193, %v252
    %v3198 = vadd.f32 %v3188, %v3194
    %v3199 = vadd.f32 %v3189, %v3195
    %v3200 = vadd.f32 %v3190, %v3196
    %v3201 = vadd.f32 %v3191, %v3197
    %s3202 = sld [smem:[#allocation3 + $0x79]]
    %v3203 = vstv %s3202
    %v3204 = vmul.f32 %v3203, %v249
    %v3205 = vmul.f32 %v3203, %v250
    %v3206 = vmul.f32 %v3203, %v251
    %v3207 = vmul.f32 %v3203, %v252
    %v3212 = vrot.slane %v3204, 1
    %v3213 = vrot.slane %v3205, 1
    %v3214 = vrot.slane %v3206, 1
    %v3215 = vrot.slane %v3207, 1
    %v3220 = vadd.f32 %v3198, %v3212
    %v3221 = vadd.f32 %v3199, %v3213
    %v3222 = vadd.f32 %v3200, %v3214
    %v3223 = vadd.f32 %v3201, %v3215
    %s3224 = sld [smem:[#allocation3 + $0x82]]
    %v3225 = vstv %s3224
    %v3226 = vmul.f32 %v3225, %v249
    %v3227 = vmul.f32 %v3225, %v250
    %v3228 = vmul.f32 %v3225, %v251
    %v3229 = vmul.f32 %v3225, %v252
    %v3234 = vrot.slane %v3226, 2
    %v3235 = vrot.slane %v3227, 2
    %v3236 = vrot.slane %v3228, 2
    %v3237 = vrot.slane %v3229, 2
    %v3242 = vadd.f32 %v3220, %v3234
    %v3243 = vadd.f32 %v3221, %v3235
    %v3244 = vadd.f32 %v3222, %v3236
    %v3245 = vadd.f32 %v3223, %v3237
    %s3246 = sld [smem:[#allocation3 + $0x8b]]
    %v3247 = vstv %s3246
    %v3248 = vmul.f32 %v3247, %v249
    %v3249 = vmul.f32 %v3247, %v250
    %v3250 = vmul.f32 %v3247, %v251
    %v3251 = vmul.f32 %v3247, %v252
    %v3256 = vrot.slane %v3248, 3
    %v3257 = vrot.slane %v3249, 3
    %v3258 = vrot.slane %v3250, 3
    %v3259 = vrot.slane %v3251, 3
    %v3264 = vadd.f32 %v3242, %v3256
    %v3265 = vadd.f32 %v3243, %v3257
    %v3266 = vadd.f32 %v3244, %v3258
    %v3267 = vadd.f32 %v3245, %v3259
    %s3268 = sld [smem:[#allocation3 + $0x94]]
    %v3269 = vstv %s3268
    %v3270 = vmul.f32 %v3269, %v249
    %v3271 = vmul.f32 %v3269, %v250
    %v3272 = vmul.f32 %v3269, %v251
    %v3273 = vmul.f32 %v3269, %v252
    %v3278 = vrot.slane %v3270, 4
    %v3279 = vrot.slane %v3271, 4
    %v3280 = vrot.slane %v3272, 4
    %v3281 = vrot.slane %v3273, 4
    %v3286 = vadd.f32 %v3264, %v3278
    %v3287 = vadd.f32 %v3265, %v3279
    %v3288 = vadd.f32 %v3266, %v3280
    %v3289 = vadd.f32 %v3267, %v3281
    %s3290 = sld [smem:[#allocation3 + $0x9d]]
    %v3291 = vstv %s3290
    %v3292 = vmul.f32 %v3291, %v249
    %v3293 = vmul.f32 %v3291, %v250
    %v3294 = vmul.f32 %v3291, %v251
    %v3295 = vmul.f32 %v3291, %v252
    %v3300 = vrot.slane %v3292, 5
    %v3301 = vrot.slane %v3293, 5
    %v3302 = vrot.slane %v3294, 5
    %v3303 = vrot.slane %v3295, 5
    %v3308 = vadd.f32 %v3286, %v3300
    %v3309 = vadd.f32 %v3287, %v3301
    %v3310 = vadd.f32 %v3288, %v3302
    %v3311 = vadd.f32 %v3289, %v3303
    %s3312 = sld [smem:[#allocation3 + $0x71]]
    %v3313 = vstv %s3312
    %v3314 = vmul.f32 %v3313, %v283
    %v3315 = vmul.f32 %v3313, %v284
    %v3316 = vmul.f32 %v3313, %v285
    %v3317 = vmul.f32 %v3313, %v286
    %v3318 = vadd.f32 %v3308, %v3314
    %v3319 = vadd.f32 %v3309, %v3315
    %v3320 = vadd.f32 %v3310, %v3316
    %v3321 = vadd.f32 %v3311, %v3317
    %s3322 = sld [smem:[#allocation3 + $0x7a]]
    %v3323 = vstv %s3322
    %v3324 = vmul.f32 %v3323, %v283
    %v3325 = vmul.f32 %v3323, %v284
    %v3326 = vmul.f32 %v3323, %v285
    %v3327 = vmul.f32 %v3323, %v286
    %v3332 = vrot.slane %v3324, 1
    %v3333 = vrot.slane %v3325, 1
    %v3334 = vrot.slane %v3326, 1
    %v3335 = vrot.slane %v3327, 1
    %v3340 = vadd.f32 %v3318, %v3332
    %v3341 = vadd.f32 %v3319, %v3333
    %v3342 = vadd.f32 %v3320, %v3334
    %v3343 = vadd.f32 %v3321, %v3335
    %s3344 = sld [smem:[#allocation3 + $0x83]]
    %v3345 = vstv %s3344
    %v3346 = vmul.f32 %v3345, %v283
    %v3347 = vmul.f32 %v3345, %v284
    %v3348 = vmul.f32 %v3345, %v285
    %v3349 = vmul.f32 %v3345, %v286
    %v3354 = vrot.slane %v3346, 2
    %v3355 = vrot.slane %v3347, 2
    %v3356 = vrot.slane %v3348, 2
    %v3357 = vrot.slane %v3349, 2
    %v3362 = vadd.f32 %v3340, %v3354
    %v3363 = vadd.f32 %v3341, %v3355
    %v3364 = vadd.f32 %v3342, %v3356
    %v3365 = vadd.f32 %v3343, %v3357
    %s3366 = sld [smem:[#allocation3 + $0x8c]]
    %v3367 = vstv %s3366
    %v3368 = vmul.f32 %v3367, %v283
    %v3369 = vmul.f32 %v3367, %v284
    %v3370 = vmul.f32 %v3367, %v285
    %v3371 = vmul.f32 %v3367, %v286
    %v3376 = vrot.slane %v3368, 3
    %v3377 = vrot.slane %v3369, 3
    %v3378 = vrot.slane %v3370, 3
    %v3379 = vrot.slane %v3371, 3
    %v3384 = vadd.f32 %v3362, %v3376
    %v3385 = vadd.f32 %v3363, %v3377
    %v3386 = vadd.f32 %v3364, %v3378
    %v3387 = vadd.f32 %v3365, %v3379
    %s3388 = sld [smem:[#allocation3 + $0x95]]
    %v3389 = vstv %s3388
    %v3390 = vmul.f32 %v3389, %v283
    %v3391 = vmul.f32 %v3389, %v284
    %v3392 = vmul.f32 %v3389, %v285
    %v3393 = vmul.f32 %v3389, %v286
    %v3398 = vrot.slane %v3390, 4
    %v3399 = vrot.slane %v3391, 4
    %v3400 = vrot.slane %v3392, 4
    %v3401 = vrot.slane %v3393, 4
    %v3406 = vadd.f32 %v3384, %v3398
    %v3407 = vadd.f32 %v3385, %v3399
    %v3408 = vadd.f32 %v3386, %v3400
    %v3409 = vadd.f32 %v3387, %v3401
    %s3410 = sld [smem:[#allocation3 + $0x9e]]
    %v3411 = vstv %s3410
    %v3412 = vmul.f32 %v3411, %v283
    %v3413 = vmul.f32 %v3411, %v284
    %v3414 = vmul.f32 %v3411, %v285
    %v3415 = vmul.f32 %v3411, %v286
    %v3420 = vrot.slane %v3412, 5
    %v3421 = vrot.slane %v3413, 5
    %v3422 = vrot.slane %v3414, 5
    %v3423 = vrot.slane %v3415, 5
    %v3428 = vadd.f32 %v3406, %v3420
    %v3429 = vadd.f32 %v3407, %v3421
    %v3430 = vadd.f32 %v3408, %v3422
    %v3431 = vadd.f32 %v3409, %v3423
    %s3432 = sld [smem:[#allocation3 + $0x72]]
    %v3433 = vstv %s3432
    %v3434 = vmul.f32 %v3433, %v317
    %v3435 = vmul.f32 %v3433, %v318
    %v3436 = vmul.f32 %v3433, %v319
    %v3437 = vmul.f32 %v3433, %v320
    %v3438 = vadd.f32 %v3428, %v3434
    %v3439 = vadd.f32 %v3429, %v3435
    %v3440 = vadd.f32 %v3430, %v3436
    %v3441 = vadd.f32 %v3431, %v3437
    %s3442 = sld [smem:[#allocation3 + $0x7b]]
    %v3443 = vstv %s3442
    %v3444 = vmul.f32 %v3443, %v317
    %v3445 = vmul.f32 %v3443, %v318
    %v3446 = vmul.f32 %v3443, %v319
    %v3447 = vmul.f32 %v3443, %v320
    %v3452 = vrot.slane %v3444, 1
    %v3453 = vrot.slane %v3445, 1
    %v3454 = vrot.slane %v3446, 1
    %v3455 = vrot.slane %v3447, 1
    %v3460 = vadd.f32 %v3438, %v3452
    %v3461 = vadd.f32 %v3439, %v3453
    %v3462 = vadd.f32 %v3440, %v3454
    %v3463 = vadd.f32 %v3441, %v3455
    %s3464 = sld [smem:[#allocation3 + $0x84]]
    %v3465 = vstv %s3464
    %v3466 = vmul.f32 %v3465, %v317
    %v3467 = vmul.f32 %v3465, %v318
    %v3468 = vmul.f32 %v3465, %v319
    %v3469 = vmul.f32 %v3465, %v320
    %v3474 = vrot.slane %v3466, 2
    %v3475 = vrot.slane %v3467, 2
    %v3476 = vrot.slane %v3468, 2
    %v3477 = vrot.slane %v3469, 2
    %v3482 = vadd.f32 %v3460, %v3474
    %v3483 = vadd.f32 %v3461, %v3475
    %v3484 = vadd.f32 %v3462, %v3476
    %v3485 = vadd.f32 %v3463, %v3477
    %s3486 = sld [smem:[#allocation3 + $0x8d]]
    %v3487 = vstv %s3486
    %v3488 = vmul.f32 %v3487, %v317
    %v3489 = vmul.f32 %v3487, %v318
    %v3490 = vmul.f32 %v3487, %v319
    %v3491 = vmul.f32 %v3487, %v320
    %v3496 = vrot.slane %v3488, 3
    %v3497 = vrot.slane %v3489, 3
    %v3498 = vrot.slane %v3490, 3
    %v3499 = vrot.slane %v3491, 3
    %v3504 = vadd.f32 %v3482, %v3496
    %v3505 = vadd.f32 %v3483, %v3497
    %v3506 = vadd.f32 %v3484, %v3498
    %v3507 = vadd.f32 %v3485, %v3499
    %s3508 = sld [smem:[#allocation3 + $0x96]]
    %v3509 = vstv %s3508
    %v3510 = vmul.f32 %v3509, %v317
    %v3511 = vmul.f32 %v3509, %v318
    %v3512 = vmul.f32 %v3509, %v319
    %v3513 = vmul.f32 %v3509, %v320
    %v3518 = vrot.slane %v3510, 4
    %v3519 = vrot.slane %v3511, 4
    %v3520 = vrot.slane %v3512, 4
    %v3521 = vrot.slane %v3513, 4
    %v3526 = vadd.f32 %v3504, %v3518
    %v3527 = vadd.f32 %v3505, %v3519
    %v3528 = vadd.f32 %v3506, %v3520
    %v3529 = vadd.f32 %v3507, %v3521
    %s3530 = sld [smem:[#allocation3 + $0x9f]]
    %v3531 = vstv %s3530
    %v3532 = vmul.f32 %v3531, %v317
    %v3533 = vmul.f32 %v3531, %v318
    %v3534 = vmul.f32 %v3531, %v319
    %v3535 = vmul.f32 %v3531, %v320
    %v3540 = vrot.slane %v3532, 5
    %v3541 = vrot.slane %v3533, 5
    %v3542 = vrot.slane %v3534, 5
    %v3543 = vrot.slane %v3535, 5
    %v3548 = vadd.f32 %v3526, %v3540
    %v3549 = vadd.f32 %v3527, %v3541
    %v3550 = vadd.f32 %v3528, %v3542
    %v3551 = vadd.f32 %v3529, %v3543
    %s3552 = sld [smem:[#allocation3 + $0x73]]
    %v3553 = vstv %s3552
    %v3554 = vmul.f32 %v3553, %v351
    %v3555 = vmul.f32 %v3553, %v352
    %v3556 = vmul.f32 %v3553, %v353
    %v3557 = vmul.f32 %v3553, %v354
    %v3558 = vadd.f32 %v3548, %v3554
    %v3559 = vadd.f32 %v3549, %v3555
    %v3560 = vadd.f32 %v3550, %v3556
    %v3561 = vadd.f32 %v3551, %v3557
    %s3562 = sld [smem:[#allocation3 + $0x7c]]
    %v3563 = vstv %s3562
    %v3564 = vmul.f32 %v3563, %v351
    %v3565 = vmul.f32 %v3563, %v352
    %v3566 = vmul.f32 %v3563, %v353
    %v3567 = vmul.f32 %v3563, %v354
    %v3572 = vrot.slane %v3564, 1
    %v3573 = vrot.slane %v3565, 1
    %v3574 = vrot.slane %v3566, 1
    %v3575 = vrot.slane %v3567, 1
    %v3580 = vadd.f32 %v3558, %v3572
    %v3581 = vadd.f32 %v3559, %v3573
    %v3582 = vadd.f32 %v3560, %v3574
    %v3583 = vadd.f32 %v3561, %v3575
    %s3584 = sld [smem:[#allocation3 + $0x85]]
    %v3585 = vstv %s3584
    %v3586 = vmul.f32 %v3585, %v351
    %v3587 = vmul.f32 %v3585, %v352
    %v3588 = vmul.f32 %v3585, %v353
    %v3589 = vmul.f32 %v3585, %v354
    %v3594 = vrot.slane %v3586, 2
    %v3595 = vrot.slane %v3587, 2
    %v3596 = vrot.slane %v3588, 2
    %v3597 = vrot.slane %v3589, 2
    %v3602 = vadd.f32 %v3580, %v3594
    %v3603 = vadd.f32 %v3581, %v3595
    %v3604 = vadd.f32 %v3582, %v3596
    %v3605 = vadd.f32 %v3583, %v3597
    %s3606 = sld [smem:[#allocation3 + $0x8e]]
    %v3607 = vstv %s3606
    %v3608 = vmul.f32 %v3607, %v351
    %v3609 = vmul.f32 %v3607, %v352
    %v3610 = vmul.f32 %v3607, %v353
    %v3611 = vmul.f32 %v3607, %v354
    %v3616 = vrot.slane %v3608, 3
    %v3617 = vrot.slane %v3609, 3
    %v3618 = vrot.slane %v3610, 3
    %v3619 = vrot.slane %v3611, 3
    %v3624 = vadd.f32 %v3602, %v3616
    %v3625 = vadd.f32 %v3603, %v3617
    %v3626 = vadd.f32 %v3604, %v3618
    %v3627 = vadd.f32 %v3605, %v3619
    %s3628 = sld [smem:[#allocation3 + $0x97]]
    %v3629 = vstv %s3628
    %v3630 = vmul.f32 %v3629, %v351
    %v3631 = vmul.f32 %v3629, %v352
    %v3632 = vmul.f32 %v3629, %v353
    %v3633 = vmul.f32 %v3629, %v354
    %v3638 = vrot.slane %v3630, 4
    %v3639 = vrot.slane %v3631, 4
    %v3640 = vrot.slane %v3632, 4
    %v3641 = vrot.slane %v3633, 4
    %v3646 = vadd.f32 %v3624, %v3638
    %v3647 = vadd.f32 %v3625, %v3639
    %v3648 = vadd.f32 %v3626, %v3640
    %v3649 = vadd.f32 %v3627, %v3641
    %s3650 = sld [smem:[#allocation3 + $0xa0]]
    %v3651 = vstv %s3650
    %v3652 = vmul.f32 %v3651, %v351
    %v3653 = vmul.f32 %v3651, %v352
    %v3654 = vmul.f32 %v3651, %v353
    %v3655 = vmul.f32 %v3651, %v354
    %v3660 = vrot.slane %v3652, 5
    %v3661 = vrot.slane %v3653, 5
    %v3662 = vrot.slane %v3654, 5
    %v3663 = vrot.slane %v3655, 5
    %v3668 = vadd.f32 %v3646, %v3660
    %v3669 = vadd.f32 %v3647, %v3661
    %v3670 = vadd.f32 %v3648, %v3662
    %v3671 = vadd.f32 %v3649, %v3663
    %s3672 = sld [smem:[#allocation3 + $0x74]]
    %v3673 = vstv %s3672
    %v3674 = vmul.f32 %v3673, %v385
    %v3675 = vmul.f32 %v3673, %v386
    %v3676 = vmul.f32 %v3673, %v387
    %v3677 = vmul.f32 %v3673, %v388
    %v3678 = vadd.f32 %v3668, %v3674
    %v3679 = vadd.f32 %v3669, %v3675
    %v3680 = vadd.f32 %v3670, %v3676
    %v3681 = vadd.f32 %v3671, %v3677
    %s3682 = sld [smem:[#allocation3 + $0x7d]]
    %v3683 = vstv %s3682
    %v3684 = vmul.f32 %v3683, %v385
    %v3685 = vmul.f32 %v3683, %v386
    %v3686 = vmul.f32 %v3683, %v387
    %v3687 = vmul.f32 %v3683, %v388
    %v3692 = vrot.slane %v3684, 1
    %v3693 = vrot.slane %v3685, 1
    %v3694 = vrot.slane %v3686, 1
    %v3695 = vrot.slane %v3687, 1
    %v3700 = vadd.f32 %v3678, %v3692
    %v3701 = vadd.f32 %v3679, %v3693
    %v3702 = vadd.f32 %v3680, %v3694
    %v3703 = vadd.f32 %v3681, %v3695
    %s3704 = sld [smem:[#allocation3 + $0x86]]
    %v3705 = vstv %s3704
    %v3706 = vmul.f32 %v3705, %v385
    %v3707 = vmul.f32 %v3705, %v386
    %v3708 = vmul.f32 %v3705, %v387
    %v3709 = vmul.f32 %v3705, %v388
    %v3714 = vrot.slane %v3706, 2
    %v3715 = vrot.slane %v3707, 2
    %v3716 = vrot.slane %v3708, 2
    %v3717 = vrot.slane %v3709, 2
    %v3722 = vadd.f32 %v3700, %v3714
    %v3723 = vadd.f32 %v3701, %v3715
    %v3724 = vadd.f32 %v3702, %v3716
    %v3725 = vadd.f32 %v3703, %v3717
    %s3726 = sld [smem:[#allocation3 + $0x8f]]
    %v3727 = vstv %s3726
    %v3728 = vmul.f32 %v3727, %v385
    %v3729 = vmul.f32 %v3727, %v386
    %v3730 = vmul.f32 %v3727, %v387
    %v3731 = vmul.f32 %v3727, %v388
    %v3736 = vrot.slane %v3728, 3
    %v3737 = vrot.slane %v3729, 3
    %v3738 = vrot.slane %v3730, 3
    %v3739 = vrot.slane %v3731, 3
    %v3744 = vadd.f32 %v3722, %v3736
    %v3745 = vadd.f32 %v3723, %v3737
    %v3746 = vadd.f32 %v3724, %v3738
    %v3747 = vadd.f32 %v3725, %v3739
    %s3748 = sld [smem:[#allocation3 + $0x98]]
    %v3749 = vstv %s3748
    %v3750 = vmul.f32 %v3749, %v385
    %v3751 = vmul.f32 %v3749, %v386
    %v3752 = vmul.f32 %v3749, %v387
    %v3753 = vmul.f32 %v3749, %v388
    %v3758 = vrot.slane %v3750, 4
    %v3759 = vrot.slane %v3751, 4
    %v3760 = vrot.slane %v3752, 4
    %v3761 = vrot.slane %v3753, 4
    %v3766 = vadd.f32 %v3744, %v3758
    %v3767 = vadd.f32 %v3745, %v3759
    %v3768 = vadd.f32 %v3746, %v3760
    %v3769 = vadd.f32 %v3747, %v3761
    %s3770 = sld [smem:[#allocation3 + $0xa1]]
    %v3771 = vstv %s3770
    %v3772 = vmul.f32 %v3771, %v385
    %v3773 = vmul.f32 %v3771, %v386
    %v3774 = vmul.f32 %v3771, %v387
    %v3775 = vmul.f32 %v3771, %v388
    %v3780 = vrot.slane %v3772, 5
    %v3781 = vrot.slane %v3773, 5
    %v3782 = vrot.slane %v3774, 5
    %v3783 = vrot.slane %v3775, 5
    %v3788 = vadd.f32 %v3766, %v3780
    %v3789 = vadd.f32 %v3767, %v3781
    %v3790 = vadd.f32 %v3768, %v3782
    %v3791 = vadd.f32 %v3769, %v3783
    %v3796 = vrot.slane %v3790, 7
    %v3797 = vsel %vm1477, %v3796, %v3788
    %v3798 = vrot.slane %v3791, 7
    %v3799 = vsel %vm1477, %v3798, %v3789
    %v3802 = vsel %vm1483, %v3797, 0.0
    %v3803 = vsel %vm1483, %v3799, 0.0
    %v3804 = vadd.f32 %v3802, %v3803
    %3805 = vadd.xlane.f32.xlu0 %v3804
    %v3806 = vpop.xlane.xlu0 %3805
    %v3807 = vrot.slane %v3806, 4
    %v3808 = vadd.f32 %v3806, %v3807
    %v3809 = vrot.slane %v3808, 2
    %v3810 = vadd.f32 %v3808, %v3809
    %v3811 = vrot.slane %v3810, 1
    %v3812 = vadd.f32 %v3810, %v3811
    %s3813 = vtos %v3812
    %v3814 = vmul.f32 %v3788, %v3788
    %v3815 = vmul.f32 %v3789, %v3789
    %v3816 = vmul.f32 %v3790, %v3790
    %v3817 = vmul.f32 %v3791, %v3791
    %v3822 = vrot.slane %v3816, 7
    %v3823 = vsel %vm1477, %v3822, %v3814
    %v3824 = vrot.slane %v3817, 7
    %v3825 = vsel %vm1477, %v3824, %v3815
    %v3828 = vsel %vm1483, %v3823, 0.0
    %v3829 = vsel %vm1483, %v3825, 0.0
    %v3830 = vadd.f32 %v3828, %v3829
    %3831 = vadd.xlane.f32.xlu0 %v3830
    %v3832 = vpop.xlane.xlu0 %3831
    %v3833 = vrot.slane %v3832, 4
    %v3834 = vadd.f32 %v3832, %v3833
    %v3835 = vrot.slane %v3834, 2
    %v3836 = vadd.f32 %v3834, %v3835
    %v3837 = vrot.slane %v3836, 1
    %v3838 = vadd.f32 %v3836, %v3837
    %s3839 = vtos %v3838
    %s3840 = smul.f32 %s3813, 0.001953125
    %s3841 = smul.f32 %s3839, 0.001953125
    %s3842 = smul.f32 %s3840, %s3840
    %s3843 = ssub.f32 %s3841, %s3842
    %s3844 = smax.f32 %s3843, 0.0
    %s3845 = sld [smem:[#allocation7 + $0x2]]
    %s3846 = sadd.f32 %s3844, 1e-05
    %v3847 = vstv %s3846
    %v3848 = vrsqrt.pop %v3847
    %s3849 = vtos %v3848
    %s3850 = smul.f32 %s3845, %s3849
    %s3851 = sld [smem:[#allocation8 + $0x2]]
    %s3852 = smul.f32 %s3840, %s3850
    %s3853 = ssub.f32 %s3851, %s3852
    %v3854 = vstv %s3850
    %v3855 = vmul.f32 %v3788, %v3854
    %v3856 = vmul.f32 %v3789, %v3854
    %v3857 = vmul.f32 %v3790, %v3854
    %v3858 = vmul.f32 %v3791, %v3854
    %v3859 = vstv %s3853
    %v3860 = vadd.f32 %v3855, %v3859
    %v3861 = vadd.f32 %v3856, %v3859
    %v3862 = vadd.f32 %v3857, %v3859
    %v3863 = vadd.f32 %v3858, %v3859
    %v3864 = vmax.f32 %v3860, 0.0
    %v3865 = vmax.f32 %v3861, 0.0
    %v3866 = vmax.f32 %v3862, 0.0
    %v3867 = vmax.f32 %v3863, 0.0
    %s3868 = sld [smem:[#allocation2]]
    %v3869 = vstv %s3868
    %v3870 = vadd.f32 %v3869, 0.0
    %s3871 = sld [smem:[#allocation10]]
    %v3872 = vstv %s3871
    %v3873 = vmul.f32 %v3872, %v1546
    %v3874 = vmul.f32 %v3872, %v1547
    %v3875 = vmul.f32 %v3872, %v1548
    %v3876 = vmul.f32 %v3872, %v1549
    %v3877 = vadd.f32 %v3870, %v3873
    %v3878 = vadd.f32 %v3870, %v3874
    %v3879 = vadd.f32 %v3870, %v3875
    %v3880 = vadd.f32 %v3870, %v3876
    %s3881 = sld [smem:[#allocation10 + $0x1]]
    %v3882 = vstv %s3881
    %v3883 = vmul.f32 %v3882, %v2705
    %v3884 = vmul.f32 %v3882, %v2706
    %v3885 = vmul.f32 %v3882, %v2707
    %v3886 = vmul.f32 %v3882, %v2708
    %v3887 = vadd.f32 %v3877, %v3883
    %v3888 = vadd.f32 %v3878, %v3884
    %v3889 = vadd.f32 %v3879, %v3885
    %v3890 = vadd.f32 %v3880, %v3886
    %s3891 = sld [smem:[#allocation10 + $0x2]]
    %v3892 = vstv %s3891
    %v3893 = vmul.f32 %v3892, %v3864
    %v3894 = vmul.f32 %v3892, %v3865
    %v3895 = vmul.f32 %v3892, %v3866
    %v3896 = vmul.f32 %v3892, %v3867
    %v3897 = vadd.f32 %v3887, %v3893
    %v3898 = vadd.f32 %v3888, %v3894
    %v3899 = vadd.f32 %v3889, %v3895
    %v3900 = vadd.f32 %v3890, %v3896
    %s3901 = sld [smem:[#allocation10 + $0x3]]
    %v3902 = vstv %s3901
    %v3903 = vmul.f32 %v3902, %v89
    %v3904 = vmul.f32 %v3902, %v90
    %v3905 = vmul.f32 %v3902, %v93
    %v3906 = vmul.f32 %v3902, %v94
    %v3911 = vrot.slane %v3903, 6
    %v3912 = vrot.slane %v3904, 6
    %v3913 = vrot.slane %v3905, 6
    %v3914 = vrot.slane %v3906, 6
    %v3919 = vadd.f32 %v3897, %v3911
    %v3920 = vadd.f32 %v3898, %v3912
    %v3921 = vadd.f32 %v3899, %v3913
    %v3922 = vadd.f32 %v3900, %v3914
    %s3923 = sld [smem:[#allocation10 + $0x4]]
    %v3924 = vstv %s3923
    %v3925 = vmul.f32 %v3924, %v89
    %v3926 = vmul.f32 %v3924, %v90
    %v3927 = vmul.f32 %v3924, %v93
    %v3928 = vmul.f32 %v3924, %v94
    %v3933 = vrot.slane %v3925, 7
    %v3934 = vrot.slane %v3926, 7
    %v3935 = vrot.slane %v3927, 7
    %v3936 = vrot.slane %v3928, 7
    %v3941 = vadd.f32 %v3919, %v3933
    %v3942 = vadd.f32 %v3920, %v3934
    %v3943 = vadd.f32 %v3921, %v3935
    %v3944 = vadd.f32 %v3922, %v3936
    %s3945 = sld [smem:[#allocation10 + $0x5]]
    %v3946 = vstv %s3945
    %v3947 = vmul.f32 %v3946, %v91
    %v3948 = vmul.f32 %v3946, %v92
    %v3949 = vmul.f32 %v3946, %v95
    %v3950 = vmul.f32 %v3946, %v96
    %v3951 = vadd.f32 %v3941, %v3947
    %v3952 = vadd.f32 %v3942, %v3948
    %v3953 = vadd.f32 %v3943, %v3949
    %v3954 = vadd.f32 %v3944, %v3950
    %v3955 = vsub.f32 0.0, %v3951
    %v3956 = vsub.f32 0.0, %v3952
    %v3957 = vsub.f32 0.0, %v3953
    %v3958 = vsub.f32 0.0, %v3954
    %v3959 = vmul.f32 %v3955, 1.442695
    %v3960 = vpow.pop %v3959
    %v3961 = vmul.f32 %v3956, 1.442695
    %v3962 = vpow.pop %v3961
    %v3963 = vmul.f32 %v3957, 1.442695
    %v3964 = vpow.pop %v3963
    %v3965 = vmul.f32 %v3958, 1.442695
    %v3966 = vpow.pop %v3965
    %v3967 = vadd.f32 %v3960, 1.0
    %v3968 = vadd.f32 %v3962, 1.0
    %v3969 = vadd.f32 %v3964, 1.0
    %v3970 = vadd.f32 %v3966, 1.0
    %v3971 = vrcp.pop %v3967
    %v3972 = vrcp.pop %v3968
    %v3973 = vrcp.pop %v3969
    %v3974 = vrcp.pop %v3970
    %v3979 = vcombine.low %v3971, %v3972
    %v3981 = vunpack.c.l.s4 1983009808
    %v3982 = vunpack.c.0.s8 %v3981
    %v3983 = vlaneseq
    %v3984 = vshrl.u32 %v3983, 7
    %v3985 = vsub.s32 %v3982, %v3984
    %v3986 = vrot.slane %v3979, %v3985
    %v3987 = vcombine.low %v3973, %v3974
    %v3989 = vunpack.c.l.s4 1983009808
    %v3990 = vunpack.c.0.s8 %v3989
    %v3991 = vlaneseq
    %v3992 = vshrl.u32 %v3991, 7
    %v3993 = vsub.s32 %v3990, %v3992
    %v3994 = vrot.slane %v3987, %v3993
    %vm3995 = vcmask 1044484
    %v3996 = vsel %vm3995, %v3986, %v3986
    %vm3997 = vcmask 1046534
    %v3998 = vsel %vm3997, %v3986, %v3996
    %v3999 = vrot.slane %v3994, 7
    %v4000 = vsel %vm1477, %v3999, %v3998
    %vm4001 = vcmask 1043459
    %v4002 = vsel %vm4001, %v3999, %v4000
    %vm4003 = vcmask 1045509
    %v4004 = vsel %vm4003, %v3999, %v4002
    %vm4005 = vcmask 1047559
    %v4006 = vsel %vm4005, %v3999, %v4004
    %4008 = vst [vmem:[%s8] sm:$0xf] %v4006
    // Predicated region
    $region54: #{flowvm_net_forward.1} parent=1 // pred_check
      _
    $region55: #{flowvm_net_forward.1} parent=1 // pred_check_branch
      %4010 = sbr.rel (0) target = $region57
    $region56: #{flowvm_net_forward.1} parent=1 // pred_region
      _
    $region57: #{flowvm_net_forward.1} parent=1 // pred_fallthru
      _
    // Predicated region
    $region58: #{flowvm_net_forward.1} parent=1 // pred_check
      _
    $region59: #{flowvm_net_forward.1} parent=1 // pred_check_branch
      %4012 = sbr.rel (0) target = $region61
    $region60: #{flowvm_net_forward.1} parent=1 // pred_region
      _
    $region61: #{flowvm_net_forward.1} parent=1 // pred_fallthru
      _
    %4013 = vsyncpa [#allocation4], 1
    %4014 = vsyncpa [#allocation6], 1
    %4015 = vsyncpa [#allocation9], 1

</llo_original>
